<compile_context>
chip_gen: v5e
topology: v5e:2x2
jax: 0.10.0
libtpu: 0.0.40
codegen_flags: <defaults>
</compile_context>

<pallas_src>
import math
from functools import partial

import jax
import jax.numpy as jnp
from jax.experimental import pallas as pl
from jax.experimental.pallas import tpu as pltpu


# ----------------------- per-chip tunable tile caps ---------------------------
# v5e/v6e have 128 MiB VMEM, v7x has 64 MiB (32 MiB scoped default); these
# tiles keep every kernel comfortably below ~10 MiB of live VMEM.
TM = 256      # GEMM row tile (sequence)
TN = 512      # GEMM output-column tile
TK = 512      # GEMM reduction tile
TQ = 256      # attention query tile
TKV = 256     # attention key/value tile (keep 128 on v5e if desired)
TH = 256      # MLP hidden-dim tile
VMEM_LIMIT = 48 * 1024 * 1024   # cap, not a reservation; safe on v7x's 64 MiB


def _pick_mult(dim, cap, mult):
    """Largest multiple of `mult` dividing `dim` that is <= cap (or full dim)."""
    if dim <= cap and dim % mult == 0:
        return dim
    t = (min(cap, dim) // mult) * mult
    while t >= mult:
        if dim % t == 0:
            return t
        t -= mult
    return dim


def _pick(dim, cap):
    return _pick_mult(dim, cap, 128)


def _cparams(dims):
    return pltpu.CompilerParams(dimension_semantics=dims,
                                vmem_limit_bytes=VMEM_LIMIT)


# ----------------------------- Pallas kernels --------------------------------

def _ln_qkv_rope_kernel(x_ref, g_ref, b_ref, w_ref, cos_ref, sin_ref, o_ref,
                        xn_ref, *, eps, dh, d_model, scale, heads_per_tile):
    """LayerNorm (cached across column tiles) + QKV GEMM + RoPE on q/k columns.

    Column tile j of the [S, 3D] output: q region (col < D) gets RoPE and the
    1/sqrt(Dh) scale folded in, k region (D <= col < 2D) gets RoPE, v region is
    passed through.  sin_ref already carries the rotate_half sign pattern.
    """
    j = pl.program_id(1)

    @pl.when(j == 0)
    def _():
        x = x_ref[...].astype(jnp.float32)
        mean = jnp.mean(x, axis=-1, keepdims=True)
        var = jnp.mean(jnp.square(x - mean), axis=-1, keepdims=True)
        xn = (x - mean) * jax.lax.rsqrt(var + eps) * g_ref[...] + b_ref[...]
        xn_ref[...] = xn.astype(xn_ref.dtype)          # cast to weight dtype once

    y = jnp.dot(xn_ref[...], w_ref[...], preferred_element_type=jnp.float32)

    tn = o_ref.shape[-1]
    col0 = j * tn
    half = dh // 2

    @pl.when(col0 < 2 * d_model)                        # q / k columns
    def _():
        pieces = []
        for hh in range(heads_per_tile):                # per-head rotate_half
            yh = y[:, hh * dh:(hh + 1) * dh]
            pieces.append(yh * cos_ref[...] +
                          pltpu.roll(yh, half, axis=1) * sin_ref[...])
        yr = pieces[0] if heads_per_tile == 1 else jnp.concatenate(pieces, axis=1)
        sc = jnp.where(col0 < d_model, jnp.float32(scale), jnp.float32(1.0))
        o_ref[...] = (yr * sc).astype(o_ref.dtype)

    @pl.when(col0 >= 2 * d_model)                       # v columns: pass-through
    def _():
        o_ref[...] = y.astype(o_ref.dtype)


def _flash_attn_kernel(kvs_ref, kvl_ref, q_ref, k_ref, v_ref, segq_ref,
                       segk_ref, o_ref, m_ref, l_ref, acc_ref):
    """Flash attention, one (head, q-tile) per (h, qi); ki streams live KV tiles.

    kvs_ref/kvl_ref (SMEM, scalar-prefetched) give the per-q-tile range of KV
    blocks that intersect its segments; tiles outside the range are skipped
    (compute via pl.when, DMA via the clamped index_map).
    """
    qi = pl.program_id(1)
    ki = pl.program_id(2)

    @pl.when(ki == 0)
    def _():
        m_ref[...] = jnp.full_like(m_ref, -1e30)
        l_ref[...] = jnp.zeros_like(l_ref)
        acc_ref[...] = jnp.zeros_like(acc_ref)

    @pl.when(ki < kvl_ref[qi])                          # live KV tile
    def _():
        # Q/K are already rotated + scaled; operands stay in the activation
        # dtype (bf16 MXU path for bf16 models), accumulation in f32.
        s = jax.lax.dot_general(q_ref[...], k_ref[...],
                                (((1,), (1,)), ((), ())),
                                preferred_element_type=jnp.float32)   # [tq, tkv]
        mask = segq_ref[...] == segk_ref[...]            # block-diagonal varlen
        s = jnp.where(mask, s, -1e30)

        m_prev = m_ref[...]
        m_new = jnp.maximum(m_prev, jnp.max(s, axis=-1, keepdims=True))
        alpha = jnp.exp(m_prev - m_new)
        p = jnp.exp(s - m_new)
        l_ref[...] = alpha * l_ref[...] + jnp.sum(p, axis=-1, keepdims=True)
        acc_ref[...] = alpha * acc_ref[...] + jnp.dot(
            p.astype(v_ref.dtype), v_ref[...], preferred_element_type=jnp.float32)
        m_ref[...] = m_new

    @pl.when(ki == pl.num_programs(2) - 1)
    def _():
        o_ref[...] = (acc_ref[...] * pl.reciprocal(l_ref[...])).astype(o_ref.dtype)


def _matmul_res_kernel(a_ref, w_ref, r_ref, o_ref, acc_ref):
    """Tiled GEMM with K-accumulation and residual add at finalize."""
    k = pl.program_id(2)

    @pl.when(k == 0)
    def _():
        acc_ref[...] = jnp.zeros_like(acc_ref)

    acc_ref[...] += jnp.dot(a_ref[...].astype(w_ref.dtype), w_ref[...],
                            preferred_element_type=jnp.float32)

    @pl.when(k == pl.num_programs(2) - 1)
    def _():
        o_ref[...] = (acc_ref[...] + r_ref[...].astype(jnp.float32)
                      ).astype(o_ref.dtype)


def _mlp_kernel(x_ref, g_ref, b_ref, wg_ref, wu_ref, wd_ref, o_ref,
                xn_ref, acc_ref, *, eps):
    """Fused LN2 + gate_up + SiluAndMul + down + residual, tiled over hidden."""
    j = pl.program_id(1)

    @pl.when(j == 0)
    def _():
        acc_ref[...] = jnp.zeros_like(acc_ref)
        x = x_ref[...].astype(jnp.float32)
        mean = jnp.mean(x, axis=-1, keepdims=True)
        var = jnp.mean(jnp.square(x - mean), axis=-1, keepdims=True)
        xn = (x - mean) * jax.lax.rsqrt(var + eps) * g_ref[...] + b_ref[...]
        xn_ref[...] = xn.astype(xn_ref.dtype)            # cast to weight dtype once

    xn = xn_ref[...]
    gate = jnp.dot(xn, wg_ref[...], preferred_element_type=jnp.float32)
    up = jnp.dot(xn, wu_ref[...], preferred_element_type=jnp.float32)
    act = (gate * jax.lax.logistic(gate) * up).astype(wd_ref.dtype)    # SiluAndMul
    acc_ref[...] += jnp.dot(act, wd_ref[...], preferred_element_type=jnp.float32)

    @pl.when(j == pl.num_programs(1) - 1)
    def _():
        o_ref[...] = (acc_ref[...] + x_ref[...].astype(jnp.float32)
                      ).astype(o_ref.dtype)


# ----------------------------- wrappers ---------------------------------------

def ln_qkv_rope(x, gamma, beta, w_qkv, cos, sin_signed, *, num_heads, eps=1e-6):
    S, D = x.shape
    N = w_qkv.shape[1]                     # 3*D
    dh = D // num_heads
    tm = _pick(S, TM)
    tn = _pick_mult(D, TN, math.lcm(dh, 128))   # head-aligned, divides D
    heads_per_tile = tn // dh
    scale = 1.0 / math.sqrt(dh)
    cost = pl.CostEstimate(
        flops=2 * S * D * N + 12 * S * N,
        transcendentals=S,
        bytes_accessed=(S * D + D * N + S * N) * x.dtype.itemsize)
    return pl.pallas_call(
        partial(_ln_qkv_rope_kernel, eps=eps, dh=dh, d_model=D, scale=scale,
                heads_per_tile=heads_per_tile),
        grid=(S // tm, N // tn),
        out_shape=jax.ShapeDtypeStruct((S, N), x.dtype),
        in_specs=[pl.BlockSpec((tm, D), lambda i, j: (i, 0)),
                  pl.BlockSpec((1, D), lambda i, j: (0, 0)),
                  pl.BlockSpec((1, D), lambda i, j: (0, 0)),
                  pl.BlockSpec((D, tn), lambda i, j: (0, j)),
                  pl.BlockSpec((tm, dh), lambda i, j: (i, 0)),
                  pl.BlockSpec((tm, dh), lambda i, j: (i, 0))],
        out_specs=pl.BlockSpec((tm, tn), lambda i, j: (i, j)),
        scratch_shapes=[pltpu.VMEM((tm, D), w_qkv.dtype)],   # cached LayerNorm
        compiler_params=_cparams(("parallel", "arbitrary")),
        cost_estimate=cost,
    )(x, gamma, beta, w_qkv, cos, sin_signed)


def flash_attention(qkv, seg_col, seg_row, kv_start_blk, kv_len_blk, *,
                    num_heads, head_dim, tq, tkv, out_dtype):
    """qkv: [S, 3D] rotated/scaled, head-major.  Returns ctx: [S, D] ('s (h d)')."""
    S = qkv.shape[0]
    H, dh = num_heads, head_dim
    D = H * dh
    nq = S // tq
    nkv = S // tkv

    def kv_idx(qi, ki, kvs, kvl):
        # clamp to the last live block so dead steps dedup the K/V/seg DMA
        return kvs[qi] + jnp.minimum(ki, kvl[qi] - 1)

    cost = pl.CostEstimate(
        flops=4 * S * S * D,                              # upper bound (no skip)
        transcendentals=H * S * S,
        bytes_accessed=(2 * S * D + 2 * S * D * nq) * qkv.dtype.itemsize)

    return pl.pallas_call(
        _flash_attn_kernel,
        grid_spec=pltpu.PrefetchScalarGridSpec(
            num_scalar_prefetch=2,
            grid=(H, nq, nkv),
            in_specs=[
                # column blocks of the qkv buffer: q head h, k head h, v head h
                pl.BlockSpec((tq, dh), lambda h, qi, ki, kvs, kvl: (qi, h)),
                pl.BlockSpec((tkv, dh),
                             lambda h, qi, ki, kvs, kvl:
                             (kv_idx(qi, ki, kvs, kvl), H + h)),
                pl.BlockSpec((tkv, dh),
                             lambda h, qi, ki, kvs, kvl:
                             (kv_idx(qi, ki, kvs, kvl), 2 * H + h)),
                # segment ids for the varlen block-diagonal mask
                pl.BlockSpec((tq, 1), lambda h, qi, ki, kvs, kvl: (qi, 0)),
                pl.BlockSpec((1, tkv),
                             lambda h, qi, ki, kvs, kvl:
                             (0, kv_idx(qi, ki, kvs, kvl))),
            ],
            out_specs=pl.BlockSpec((tq, dh), lambda h, qi, ki, kvs, kvl: (qi, h)),
            scratch_shapes=[pltpu.VMEM((tq, 1), jnp.float32),    # running max
                            pltpu.VMEM((tq, 1), jnp.float32),    # running denom
                            pltpu.VMEM((tq, dh), jnp.float32)],  # running numer
        ),
        out_shape=jax.ShapeDtypeStruct((S, D), out_dtype),
        compiler_params=_cparams(("parallel", "parallel", "arbitrary")),
        cost_estimate=cost,
    )(kv_start_blk, kv_len_blk, qkv, qkv, qkv, seg_col, seg_row)


def matmul_residual(a, w, residual):
    S, K = a.shape
    N = w.shape[1]
    tm, tn, tk = _pick(S, TM), _pick(N, TN), _pick(K, TK)
    cost = pl.CostEstimate(
        flops=2 * S * K * N, transcendentals=0,
        bytes_accessed=(S * K + K * N + 2 * S * N) * a.dtype.itemsize)
    return pl.pallas_call(
        _matmul_res_kernel,
        grid=(S // tm, N // tn, K // tk),
        out_shape=jax.ShapeDtypeStruct((S, N), residual.dtype),
        in_specs=[pl.BlockSpec((tm, tk), lambda i, j, k: (i, k)),
                  pl.BlockSpec((tk, tn), lambda i, j, k: (k, j)),
                  pl.BlockSpec((tm, tn), lambda i, j, k: (i, j))],
        out_specs=pl.BlockSpec((tm, tn), lambda i, j, k: (i, j)),
        scratch_shapes=[pltpu.VMEM((tm, tn), jnp.float32)],
        compiler_params=_cparams(("parallel", "parallel", "arbitrary")),
        cost_estimate=cost,
    )(a, w, residual)


def mlp_fused(x, gamma, beta, w_gate_up, w_down, *, eps=1e-6):
    """Fused LN2 + [gate|up] GEMMs + SiLU*up + down GEMM + residual."""
    S, D = x.shape
    M = w_down.shape[0]
    tm, th = _pick(S, TM), _pick(M, TH)
    up_off = M // th                       # block-column offset of the 'up' half
    cost = pl.CostEstimate(
        flops=6 * S * D * M, transcendentals=S * M,
        bytes_accessed=(2 * S * D + 3 * D * M) * x.dtype.itemsize)
    return pl.pallas_call(
        partial(_mlp_kernel, eps=eps),
        grid=(S // tm, M // th),
        out_shape=jax.ShapeDtypeStruct((S, D), x.dtype),
        in_specs=[pl.BlockSpec((tm, D), lambda i, j: (i, 0)),
                  pl.BlockSpec((1, D), lambda i, j: (0, 0)),
                  pl.BlockSpec((1, D), lambda i, j: (0, 0)),
                  # two views into the fused [D, 2M] gate_up weight (no slicing)
                  pl.BlockSpec((D, th), lambda i, j: (0, j)),
                  pl.BlockSpec((D, th), lambda i, j: (0, j + up_off)),
                  pl.BlockSpec((th, D), lambda i, j: (j, 0))],
        out_specs=pl.BlockSpec((tm, D), lambda i, j: (i, 0)),
        scratch_shapes=[pltpu.VMEM((tm, D), w_gate_up.dtype),   # cached LN2
                        pltpu.VMEM((tm, D), jnp.float32)],      # down-proj acc
        compiler_params=_cparams(("parallel", "arbitrary")),
        cost_estimate=cost,
    )(x, gamma, beta, w_gate_up, w_gate_up, w_down)


# ----------------------------- the block --------------------------------------

def glm4v_vision_block(x, cu_seqlens, rotary_pos_emb, params, *, eps=1e-6):
    """x: [S, B=1, D], cu_seqlens: [n_seg+1] int32 (0..S), rotary_pos_emb: [S, Dh//2]."""
    S, B, D = x.shape
    assert B == 1, "kernel path implemented for batch=1 (vLLM vision convention)"
    assert S % 128 == 0, "pad the token dim to a multiple of 128"  # TODO(synk): masked padding path
    H = params["num_heads"]
    Dh = D // H
    x2 = x[:, 0, :]

    # per-position segment ids for the block-diagonal varlen mask
    pos = jnp.arange(S, dtype=jnp.int32)
    seg = (jnp.searchsorted(cu_seqlens, pos, side="right") - 1).astype(jnp.int32)
    seg_col = seg.reshape(S, 1)
    seg_row = seg.reshape(1, S)

    # non-interleaved rotary (apply_rotary_pos_emb_vision); sin carries the
    # rotate_half sign pattern so the kernel does not need an iota/select.
    c = jnp.cos(rotary_pos_emb).astype(jnp.float32)
    s = jnp.sin(rotary_pos_emb).astype(jnp.float32)
    cos = jnp.concatenate([c, c], axis=-1)               # [S, Dh]
    sin_signed = jnp.concatenate([-s, s], axis=-1)       # [S, Dh]

    # ---- attention branch: x + proj(attn(rope(qkv(norm1(x))))) ----
    qkv = ln_qkv_rope(x2, params["ln1_g"], params["ln1_b"], params["w_qkv"],
                      cos, sin_signed, num_heads=H, eps=eps)

    # per-q-tile live KV block range from cu_seqlens (skips dead KV tiles:
    # both compute and the K/V DMA)
    tq, tkv = _pick(S, TQ), _pick(S, TKV)
    nq = S // tq
    q0 = jnp.arange(nq, dtype=jnp.int32) * tq
    q1 = q0 + (tq - 1)
    seg_lo = jnp.searchsorted(cu_seqlens, q0, side="right") - 1
    seg_hi = jnp.searchsorted(cu_seqlens, q1, side="right") - 1
    kv_lo = cu_seqlens[seg_lo]
    kv_hi = cu_seqlens[seg_hi + 1]
    kv_start_blk = (kv_lo // tkv).astype(jnp.int32)
    kv_len_blk = ((kv_hi + tkv - 1) // tkv - kv_lo // tkv).astype(jnp.int32)

    ctx = flash_attention(qkv, seg_col, seg_row, kv_start_blk, kv_len_blk,
                          num_heads=H, head_dim=Dh, tq=tq, tkv=tkv,
                          out_dtype=x2.dtype)            # [S, D] 's (h d)'
    h1 = matmul_residual(ctx, params["w_proj"], x2)

    # ---- MLP branch: h1 + down(silu(gate)*up) of norm2(h1) ----
    out = mlp_fused(h1, params["ln2_g"], params["ln2_b"],
                    params["w_gate_up"], params["w_down"], eps=eps)
    return out[:, None, :]


# ----------------------------- pure-JAX reference ------------------------------

def reference_block(x, cu_seqlens, rotary_pos_emb, params):
    S, B, D = x.shape
    H = params["num_heads"]
    Dh = D // H
    x2 = x[:, 0, :].astype(jnp.float32)

    def ln(t, g, b):
        mu = jnp.mean(t, -1, keepdims=True)
        var = jnp.mean((t - mu) ** 2, -1, keepdims=True)
        return (t - mu) / jnp.sqrt(var + 1e-6) * g[0] + b[0]

    xn1 = ln(x2, params["ln1_g"], params["ln1_b"])
    qkv = xn1 @ params["w_qkv"]
    q = qkv[:, :D].reshape(S, H, Dh)
    k = qkv[:, D:2 * D].reshape(S, H, Dh)
    v = qkv[:, 2 * D:].reshape(S, H, Dh)
    cos = jnp.concatenate([jnp.cos(rotary_pos_emb)] * 2, -1)[:, None, :]
    sin = jnp.concatenate([jnp.sin(rotary_pos_emb)] * 2, -1)[:, None, :]

    def rope(t):
        t1, t2 = t[..., :Dh // 2], t[..., Dh // 2:]
        return t * cos + jnp.concatenate([-t2, t1], -1) * sin

    q, k = rope(q), rope(k)
    pos = jnp.arange(S, dtype=jnp.int32)
    seg = jnp.searchsorted(cu_seqlens, pos, side="right") - 1
    mask = seg[:, None] == seg[None, :]
    scale = 1.0 / math.sqrt(Dh)
    qh, kh, vh = (t.transpose(1, 0, 2) for t in (q, k, v))
    s = jnp.einsum("hqd,hkd->hqk", qh, kh) * scale
    s = jnp.where(mask[None], s, -1e9)
    p = jax.nn.softmax(s, axis=-1)
    ctx = jnp.einsum("hqk,hkd->hqd", p, vh).transpose(1, 0, 2).reshape(S, D)
    h1 = x2 + ctx @ params["w_proj"]
    xn2 = ln(h1, params["ln2_g"], params["ln2_b"])
    gu = xn2 @ params["w_gate_up"]
    Mh = params["w_down"].shape[0]
    gate, up = gu[:, :Mh], gu[:, Mh:]
    out = h1 + (gate * jax.nn.sigmoid(gate) * up) @ params["w_down"]
    return out[:, None, :]


# ----------------------------- main --------------------------------------------

if __name__ == "__main__":
    # small but tiling-exercising shapes; head_dim=128 as in real GLM-4.1V.
    # S=768 with 3 segments so the dead-KV-tile skip and partial masks both run.
    S, B, D, H, M = 768, 1, 512, 4, 256      # seq, batch, dim, heads, mlp_hidden
    Dh = D // H                              # 128
    key = jax.random.PRNGKey(0)
    ks = jax.random.split(key, 9)
    params = {
        "num_heads": H,
        "ln1_g": 1.0 + 0.1 * jax.random.normal(ks[0], (1, D), jnp.float32),
        "ln1_b": 0.1 * jax.random.normal(ks[1], (1, D), jnp.float32),
        "ln2_g": 1.0 + 0.1 * jax.random.normal(ks[2], (1, D), jnp.float32),
        "ln2_b": 0.1 * jax.random.normal(ks[3], (1, D), jnp.float32),
        "w_qkv": jax.random.normal(ks[4], (D, 3 * D), jnp.float32) / math.sqrt(D),
        "w_proj": jax.random.normal(ks[5], (D, D), jnp.float32) / math.sqrt(D),
        "w_gate_up": jax.random.normal(ks[6], (D, 2 * M), jnp.float32) / math.sqrt(D),
        "w_down": jax.random.normal(ks[7], (M, D), jnp.float32) / math.sqrt(M),
    }
    x = jax.random.normal(ks[8], (S, B, D), jnp.float32)

    pos = jnp.arange(S, dtype=jnp.float32)
    inv_freq = 1.0 / (10000.0 ** (jnp.arange(0, Dh // 2, dtype=jnp.float32) / (Dh // 2)))
    rotary_pos_emb = pos[:, None] * inv_freq[None, :]          # [S, Dh//2]
    # three variable-length segments: one boundary not tile-aligned (192)
    cu_seqlens = jnp.array([0, 192, 512, 768], dtype=jnp.int32)

    out = glm4v_vision_block(x, cu_seqlens, rotary_pos_emb, params)
    out = jax.block_until_ready(out)

    ref = reference_block(x, cu_seqlens, rotary_pos_emb, params)
    assert out.shape == (S, B, D)
    max_diff = float(jnp.max(jnp.abs(out - ref)))
    if max_diff > 1e-2:
        raise AssertionError(f"mismatch vs reference: max abs diff = {max_diff}")
    print("KERNEL_OK")
</pallas_src>

<mosaic_0001>
module attributes {stable_mosaic.version = 11 : i64} {
  func.func @_ln_qkv_rope_kernel(%arg0: i32, %arg1: i32, %arg2: memref<256x512xf32, #tpu.memory_space<vmem>>, %arg3: memref<1x512xf32, #tpu.memory_space<vmem>>, %arg4: memref<1x512xf32, #tpu.memory_space<vmem>>, %arg5: memref<512x512xf32, #tpu.memory_space<vmem>>, %arg6: memref<256x128xf32, #tpu.memory_space<vmem>>, %arg7: memref<256x128xf32, #tpu.memory_space<vmem>>, %arg8: memref<256x512xf32, #tpu.memory_space<vmem>>, %arg9: memref<256x512xf32, #tpu.memory_space<vmem>>) attributes {dimension_semantics = [#tpu.dimension_semantics<parallel>, #tpu.dimension_semantics<arbitrary>], iteration_bounds = array<i64: 3, 3>, scalar_prefetch = 0 : i64, scratch_operands = 1 : i64, tpu.core_type = #tpu.core_type<tc>, window_params = [{transform_indices = @transform_0, window_bounds = array<i64: 256, 512>}, {pipeline_mode = #tpu.pipeline_mode<synchronous>, transform_indices = @transform_1, window_bounds = array<i64: 1, 512>}, {pipeline_mode = #tpu.pipeline_mode<synchronous>, transform_indices = @transform_2, window_bounds = array<i64: 1, 512>}, {transform_indices = @transform_3, window_bounds = array<i64: 512, 512>}, {transform_indices = @transform_4, window_bounds = array<i64: 256, 128>}, {transform_indices = @transform_5, window_bounds = array<i64: 256, 128>}, {transform_indices = @transform_6, window_bounds = array<i64: 256, 512>}]} {
    %c0_i32 = arith.constant 0 : i32
    %0 = arith.cmpi eq, %arg1, %c0_i32 : i32
    %1 = arith.extui %0 : i1 to i32
    %c0_i32_0 = arith.constant 0 : i32
    %2 = arith.cmpi ne, %1, %c0_i32_0 : i32
    scf.if %2 {
      %c0_7 = arith.constant 0 : index
      %c0_8 = arith.constant 0 : index
      %13 = vector.load %arg2[%c0_7, %c0_8] : memref<256x512xf32, #tpu.memory_space<vmem>>, vector<256x512xf32>
      %cst_9 = arith.constant dense<0.000000e+00> : vector<256xf32>
      %14 = vector.multi_reduction <add>, %13, %cst_9 [1] : vector<256x512xf32> to vector<256xf32>
      %15 = vector.shape_cast %14 : vector<256xf32> to vector<256x1xf32>
      %cst_10 = arith.constant 5.120000e+02 : f32
      %16 = vector.broadcast %cst_10 : f32 to vector<256x1xf32>
      %17 = arith.divf %15, %16 : vector<256x1xf32>
      %18 = vector.broadcast %17 : vector<256x1xf32> to vector<256x512xf32>
      %19 = arith.subf %13, %18 : vector<256x512xf32>
      %20 = arith.mulf %19, %19 : vector<256x512xf32>
      %cst_11 = arith.constant dense<0.000000e+00> : vector<256xf32>
      %21 = vector.multi_reduction <add>, %20, %cst_11 [1] : vector<256x512xf32> to vector<256xf32>
      %22 = vector.shape_cast %21 : vector<256xf32> to vector<256x1xf32>
      %cst_12 = arith.constant 5.120000e+02 : f32
      %23 = vector.broadcast %cst_12 : f32 to vector<256x1xf32>
      %24 = arith.divf %22, %23 : vector<256x1xf32>
      %25 = vector.broadcast %17 : vector<256x1xf32> to vector<256x512xf32>
      %26 = arith.subf %13, %25 : vector<256x512xf32>
      %cst_13 = arith.constant 9.99999997E-7 : f32
      %27 = vector.broadcast %cst_13 : f32 to vector<256x1xf32>
      %28 = arith.addf %24, %27 : vector<256x1xf32>
      %29 = math.rsqrt %28 : vector<256x1xf32>
      %30 = vector.broadcast %29 : vector<256x1xf32> to vector<256x512xf32>
      %31 = arith.mulf %26, %30 : vector<256x512xf32>
      %c0_14 = arith.constant 0 : index
      %c0_15 = arith.constant 0 : index
      %32 = vector.load %arg3[%c0_14, %c0_15] : memref<1x512xf32, #tpu.memory_space<vmem>>, vector<1x512xf32>
      %33 = vector.broadcast %32 : vector<1x512xf32> to vector<256x512xf32>
      %34 = arith.mulf %31, %33 : vector<256x512xf32>
      %c0_16 = arith.constant 0 : index
      %c0_17 = arith.constant 0 : index
      %35 = vector.load %arg4[%c0_16, %c0_17] : memref<1x512xf32, #tpu.memory_space<vmem>>, vector<1x512xf32>
      %36 = vector.broadcast %35 : vector<1x512xf32> to vector<256x512xf32>
      %37 = arith.addf %34, %36 : vector<256x512xf32>
      %c0_18 = arith.constant 0 : index
      %c0_19 = arith.constant 0 : index
      %38 = vector.load %arg9[%c0_18, %c0_19] : memref<256x512xf32, #tpu.memory_space<vmem>>, vector<256x512xf32>
      tpu.vector_store %arg9[%c0_18, %c0_19], %37 {strides = array<i32>} : memref<256x512xf32, #tpu.memory_space<vmem>>, vector<256x512xf32>,
    } else {
    }
    %c0 = arith.constant 0 : index
    %c0_1 = arith.constant 0 : index
    %3 = vector.load %arg9[%c0, %c0_1] : memref<256x512xf32, #tpu.memory_space<vmem>>, vector<256x512xf32>
    %c0_2 = arith.constant 0 : index
    %c0_3 = arith.constant 0 : index
    %4 = vector.load %arg5[%c0_2, %c0_3] : memref<512x512xf32, #tpu.memory_space<vmem>>, vector<512x512xf32>
    %cst = arith.constant dense<0.000000e+00> : vector<256x512xf32>
    %5 = tpu.matmul %3, %4, %cst {dimension_numbers = #tpu.dot_dimension_numbers<[1], [0], [0], [1], [0, 0, 1, 1], [], []>} : vector<256x512xf32>, vector<512x512xf32>, vector<256x512xf32> -> vector<256x512xf32>
    %c512_i32 = arith.constant 512 : i32
    %6 = arith.muli %arg1, %c512_i32 : i32
    %c1024_i32 = arith.constant 1024 : i32
    %7 = arith.cmpi slt, %6, %c1024_i32 : i32
    %8 = arith.extui %7 : i1 to i32
    %c0_i32_4 = arith.constant 0 : i32
    %9 = arith.cmpi ne, %8, %c0_i32_4 : i32
    scf.if %9 {
      %13 = vector.extract_strided_slice %5 {offsets = [0, 0], sizes = [256, 128], strides = [1, 1]} : vector<256x512xf32> to vector<256x128xf32>
      %c0_7 = arith.constant 0 : index
      %c0_8 = arith.constant 0 : index
      %14 = vector.load %arg6[%c0_7, %c0_8] : memref<256x128xf32, #tpu.memory_space<vmem>>, vector<256x128xf32>
      %15 = arith.mulf %13, %14 : vector<256x128xf32>
      %c64_i32 = arith.constant 64 : i32
      %16 = tpu.dynamic_rotate %13 by %c64_i32 dim 1 : vector<256x128xf32>, i32 -> vector<256x128xf32>
      %c0_9 = arith.constant 0 : index
      %c0_10 = arith.constant 0 : index
      %17 = vector.load %arg7[%c0_9, %c0_10] : memref<256x128xf32, #tpu.memory_space<vmem>>, vector<256x128xf32>
      %18 = arith.mulf %16, %17 : vector<256x128xf32>
      %19 = arith.addf %15, %18 : vector<256x128xf32>
      %20 = vector.extract_strided_slice %5 {offsets = [0, 128], sizes = [256, 128], strides = [1, 1]} : vector<256x512xf32> to vector<256x128xf32>
      %c0_11 = arith.constant 0 : index
      %c0_12 = arith.constant 0 : index
      %21 = vector.load %arg6[%c0_11, %c0_12] : memref<256x128xf32, #tpu.memory_space<vmem>>, vector<256x128xf32>
      %22 = arith.mulf %20, %21 : vector<256x128xf32>
      %c64_i32_13 = arith.constant 64 : i32
      %23 = tpu.dynamic_rotate %20 by %c64_i32_13 dim 1 : vector<256x128xf32>, i32 -> vector<256x128xf32>
      %c0_14 = arith.constant 0 : index
      %c0_15 = arith.constant 0 : index
      %24 = vector.load %arg7[%c0_14, %c0_15] : memref<256x128xf32, #tpu.memory_space<vmem>>, vector<256x128xf32>
      %25 = arith.mulf %23, %24 : vector<256x128xf32>
      %26 = arith.addf %22, %25 : vector<256x128xf32>
      %27 = vector.extract_strided_slice %5 {offsets = [0, 256], sizes = [256, 128], strides = [1, 1]} : vector<256x512xf32> to vector<256x128xf32>
      %c0_16 = arith.constant 0 : index
      %c0_17 = arith.constant 0 : index
      %28 = vector.load %arg6[%c0_16, %c0_17] : memref<256x128xf32, #tpu.memory_space<vmem>>, vector<256x128xf32>
      %29 = arith.mulf %27, %28 : vector<256x128xf32>
      %c64_i32_18 = arith.constant 64 : i32
      %30 = tpu.dynamic_rotate %27 by %c64_i32_18 dim 1 : vector<256x128xf32>, i32 -> vector<256x128xf32>
      %c0_19 = arith.constant 0 : index
      %c0_20 = arith.constant 0 : index
      %31 = vector.load %arg7[%c0_19, %c0_20] : memref<256x128xf32, #tpu.memory_space<vmem>>, vector<256x128xf32>
      %32 = arith.mulf %30, %31 : vector<256x128xf32>
      %33 = arith.addf %29, %32 : vector<256x128xf32>
      %34 = vector.extract_strided_slice %5 {offsets = [0, 384], sizes = [256, 128], strides = [1, 1]} : vector<256x512xf32> to vector<256x128xf32>
      %c0_21 = arith.constant 0 : index
      %c0_22 = arith.constant 0 : index
      %35 = vector.load %arg6[%c0_21, %c0_22] : memref<256x128xf32, #tpu.memory_space<vmem>>, vector<256x128xf32>
      %36 = arith.mulf %34, %35 : vector<256x128xf32>
      %c64_i32_23 = arith.constant 64 : i32
      %37 = tpu.dynamic_rotate %34 by %c64_i32_23 dim 1 : vector<256x128xf32>, i32 -> vector<256x128xf32>
      %c0_24 = arith.constant 0 : index
      %c0_25 = arith.constant 0 : index
      %38 = vector.load %arg7[%c0_24, %c0_25] : memref<256x128xf32, #tpu.memory_space<vmem>>, vector<256x128xf32>
      %39 = arith.mulf %37, %38 : vector<256x128xf32>
      %40 = arith.addf %36, %39 : vector<256x128xf32>
      %41 = tpu.concatenate %19, %26, %33, %40 in 1 : vector<256x128xf32>, vector<256x128xf32>, vector<256x128xf32>, vector<256x128xf32> -> vector<256x512xf32>
      %c512_i32_26 = arith.constant 512 : i32
      %42 = arith.cmpi slt, %6, %c512_i32_26 : i32
      %cst_27 = arith.constant 0.0883883461 : f32
      %cst_28 = arith.constant 1.000000e+00 : f32
      %43 = arith.select %42, %cst_27, %cst_28 : f32
      %44 = vector.broadcast %43 : f32 to vector<256x512xf32>
      %45 = arith.mulf %41, %44 : vector<256x512xf32>
      %c0_29 = arith.constant 0 : index
      %c0_30 = arith.constant 0 : index
      %46 = vector.load %arg8[%c0_29, %c0_30] : memref<256x512xf32, #tpu.memory_space<vmem>>, vector<256x512xf32>
      tpu.vector_store %arg8[%c0_29, %c0_30], %45 {strides = array<i32>} : memref<256x512xf32, #tpu.memory_space<vmem>>, vector<256x512xf32>,
    } else {
    }
    %c1024_i32_5 = arith.constant 1024 : i32
    %10 = arith.cmpi sge, %6, %c1024_i32_5 : i32
    %11 = arith.extui %10 : i1 to i32
    %c0_i32_6 = arith.constant 0 : i32
    %12 = arith.cmpi ne, %11, %c0_i32_6 : i32
    scf.if %12 {
      %c0_7 = arith.constant 0 : index
      %c0_8 = arith.constant 0 : index
      %13 = vector.load %arg8[%c0_7, %c0_8] : memref<256x512xf32, #tpu.memory_space<vmem>>, vector<256x512xf32>
      tpu.vector_store %arg8[%c0_7, %c0_8], %5 {strides = array<i32>} : memref<256x512xf32, #tpu.memory_space<vmem>>, vector<256x512xf32>,
    } else {
    }
    return
  }
  func.func @transform_0(%arg0: i32, %arg1: i32) -> (i32, i32) {
    %c0_i32 = arith.constant 0 : i32
    %c0_i32_0 = arith.constant 0 : i32
    return %arg0, %c0_i32 : i32, i32
  }
  func.func @transform_1(%arg0: i32, %arg1: i32) -> (i32, i32) {
    %c0_i32 = arith.constant 0 : i32
    %c0_i32_0 = arith.constant 0 : i32
    %c0_i32_1 = arith.constant 0 : i32
    return %c0_i32, %c0_i32_0 : i32, i32
  }
  func.func @transform_2(%arg0: i32, %arg1: i32) -> (i32, i32) {
    %c0_i32 = arith.constant 0 : i32
    %c0_i32_0 = arith.constant 0 : i32
    %c0_i32_1 = arith.constant 0 : i32
    return %c0_i32, %c0_i32_0 : i32, i32
  }
  func.func @transform_3(%arg0: i32, %arg1: i32) -> (i32, i32) {
    %c0_i32 = arith.constant 0 : i32
    %c0_i32_0 = arith.constant 0 : i32
    return %c0_i32, %arg1 : i32, i32
  }
  func.func @transform_4(%arg0: i32, %arg1: i32) -> (i32, i32) {
    %c0_i32 = arith.constant 0 : i32
    %c0_i32_0 = arith.constant 0 : i32
    return %arg0, %c0_i32 : i32, i32
  }
  func.func @transform_5(%arg0: i32, %arg1: i32) -> (i32, i32) {
    %c0_i32 = arith.constant 0 : i32
    %c0_i32_0 = arith.constant 0 : i32
    return %arg0, %c0_i32 : i32, i32
  }
  func.func @transform_6(%arg0: i32, %arg1: i32) -> (i32, i32) {
    %c0_i32 = arith.constant 0 : i32
    return %arg0, %arg1 : i32, i32
  }
}

</mosaic_0001>

<llo_original>
// kernel: tpu_custom_call.1
$region0: #{tpu_custom_call.1}
  #allocation0 [shape = 'u32[]', space=smem, size = 0x4, offset = 0x4, fixed_abs, tag = 'smem constant byte address 0x4 - core index']
  #allocation1 [shape = 'u32[72,128]{1,0:T(1,128)}', space=vmem, size = 0x9000, scoped, tag = 'internal scratch']
  #allocation2 [shape = 'f32[256,512]{1,0:T(8,128)}', space=vmem, size = 0x80000, scoped, tag = 'scratch operand']
  %s0 = inlined_call_operand.hbm [shape: f32[768,512], index: 0, kind: input, shape index: {}]
  %s1 = inlined_call_operand.hbm [shape: f32[1,512], index: 1, kind: input, shape index: {}]
  %s2 = inlined_call_operand.hbm [shape: f32[1,512], index: 2, kind: input, shape index: {}]
  %s3 = inlined_call_operand.hbm [shape: f32[512,1536], index: 3, kind: input, shape index: {}]
  %s4 = inlined_call_operand.hbm [shape: f32[768,128], index: 4, kind: input, shape index: {}]
  %s5 = inlined_call_operand.hbm [shape: f32[768,128], index: 5, kind: input, shape index: {}]
  %s6 = inlined_call_operand.hbm [shape: f32[768,1536], index: 6, kind: output, shape index: {}]
  %s7 = sld [smem:[#allocation0]]
  $region93: #{tpu_custom_call.1} parent=0
    _
  %s9 = ssub.s32 1, %s7
  %s10 = scalar_select 0, %s9, %s7
  $region1: #{tpu_custom_call.1} parent=0
    #allocation3 [shape = 'u8[1048576]{0}', space=vmem, size = 0x100000, scoped, tag = 'input window, operand 0']
    #allocation4 [shape = 's32[2]{0}', space=sflag, size = 0x8, scoped, tag = 'scoped memory for tpu_custom_call.1']
    #allocation5 [shape = 's32[2]{0}', space=sflag, size = 0x8, scoped, tag = 'scoped memory for tpu_custom_call.1']
    #allocation6 [shape = 'u8[2048]{0}', space=vmem, size = 0x800, scoped, tag = 'input window, operand 1, single buffered']
    #allocation7 [shape = 's32[1]{0}', space=sflag, size = 0x4, scoped, tag = 'scoped memory for tpu_custom_call.1']
    #allocation8 [shape = 'u8[2048]{0}', space=vmem, size = 0x800, scoped, tag = 'input window, operand 2, single buffered']
    #allocation9 [shape = 'u8[2097152]{0}', space=vmem, size = 0x200000, scoped, tag = 'input window, operand 3']
    #allocation10 [shape = 's32[2]{0}', space=sflag, size = 0x8, scoped, tag = 'scoped memory for tpu_custom_call.1']
    #allocation11 [shape = 'u8[262144]{0}', space=vmem, size = 0x40000, scoped, tag = 'input window, operand 4']
    #allocation12 [shape = 'u8[262144]{0}', space=vmem, size = 0x40000, scoped, tag = 'input window, operand 5']
    #allocation13 [shape = 's32[2]{0}', space=sflag, size = 0x8, scoped, tag = 'scoped memory for tpu_custom_call.1']
    #allocation14 [shape = 'u8[1048576]{0}', space=vmem, size = 0x100000, scoped, tag = 'output window, operand 0']
    %11 = vsyncpa [#allocation4], 0
    %s12 = scalar_lea.sflag [#allocation4], 1
    %13 = vsyncpa %s12, 0
    %14 = vsyncpa [#allocation7], 0
    %15 = vsyncpa [#allocation10], 0
    %s16 = scalar_lea.sflag [#allocation10], 1
    %17 = vsyncpa %s16, 0
    %18 = vsyncpa [#allocation13], 0
    %s19 = scalar_lea.sflag [#allocation13], 1
    %20 = vsyncpa %s19, 0
    %21 = vsyncpa [#allocation5], 0
    %s22 = scalar_lea.sflag [#allocation5], 1
    %23 = vsyncpa %s22, 0
    loop: start=0, step=1, limit=11
    $region2: #{tpu_custom_call.1} parent=1 // loop_pre_header
      _
    $region3: #{tpu_custom_call.1} parent=1 // loop_header
      %s25 = sphi 0, %s29
      %p26 = scmp.ge.s32.totalorder %s25, 11
      %s32 = sphi 0, %s44
      %s33 = sphi 0, %s40
      %s34 = sphi 0, %s32
      %s35 = sphi 0, %s33
      %s36 = sphi 0, %s34
      %s37 = sphi 0, %s35
      %s47 = sphi 0, %s49
      %s50 = sphi 0, %s47
      %s51 = sphi 0, %s50
      %s67 = sphi 0, %s51
      %s71 = sphi 0, %s71
      %s73 = sphi 0, %s71
      %s74 = sphi 0, %s73
      %s88 = sphi 0, %s74
      %s92 = sphi 0, %s92
      %s94 = sphi 0, %s92
      %s95 = sphi 0, %s94
      %s109 = sphi 0, %s95
      %s115 = sphi 0, %s117
      %s118 = sphi 0, %s115
      %s119 = sphi 0, %s118
      %s135 = sphi 0, %s119
      %s141 = sphi 0, %s143
      %s144 = sphi 0, %s141
      %s145 = sphi 0, %s144
      %s161 = sphi 0, %s145
      %s167 = sphi 0, %s169
      %s170 = sphi 0, %s167
      %s171 = sphi 0, %s170
      %s187 = sphi 0, %s171
      %s195 = sphi 0, %s197
      %s198 = sphi 0, %s195
      %s199 = sphi 0, %s198
      %s215 = sphi 0, %s199
    $region4: #{tpu_custom_call.1} parent=1 // loop_header_branch
      %28 = sbr.rel (%p26) target = $region8
    $region5: #{tpu_custom_call.1} parent=1 // loop_body
      %s30 = ssub.s32 %s25, 1
      %s31 = ssub.s32 %s25, 2
      %s38 = sadd.s32 1, %s33
      %p39 = scmp.ge.s32.totalorder %s38, 3
      %s40 = scalar_select %p39, 0, %s38
      %s41 = sadd.s32 1, %s32
      %s42 = scalar_select %p39, %s41, %s32
      %p43 = scmp.ge.s32.totalorder %s42, 3
      %s44 = scalar_select %p43, 0, %s42
      %s45 = ssub.s32 %s32, %s44
      %p46 = scmp.eq.s32.totalorder %s45, 0
      %s48 = sadd.s32 %s47, 1
      %s49 = scalar_select %p46, %s47, %s48
      %p52 = pneg %p46
      %p53 = scmp.eq.s32.totalorder %s25, 8
      %p54 = por %p52, %p53
      %p55 = scmp.ne.s32.totalorder %s47, %s50
      %p56 = scmp.eq.s32.totalorder %s25, 0
      %p57 = por %p55, %p56
      %p58 = scmp.ne.s32.totalorder %s47, %s50
      %p59 = scmp.eq.s32.totalorder %s30, 8
      %p60 = por %p58, %p59
      %p61 = scmp.ne.s32.totalorder %s50, %s51
      %p62 = scmp.eq.s32.totalorder %s30, 0
      %p63 = por %p61, %p62
      %p64 = scmp.ne.s32.totalorder %s50, %s51
      %p65 = scmp.eq.s32.totalorder %s31, 8
      %p66 = por %p64, %p65
      %p68 = scmp.ne.s32.totalorder %s51, %s67
      %p69 = scmp.eq.s32.totalorder %s31, 0
      %p70 = por %p68, %p69
      %s72 = sadd.s32 %s71, 1
      %p75 = scmp.eq.s32.totalorder %s25, 8
      %p76 = scmp.ne.s32.totalorder %s71, %s73
      %p77 = scmp.eq.s32.totalorder %s25, 0
      %p78 = por %p76, %p77
      %p79 = scmp.ne.s32.totalorder %s71, %s73
      %p80 = scmp.eq.s32.totalorder %s30, 8
      %p81 = por %p79, %p80
      %p82 = scmp.ne.s32.totalorder %s73, %s74
      %p83 = scmp.eq.s32.totalorder %s30, 0
      %p84 = por %p82, %p83
      %p85 = scmp.ne.s32.totalorder %s73, %s74
      %p86 = scmp.eq.s32.totalorder %s31, 8
      %p87 = por %p85, %p86
      %p89 = scmp.ne.s32.totalorder %s74, %s88
      %p90 = scmp.eq.s32.totalorder %s31, 0
      %p91 = por %p89, %p90
      %s93 = sadd.s32 %s92, 1
      %p96 = scmp.eq.s32.totalorder %s25, 8
      %p97 = scmp.ne.s32.totalorder %s92, %s94
      %p98 = scmp.eq.s32.totalorder %s25, 0
      %p99 = por %p97, %p98
      %p100 = scmp.ne.s32.totalorder %s92, %s94
      %p101 = scmp.eq.s32.totalorder %s30, 8
      %p102 = por %p100, %p101
      %p103 = scmp.ne.s32.totalorder %s94, %s95
      %p104 = scmp.eq.s32.totalorder %s30, 0
      %p105 = por %p103, %p104
      %p106 = scmp.ne.s32.totalorder %s94, %s95
      %p107 = scmp.eq.s32.totalorder %s31, 8
      %p108 = por %p106, %p107
      %p110 = scmp.ne.s32.totalorder %s95, %s109
      %p111 = scmp.eq.s32.totalorder %s31, 0
      %p112 = por %p110, %p111
      %s113 = ssub.s32 %s33, %s40
      %p114 = scmp.eq.s32.totalorder %s113, 0
      %s116 = sadd.s32 %s115, 1
      %s117 = scalar_select %p114, %s115, %s116
      %p120 = pneg %p114
      %p121 = scmp.eq.s32.totalorder %s25, 8
      %p122 = por %p120, %p121
      %p123 = scmp.ne.s32.totalorder %s115, %s118
      %p124 = scmp.eq.s32.totalorder %s25, 0
      %p125 = por %p123, %p124
      %p126 = scmp.ne.s32.totalorder %s115, %s118
      %p127 = scmp.eq.s32.totalorder %s30, 8
      %p128 = por %p126, %p127
      %p129 = scmp.ne.s32.totalorder %s118, %s119
      %p130 = scmp.eq.s32.totalorder %s30, 0
      %p131 = por %p129, %p130
      %p132 = scmp.ne.s32.totalorder %s118, %s119
      %p133 = scmp.eq.s32.totalorder %s31, 8
      %p134 = por %p132, %p133
      %p136 = scmp.ne.s32.totalorder %s119, %s135
      %p137 = scmp.eq.s32.totalorder %s31, 0
      %p138 = por %p136, %p137
      %s139 = ssub.s32 %s32, %s44
      %p140 = scmp.eq.s32.totalorder %s139, 0
      %s142 = sadd.s32 %s141, 1
      %s143 = scalar_select %p140, %s141, %s142
      %p146 = pneg %p140
      %p147 = scmp.eq.s32.totalorder %s25, 8
      %p148 = por %p146, %p147
      %p149 = scmp.ne.s32.totalorder %s141, %s144
      %p150 = scmp.eq.s32.totalorder %s25, 0
      %p151 = por %p149, %p150
      %p152 = scmp.ne.s32.totalorder %s141, %s144
      %p153 = scmp.eq.s32.totalorder %s30, 8
      %p154 = por %p152, %p153
      %p155 = scmp.ne.s32.totalorder %s144, %s145
      %p156 = scmp.eq.s32.totalorder %s30, 0
      %p157 = por %p155, %p156
      %p158 = scmp.ne.s32.totalorder %s144, %s145
      %p159 = scmp.eq.s32.totalorder %s31, 8
      %p160 = por %p158, %p159
      %p162 = scmp.ne.s32.totalorder %s145, %s161
      %p163 = scmp.eq.s32.totalorder %s31, 0
      %p164 = por %p162, %p163
      %s165 = ssub.s32 %s32, %s44
      %p166 = scmp.eq.s32.totalorder %s165, 0
      %s168 = sadd.s32 %s167, 1
      %s169 = scalar_select %p166, %s167, %s168
      %p172 = pneg %p166
      %p173 = scmp.eq.s32.totalorder %s25, 8
      %p174 = por %p172, %p173
      %p175 = scmp.ne.s32.totalorder %s167, %s170
      %p176 = scmp.eq.s32.totalorder %s25, 0
      %p177 = por %p175, %p176
      %p178 = scmp.ne.s32.totalorder %s167, %s170
      %p179 = scmp.eq.s32.totalorder %s30, 8
      %p180 = por %p178, %p179
      %p181 = scmp.ne.s32.totalorder %s170, %s171
      %p182 = scmp.eq.s32.totalorder %s30, 0
      %p183 = por %p181, %p182
      %p184 = scmp.ne.s32.totalorder %s170, %s171
      %p185 = scmp.eq.s32.totalorder %s31, 8
      %p186 = por %p184, %p185
      %p188 = scmp.ne.s32.totalorder %s171, %s187
      %p189 = scmp.eq.s32.totalorder %s31, 0
      %p190 = por %p188, %p189
      %s191 = ssub.s32 %s32, %s44
      %s192 = ssub.s32 %s33, %s40
      %s193 = sor.u32 %s191, %s192
      %p194 = scmp.eq.s32.totalorder %s193, 0
      %s196 = sadd.s32 %s195, 1
      %s197 = scalar_select %p194, %s195, %s196
      %p200 = pneg %p194
      %p201 = scmp.eq.s32.totalorder %s25, 8
      %p202 = por %p200, %p201
      %p203 = scmp.ne.s32.totalorder %s195, %s198
      %p204 = scmp.eq.s32.totalorder %s25, 0
      %p205 = por %p203, %p204
      %p206 = scmp.ne.s32.totalorder %s195, %s198
      %p207 = scmp.eq.s32.totalorder %s30, 8
      %p208 = por %p206, %p207
      %p209 = scmp.ne.s32.totalorder %s198, %s199
      %p210 = scmp.eq.s32.totalorder %s30, 0
      %p211 = por %p209, %p210
      %p212 = scmp.ne.s32.totalorder %s198, %s199
      %p213 = scmp.eq.s32.totalorder %s31, 8
      %p214 = por %p212, %p213
      %p216 = scmp.ne.s32.totalorder %s199, %s215
      %p217 = scmp.eq.s32.totalorder %s31, 0
      %p218 = por %p216, %p217
      %p219 = scmp.le.s32.totalorder 1, %s25
      %p220 = scmp.lt.s32.totalorder %s25, 10
      %p221 = pnand %p219, %p220
      %p222 = pneg %p221
      // Predicated region
      $region9: #{tpu_custom_call.1} parent=5 // pred_check
        _
      $region10: #{tpu_custom_call.1} parent=5 // pred_check_branch
        %224 = sbr.rel (%p221) target = $region12
      $region11: #{tpu_custom_call.1} parent=5 // pred_region
        %s225 = ssub.s32 %s25, 1
        // Predicated region
        $region13: #{tpu_custom_call.1} parent=11 // pred_check
          %p226 = pneg %p84
        $region14: #{tpu_custom_call.1} parent=11 // pred_check_branch
          %228 = sbr.rel (%p226) target = $region16
        $region15: #{tpu_custom_call.1} parent=11 // pred_region
          %230 = vsyncadd [#allocation7], 0
          %s232 = sshll.u32 %s1, 4
          %s233 = int_to_ptr.hbm [resolvable:$true] %s232
          %s234 = sshll.u32 [#allocation6], 4
          %s235 = int_to_ptr.vmem [resolvable:$true] %s234
          %237 = dma.hbm_to_vmem [thread:$0]  %s233, 64, %s235, [#allocation7]
        $region16: #{tpu_custom_call.1} parent=11 // pred_fallthru
          _
        // Predicated region
        $region17: #{tpu_custom_call.1} parent=11 // pred_check
          %p238 = pneg %p105
        $region18: #{tpu_custom_call.1} parent=11 // pred_check_branch
          %240 = sbr.rel (%p238) target = $region20
        $region19: #{tpu_custom_call.1} parent=11 // pred_region
          %242 = vsyncadd [#allocation7], 0
          %s244 = sshll.u32 %s2, 4
          %s245 = int_to_ptr.hbm [resolvable:$true] %s244
          %s246 = sshll.u32 [#allocation8], 4
          %s247 = int_to_ptr.vmem [resolvable:$true] %s246
          %249 = dma.hbm_to_vmem [thread:$0]  %s245, 64, %s247, [#allocation7]
        $region20: #{tpu_custom_call.1} parent=11 // pred_fallthru
          _
      $region12: #{tpu_custom_call.1} parent=5 // pred_fallthru
        _
      %p250 = scmp.lt.s32.totalorder %s25, 9
      // Predicated region
      $region21: #{tpu_custom_call.1} parent=5 // pred_check
        %p251 = pneg %p250
      $region22: #{tpu_custom_call.1} parent=5 // pred_check_branch
        %253 = sbr.rel (%p251) target = $region24
      $region23: #{tpu_custom_call.1} parent=5 // pred_region
        // Predicated region
        $region25: #{tpu_custom_call.1} parent=23 // pred_check
          %p254 = pneg %p57
        $region26: #{tpu_custom_call.1} parent=23 // pred_check_branch
          %256 = sbr.rel (%p254) target = $region28
        $region27: #{tpu_custom_call.1} parent=23 // pred_region
          %s257 = sand.u32 %s47, 1
          %s258 = scalar_lea.sflag [#allocation4], %s257
          %s259 = sand.u32 %s47, 1
          %s260 = smul.addr %s259, 1024
          %s261 = scalar_lea.vmem [#allocation3], %s260
          %s262 = smul.u32 32, %s32
          %264 = vsyncadd %s258, 0
          %s265 = smul.addr %s262, 4
          %s266 = smul.addr %s265, 8
          %s267 = scalar_lea.hbm %s0, %s266
          %s268 = sshll.u32 %s267, 4
          %s269 = int_to_ptr.hbm [resolvable:$true] %s268
          %s270 = sshll.u32 %s261, 4
          %s271 = int_to_ptr.vmem [resolvable:$true] %s270
          %276 = dma.hbm_to_vmem [thread:$0]  %s269, 16384, %s271, %s258, 512, 512, 32
        $region28: #{tpu_custom_call.1} parent=23 // pred_fallthru
          _
        // Predicated region
        $region29: #{tpu_custom_call.1} parent=23 // pred_check
          %p277 = pneg %p125
        $region30: #{tpu_custom_call.1} parent=23 // pred_check_branch
          %279 = sbr.rel (%p277) target = $region32
        $region31: #{tpu_custom_call.1} parent=23 // pred_region
          %s280 = sand.u32 %s25, 1
          %s281 = scalar_lea.sflag [#allocation10], %s280
          %s282 = sand.u32 %s115, 1
          %s283 = smul.addr %s282, 2048
          %s284 = scalar_lea.vmem [#allocation9], %s283
          %s285 = smul.u32 4, %s33
          %287 = vsyncadd %s281, 0
          %s288 = smul.addr %s285, 8
          %s289 = scalar_lea.hbm %s3, %s288
          %s290 = sshll.u32 %s289, 4
          %s291 = int_to_ptr.hbm [resolvable:$true] %s290
          %s292 = sshll.u32 %s284, 4
          %s293 = int_to_ptr.vmem [resolvable:$true] %s292
          %298 = dma.hbm_to_vmem [thread:$0]  %s291, 32768, %s293, %s281, 1536, 512, 32
        $region32: #{tpu_custom_call.1} parent=23 // pred_fallthru
          _
        // Predicated region
        $region33: #{tpu_custom_call.1} parent=23 // pred_check
          %p299 = pneg %p151
        $region34: #{tpu_custom_call.1} parent=23 // pred_check_branch
          %301 = sbr.rel (%p299) target = $region36
        $region35: #{tpu_custom_call.1} parent=23 // pred_region
          %s302 = sand.u32 %s25, 1
          %s303 = scalar_lea.sflag [#allocation10], %s302
          %s304 = sand.u32 %s141, 1
          %s305 = smul.addr %s304, 256
          %s306 = scalar_lea.vmem [#allocation11], %s305
          %s307 = smul.u32 32, %s32
          %309 = vsyncadd %s303, 0
          %s310 = smul.addr %s307, 8
          %s311 = scalar_lea.hbm %s4, %s310
          %s312 = sshll.u32 %s311, 4
          %s313 = int_to_ptr.hbm [resolvable:$true] %s312
          %s314 = sshll.u32 %s306, 4
          %s315 = int_to_ptr.vmem [resolvable:$true] %s314
          %320 = dma.hbm_to_vmem [thread:$0]  %s313, 4096, %s315, %s303, 128, 128, 8
        $region36: #{tpu_custom_call.1} parent=23 // pred_fallthru
          _
        // Predicated region
        $region37: #{tpu_custom_call.1} parent=23 // pred_check
          %p321 = pneg %p177
        $region38: #{tpu_custom_call.1} parent=23 // pred_check_branch
          %323 = sbr.rel (%p321) target = $region40
        $region39: #{tpu_custom_call.1} parent=23 // pred_region
          %s324 = sand.u32 %s167, 1
          %s325 = scalar_lea.sflag [#allocation13], %s324
          %s326 = sand.u32 %s167, 1
          %s327 = smul.addr %s326, 256
          %s328 = scalar_lea.vmem [#allocation12], %s327
          %s329 = smul.u32 32, %s32
          %331 = vsyncadd %s325, 0
          %s332 = smul.addr %s329, 8
          %s333 = scalar_lea.hbm %s5, %s332
          %s334 = sshll.u32 %s333, 4
          %s335 = int_to_ptr.hbm [resolvable:$true] %s334
          %s336 = sshll.u32 %s328, 4
          %s337 = int_to_ptr.vmem [resolvable:$true] %s336
          %342 = dma.hbm_to_vmem [thread:$0]  %s335, 4096, %s337, %s325, 128, 128, 8
        $region40: #{tpu_custom_call.1} parent=23 // pred_fallthru
          _
      $region24: #{tpu_custom_call.1} parent=5 // pred_fallthru
        _
      %p343 = scmp.le.s32.totalorder 1, %s25
      %p344 = scmp.lt.s32.totalorder %s25, 10
      %p345 = pnand %p343, %p344
      %p346 = pneg %p345
      // Predicated region
      $region41: #{tpu_custom_call.1} parent=5 // pred_check
        _
      $region42: #{tpu_custom_call.1} parent=5 // pred_check_branch
        %348 = sbr.rel (%p345) target = $region44
      $region43: #{tpu_custom_call.1} parent=5 // pred_region
        %s349 = ssub.s32 %s25, 1
        %s350 = sand.u32 %s50, 1
        %s351 = scalar_lea.sflag [#allocation4], %s350
        %s352 = sand.u32 %s50, 1
        %s353 = smul.addr %s352, 1024
        %s354 = scalar_lea.vmem [#allocation3], %s353
        // Predicated region
        $region45: #{tpu_custom_call.1} parent=43 // pred_check
          %p355 = pneg %p63
        $region46: #{tpu_custom_call.1} parent=43 // pred_check_branch
          %357 = sbr.rel (%p355) target = $region48
        $region47: #{tpu_custom_call.1} parent=43 // pred_region
          %359 = dma.done %s351, 16384
        $region48: #{tpu_custom_call.1} parent=43 // pred_fallthru
          _
        // Predicated region
        $region49: #{tpu_custom_call.1} parent=43 // pred_check
          %p360 = pneg %p84
        $region50: #{tpu_custom_call.1} parent=43 // pred_check_branch
          %362 = sbr.rel (%p360) target = $region52
        $region51: #{tpu_custom_call.1} parent=43 // pred_region
          %364 = dma.done [#allocation7], 64
        $region52: #{tpu_custom_call.1} parent=43 // pred_fallthru
          _
        // Predicated region
        $region53: #{tpu_custom_call.1} parent=43 // pred_check
          %p365 = pneg %p105
        $region54: #{tpu_custom_call.1} parent=43 // pred_check_branch
          %367 = sbr.rel (%p365) target = $region56
        $region55: #{tpu_custom_call.1} parent=43 // pred_region
          %369 = dma.done [#allocation7], 64
        $region56: #{tpu_custom_call.1} parent=43 // pred_fallthru
          _
        %s370 = sand.u32 %s30, 1
        %s371 = scalar_lea.sflag [#allocation10], %s370
        %s372 = sand.u32 %s118, 1
        %s373 = smul.addr %s372, 2048
        %s374 = scalar_lea.vmem [#allocation9], %s373
        // Predicated region
        $region57: #{tpu_custom_call.1} parent=43 // pred_check
          %p375 = pneg %p131
        $region58: #{tpu_custom_call.1} parent=43 // pred_check_branch
          %377 = sbr.rel (%p375) target = $region60
        $region59: #{tpu_custom_call.1} parent=43 // pred_region
          %379 = dma.done %s371, 32768
        $region60: #{tpu_custom_call.1} parent=43 // pred_fallthru
          _
        %s380 = sand.u32 %s30, 1
        %s381 = scalar_lea.sflag [#allocation10], %s380
        %s382 = sand.u32 %s144, 1
        %s383 = smul.addr %s382, 256
        %s384 = scalar_lea.vmem [#allocation11], %s383
        // Predicated region
        $region61: #{tpu_custom_call.1} parent=43 // pred_check
          %p385 = pneg %p157
        $region62: #{tpu_custom_call.1} parent=43 // pred_check_branch
          %387 = sbr.rel (%p385) target = $region64
        $region63: #{tpu_custom_call.1} parent=43 // pred_region
          %389 = dma.done %s381, 4096
        $region64: #{tpu_custom_call.1} parent=43 // pred_fallthru
          _
        %s390 = sand.u32 %s170, 1
        %s391 = scalar_lea.sflag [#allocation13], %s390
        %s392 = sand.u32 %s170, 1
        %s393 = smul.addr %s392, 256
        %s394 = scalar_lea.vmem [#allocation12], %s393
        // Predicated region
        $region65: #{tpu_custom_call.1} parent=43 // pred_check
          %p395 = pneg %p183
        $region66: #{tpu_custom_call.1} parent=43 // pred_check_branch
          %397 = sbr.rel (%p395) target = $region68
        $region67: #{tpu_custom_call.1} parent=43 // pred_region
          %399 = dma.done %s391, 4096
        $region68: #{tpu_custom_call.1} parent=43 // pred_fallthru
          _
        %s400 = sand.u32 %s50, 1
        %s401 = scalar_lea.sflag [#allocation4], %s400
        %s402 = sand.u32 %s50, 1
        %s403 = smul.addr %s402, 1024
        %s404 = scalar_lea.vmem [#allocation3], %s403
        %p405 = pneg %p63
        %p406 = pneg %p60
        %p407 = pneg %p84
        %p408 = pneg %p81
        %p409 = pneg %p105
        %p410 = pneg %p102
        %s411 = sand.u32 %s30, 1
        %s412 = scalar_lea.sflag [#allocation10], %s411
        %s413 = sand.u32 %s118, 1
        %s414 = smul.addr %s413, 2048
        %s415 = scalar_lea.vmem [#allocation9], %s414
        %p416 = pneg %p131
        %p417 = pneg %p128
        %s418 = sand.u32 %s30, 1
        %s419 = scalar_lea.sflag [#allocation10], %s418
        %s420 = sand.u32 %s144, 1
        %s421 = smul.addr %s420, 256
        %s422 = scalar_lea.vmem [#allocation11], %s421
        %p423 = pneg %p157
        %p424 = pneg %p154
        %s425 = sand.u32 %s170, 1
        %s426 = scalar_lea.sflag [#allocation13], %s425
        %s427 = sand.u32 %s170, 1
        %s428 = smul.addr %s427, 256
        %s429 = scalar_lea.vmem [#allocation12], %s428
        %p430 = pneg %p183
        %p431 = pneg %p180
        %p432 = pneg %p211
        %p433 = pneg %p208
        %s434 = sand.u32 %s198, 1
        %s435 = scalar_lea.sflag [#allocation5], %s434
        %s436 = sand.u32 %s198, 1
        %s437 = smul.addr %s436, 1024
        %s438 = scalar_lea.vmem [#allocation14], %s437
        %s439 = smul.u32 32, %s34
        %s440 = smul.u32 4, %s35
        %s441 = smul.u32 32, %s34
        %s442 = smul.u32 32, %s34
        %s443 = smul.u32 32, %s34
        %s444 = smul.u32 4, %s35
        %p445 = scmp.eq.s32.totalorder %s35, 0
        // Predicated region
        $region69: #{tpu_custom_call.1} parent=43 // pred_check
          %p446 = pneg %p445
        $region70: #{tpu_custom_call.1} parent=43 // pred_check_branch
          %448 = sbr.rel (%p446) target = $region72
        $region71: #{tpu_custom_call.1} parent=43 // pred_region
          %v449 = vld [vmem:[%s354] sm:$0xff]
          %v450 = vld [vmem:[%s354 + $0x8] sm:$0xff]
          %v451 = vld [vmem:[%s354 + $0x10] sm:$0xff]
          %v452 = vld [vmem:[%s354 + $0x18] sm:$0xff]
          %v453 = vld [vmem:[%s354 + $0x20] sm:$0xff]
          %v454 = vld [vmem:[%s354 + $0x28] sm:$0xff]
          %v455 = vld [vmem:[%s354 + $0x30] sm:$0xff]
          %v456 = vld [vmem:[%s354 + $0x38] sm:$0xff]
          %v457 = vld [vmem:[%s354 + $0x40] sm:$0xff]
          %v458 = vld [vmem:[%s354 + $0x48] sm:$0xff]
          %v459 = vld [vmem:[%s354 + $0x50] sm:$0xff]
          %v460 = vld [vmem:[%s354 + $0x58] sm:$0xff]
          %v461 = vld [vmem:[%s354 + $0x60] sm:$0xff]
          %v462 = vld [vmem:[%s354 + $0x68] sm:$0xff]
          %v463 = vld [vmem:[%s354 + $0x70] sm:$0xff]
          %v464 = vld [vmem:[%s354 + $0x78] sm:$0xff]
          %v465 = vld [vmem:[%s354 + $0x80] sm:$0xff]
          %v466 = vld [vmem:[%s354 + $0x88] sm:$0xff]
          %v467 = vld [vmem:[%s354 + $0x90] sm:$0xff]
          %v468 = vld [vmem:[%s354 + $0x98] sm:$0xff]
          %v469 = vld [vmem:[%s354 + $0xa0] sm:$0xff]
          %v470 = vld [vmem:[%s354 + $0xa8] sm:$0xff]
          %v471 = vld [vmem:[%s354 + $0xb0] sm:$0xff]
          %v472 = vld [vmem:[%s354 + $0xb8] sm:$0xff]
          %v473 = vld [vmem:[%s354 + $0xc0] sm:$0xff]
          %v474 = vld [vmem:[%s354 + $0xc8] sm:$0xff]
          %v475 = vld [vmem:[%s354 + $0xd0] sm:$0xff]
          %v476 = vld [vmem:[%s354 + $0xd8] sm:$0xff]
          %v477 = vld [vmem:[%s354 + $0xe0] sm:$0xff]
          %v478 = vld [vmem:[%s354 + $0xe8] sm:$0xff]
          %v479 = vld [vmem:[%s354 + $0xf0] sm:$0xff]
          %v480 = vld [vmem:[%s354 + $0xf8] sm:$0xff]
          %v481 = vld [vmem:[%s354 + $0x100] sm:$0xff]
          %v482 = vld [vmem:[%s354 + $0x108] sm:$0xff]
          %v483 = vld [vmem:[%s354 + $0x110] sm:$0xff]
          %v484 = vld [vmem:[%s354 + $0x118] sm:$0xff]
          %v485 = vld [vmem:[%s354 + $0x120] sm:$0xff]
          %v486 = vld [vmem:[%s354 + $0x128] sm:$0xff]
          %v487 = vld [vmem:[%s354 + $0x130] sm:$0xff]
          %v488 = vld [vmem:[%s354 + $0x138] sm:$0xff]
          %v489 = vld [vmem:[%s354 + $0x140] sm:$0xff]
          %v490 = vld [vmem:[%s354 + $0x148] sm:$0xff]
          %v491 = vld [vmem:[%s354 + $0x150] sm:$0xff]
          %v492 = vld [vmem:[%s354 + $0x158] sm:$0xff]
          %v493 = vld [vmem:[%s354 + $0x160] sm:$0xff]
          %v494 = vld [vmem:[%s354 + $0x168] sm:$0xff]
          %v495 = vld [vmem:[%s354 + $0x170] sm:$0xff]
          %v496 = vld [vmem:[%s354 + $0x178] sm:$0xff]
          %v497 = vld [vmem:[%s354 + $0x180] sm:$0xff]
          %v498 = vld [vmem:[%s354 + $0x188] sm:$0xff]
          %v499 = vld [vmem:[%s354 + $0x190] sm:$0xff]
          %v500 = vld [vmem:[%s354 + $0x198] sm:$0xff]
          %v501 = vld [vmem:[%s354 + $0x1a0] sm:$0xff]
          %v502 = vld [vmem:[%s354 + $0x1a8] sm:$0xff]
          %v503 = vld [vmem:[%s354 + $0x1b0] sm:$0xff]
          %v504 = vld [vmem:[%s354 + $0x1b8] sm:$0xff]
          %v505 = vld [vmem:[%s354 + $0x1c0] sm:$0xff]
          %v506 = vld [vmem:[%s354 + $0x1c8] sm:$0xff]
          %v507 = vld [vmem:[%s354 + $0x1d0] sm:$0xff]
          %v508 = vld [vmem:[%s354 + $0x1d8] sm:$0xff]
          %v509 = vld [vmem:[%s354 + $0x1e0] sm:$0xff]
          %v510 = vld [vmem:[%s354 + $0x1e8] sm:$0xff]
          %v511 = vld [vmem:[%s354 + $0x1f0] sm:$0xff]
          %v512 = vld [vmem:[%s354 + $0x1f8] sm:$0xff]
          %v513 = vld [vmem:[%s354 + $0x200] sm:$0xff]
          %v514 = vld [vmem:[%s354 + $0x208] sm:$0xff]
          %v515 = vld [vmem:[%s354 + $0x210] sm:$0xff]
          %v516 = vld [vmem:[%s354 + $0x218] sm:$0xff]
          %v517 = vld [vmem:[%s354 + $0x220] sm:$0xff]
          %v518 = vld [vmem:[%s354 + $0x228] sm:$0xff]
          %v519 = vld [vmem:[%s354 + $0x230] sm:$0xff]
          %v520 = vld [vmem:[%s354 + $0x238] sm:$0xff]
          %v521 = vld [vmem:[%s354 + $0x240] sm:$0xff]
          %v522 = vld [vmem:[%s354 + $0x248] sm:$0xff]
          %v523 = vld [vmem:[%s354 + $0x250] sm:$0xff]
          %v524 = vld [vmem:[%s354 + $0x258] sm:$0xff]
          %v525 = vld [vmem:[%s354 + $0x260] sm:$0xff]
          %v526 = vld [vmem:[%s354 + $0x268] sm:$0xff]
          %v527 = vld [vmem:[%s354 + $0x270] sm:$0xff]
          %v528 = vld [vmem:[%s354 + $0x278] sm:$0xff]
          %v529 = vld [vmem:[%s354 + $0x280] sm:$0xff]
          %v530 = vld [vmem:[%s354 + $0x288] sm:$0xff]
          %v531 = vld [vmem:[%s354 + $0x290] sm:$0xff]
          %v532 = vld [vmem:[%s354 + $0x298] sm:$0xff]
          %v533 = vld [vmem:[%s354 + $0x2a0] sm:$0xff]
          %v534 = vld [vmem:[%s354 + $0x2a8] sm:$0xff]
          %v535 = vld [vmem:[%s354 + $0x2b0] sm:$0xff]
          %v536 = vld [vmem:[%s354 + $0x2b8] sm:$0xff]
          %v537 = vld [vmem:[%s354 + $0x2c0] sm:$0xff]
          %v538 = vld [vmem:[%s354 + $0x2c8] sm:$0xff]
          %v539 = vld [vmem:[%s354 + $0x2d0] sm:$0xff]
          %v540 = vld [vmem:[%s354 + $0x2d8] sm:$0xff]
          %v541 = vld [vmem:[%s354 + $0x2e0] sm:$0xff]
          %v542 = vld [vmem:[%s354 + $0x2e8] sm:$0xff]
          %v543 = vld [vmem:[%s354 + $0x2f0] sm:$0xff]
          %v544 = vld [vmem:[%s354 + $0x2f8] sm:$0xff]
          %v545 = vld [vmem:[%s354 + $0x300] sm:$0xff]
          %v546 = vld [vmem:[%s354 + $0x308] sm:$0xff]
          %v547 = vld [vmem:[%s354 + $0x310] sm:$0xff]
          %v548 = vld [vmem:[%s354 + $0x318] sm:$0xff]
          %v549 = vld [vmem:[%s354 + $0x320] sm:$0xff]
          %v550 = vld [vmem:[%s354 + $0x328] sm:$0xff]
          %v551 = vld [vmem:[%s354 + $0x330] sm:$0xff]
          %v552 = vld [vmem:[%s354 + $0x338] sm:$0xff]
          %v553 = vld [vmem:[%s354 + $0x340] sm:$0xff]
          %v554 = vld [vmem:[%s354 + $0x348] sm:$0xff]
          %v555 = vld [vmem:[%s354 + $0x350] sm:$0xff]
          %v556 = vld [vmem:[%s354 + $0x358] sm:$0xff]
          %v557 = vld [vmem:[%s354 + $0x360] sm:$0xff]
          %v558 = vld [vmem:[%s354 + $0x368] sm:$0xff]
          %v559 = vld [vmem:[%s354 + $0x370] sm:$0xff]
          %v560 = vld [vmem:[%s354 + $0x378] sm:$0xff]
          %v561 = vld [vmem:[%s354 + $0x380] sm:$0xff]
          %v562 = vld [vmem:[%s354 + $0x388] sm:$0xff]
          %v563 = vld [vmem:[%s354 + $0x390] sm:$0xff]
          %v564 = vld [vmem:[%s354 + $0x398] sm:$0xff]
          %v565 = vld [vmem:[%s354 + $0x3a0] sm:$0xff]
          %v566 = vld [vmem:[%s354 + $0x3a8] sm:$0xff]
          %v567 = vld [vmem:[%s354 + $0x3b0] sm:$0xff]
          %v568 = vld [vmem:[%s354 + $0x3b8] sm:$0xff]
          %v569 = vld [vmem:[%s354 + $0x3c0] sm:$0xff]
          %v570 = vld [vmem:[%s354 + $0x3c8] sm:$0xff]
          %v571 = vld [vmem:[%s354 + $0x3d0] sm:$0xff]
          %v572 = vld [vmem:[%s354 + $0x3d8] sm:$0xff]
          %v573 = vld [vmem:[%s354 + $0x3e0] sm:$0xff]
          %v574 = vld [vmem:[%s354 + $0x3e8] sm:$0xff]
          %v575 = vld [vmem:[%s354 + $0x3f0] sm:$0xff]
          %v576 = vld [vmem:[%s354 + $0x3f8] sm:$0xff]
          %v577 = vadd.f32 %v449, %v450
          %v578 = vadd.f32 %v577, %v451
          %v579 = vadd.f32 %v578, %v452
          %580 = vadd.xlane.f32.xlu0 %v579
          %v581 = vpop.xlane.xlu0 %580
          %v582 = vadd.f32 %v453, %v454
          %v583 = vadd.f32 %v582, %v455
          %v584 = vadd.f32 %v583, %v456
          %585 = vadd.xlane.f32.xlu0 %v584
          %v586 = vpop.xlane.xlu0 %585
          %v587 = vadd.f32 %v457, %v458
          %v588 = vadd.f32 %v587, %v459
          %v589 = vadd.f32 %v588, %v460
          %590 = vadd.xlane.f32.xlu0 %v589
          %v591 = vpop.xlane.xlu0 %590
          %v592 = vadd.f32 %v461, %v462
          %v593 = vadd.f32 %v592, %v463
          %v594 = vadd.f32 %v593, %v464
          %595 = vadd.xlane.f32.xlu0 %v594
          %v596 = vpop.xlane.xlu0 %595
          %v597 = vadd.f32 %v465, %v466
          %v598 = vadd.f32 %v597, %v467
          %v599 = vadd.f32 %v598, %v468
          %600 = vadd.xlane.f32.xlu0 %v599
          %v601 = vpop.xlane.xlu0 %600
          %v602 = vadd.f32 %v469, %v470
          %v603 = vadd.f32 %v602, %v471
          %v604 = vadd.f32 %v603, %v472
          %605 = vadd.xlane.f32.xlu0 %v604
          %v606 = vpop.xlane.xlu0 %605
          %v607 = vadd.f32 %v473, %v474
          %v608 = vadd.f32 %v607, %v475
          %v609 = vadd.f32 %v608, %v476
          %610 = vadd.xlane.f32.xlu0 %v609
          %v611 = vpop.xlane.xlu0 %610
          %v612 = vadd.f32 %v477, %v478
          %v613 = vadd.f32 %v612, %v479
          %v614 = vadd.f32 %v613, %v480
          %615 = vadd.xlane.f32.xlu0 %v614
          %v616 = vpop.xlane.xlu0 %615
          %v617 = vadd.f32 %v481, %v482
          %v618 = vadd.f32 %v617, %v483
          %v619 = vadd.f32 %v618, %v484
          %620 = vadd.xlane.f32.xlu0 %v619
          %v621 = vpop.xlane.xlu0 %620
          %v622 = vadd.f32 %v485, %v486
          %v623 = vadd.f32 %v622, %v487
          %v624 = vadd.f32 %v623, %v488
          %625 = vadd.xlane.f32.xlu0 %v624
          %v626 = vpop.xlane.xlu0 %625
          %v627 = vadd.f32 %v489, %v490
          %v628 = vadd.f32 %v627, %v491
          %v629 = vadd.f32 %v628, %v492
          %630 = vadd.xlane.f32.xlu0 %v629
          %v631 = vpop.xlane.xlu0 %630
          %v632 = vadd.f32 %v493, %v494
          %v633 = vadd.f32 %v632, %v495
          %v634 = vadd.f32 %v633, %v496
          %635 = vadd.xlane.f32.xlu0 %v634
          %v636 = vpop.xlane.xlu0 %635
          %v637 = vadd.f32 %v497, %v498
          %v638 = vadd.f32 %v637, %v499
          %v639 = vadd.f32 %v638, %v500
          %640 = vadd.xlane.f32.xlu0 %v639
          %v641 = vpop.xlane.xlu0 %640
          %v642 = vadd.f32 %v501, %v502
          %v643 = vadd.f32 %v642, %v503
          %v644 = vadd.f32 %v643, %v504
          %645 = vadd.xlane.f32.xlu0 %v644
          %v646 = vpop.xlane.xlu0 %645
          %v647 = vadd.f32 %v505, %v506
          %v648 = vadd.f32 %v647, %v507
          %v649 = vadd.f32 %v648, %v508
          %650 = vadd.xlane.f32.xlu0 %v649
          %v651 = vpop.xlane.xlu0 %650
          %v652 = vadd.f32 %v509, %v510
          %v653 = vadd.f32 %v652, %v511
          %v654 = vadd.f32 %v653, %v512
          %655 = vadd.xlane.f32.xlu0 %v654
          %v656 = vpop.xlane.xlu0 %655
          %v657 = vadd.f32 %v513, %v514
          %v658 = vadd.f32 %v657, %v515
          %v659 = vadd.f32 %v658, %v516
          %660 = vadd.xlane.f32.xlu0 %v659
          %v661 = vpop.xlane.xlu0 %660
          %v662 = vadd.f32 %v517, %v518
          %v663 = vadd.f32 %v662, %v519
          %v664 = vadd.f32 %v663, %v520
          %665 = vadd.xlane.f32.xlu0 %v664
          %v666 = vpop.xlane.xlu0 %665
          %v667 = vadd.f32 %v521, %v522
          %v668 = vadd.f32 %v667, %v523
          %v669 = vadd.f32 %v668, %v524
          %670 = vadd.xlane.f32.xlu0 %v669
          %v671 = vpop.xlane.xlu0 %670
          %v672 = vadd.f32 %v525, %v526
          %v673 = vadd.f32 %v672, %v527
          %v674 = vadd.f32 %v673, %v528
          %675 = vadd.xlane.f32.xlu0 %v674
          %v676 = vpop.xlane.xlu0 %675
          %v677 = vadd.f32 %v529, %v530
          %v678 = vadd.f32 %v677, %v531
          %v679 = vadd.f32 %v678, %v532
          %680 = vadd.xlane.f32.xlu0 %v679
          %v681 = vpop.xlane.xlu0 %680
          %v682 = vadd.f32 %v533, %v534
          %v683 = vadd.f32 %v682, %v535
          %v684 = vadd.f32 %v683, %v536
          %685 = vadd.xlane.f32.xlu0 %v684
          %v686 = vpop.xlane.xlu0 %685
          %v687 = vadd.f32 %v537, %v538
          %v688 = vadd.f32 %v687, %v539
          %v689 = vadd.f32 %v688, %v540
          %690 = vadd.xlane.f32.xlu0 %v689
          %v691 = vpop.xlane.xlu0 %690
          %v692 = vadd.f32 %v541, %v542
          %v693 = vadd.f32 %v692, %v543
          %v694 = vadd.f32 %v693, %v544
          %695 = vadd.xlane.f32.xlu0 %v694
          %v696 = vpop.xlane.xlu0 %695
          %v697 = vadd.f32 %v545, %v546
          %v698 = vadd.f32 %v697, %v547
          %v699 = vadd.f32 %v698, %v548
          %700 = vadd.xlane.f32.xlu0 %v699
          %v701 = vpop.xlane.xlu0 %700
          %v702 = vadd.f32 %v549, %v550
          %v703 = vadd.f32 %v702, %v551
          %v704 = vadd.f32 %v703, %v552
          %705 = vadd.xlane.f32.xlu0 %v704
          %v706 = vpop.xlane.xlu0 %705
          %v707 = vadd.f32 %v553, %v554
          %v708 = vadd.f32 %v707, %v555
          %v709 = vadd.f32 %v708, %v556
          %710 = vadd.xlane.f32.xlu0 %v709
          %v711 = vpop.xlane.xlu0 %710
          %v712 = vadd.f32 %v557, %v558
          %v713 = vadd.f32 %v712, %v559
          %v714 = vadd.f32 %v713, %v560
          %715 = vadd.xlane.f32.xlu0 %v714
          %v716 = vpop.xlane.xlu0 %715
          %v717 = vadd.f32 %v561, %v562
          %v718 = vadd.f32 %v717, %v563
          %v719 = vadd.f32 %v718, %v564
          %720 = vadd.xlane.f32.xlu0 %v719
          %v721 = vpop.xlane.xlu0 %720
          %v722 = vadd.f32 %v565, %v566
          %v723 = vadd.f32 %v722, %v567
          %v724 = vadd.f32 %v723, %v568
          %725 = vadd.xlane.f32.xlu0 %v724
          %v726 = vpop.xlane.xlu0 %725
          %v727 = vadd.f32 %v569, %v570
          %v728 = vadd.f32 %v727, %v571
          %v729 = vadd.f32 %v728, %v572
          %730 = vadd.xlane.f32.xlu0 %v729
          %v731 = vpop.xlane.xlu0 %730
          %v732 = vadd.f32 %v573, %v574
          %v733 = vadd.f32 %v732, %v575
          %v734 = vadd.f32 %v733, %v576
          %735 = vadd.xlane.f32.xlu0 %v734
          %v736 = vpop.xlane.xlu0 %735
          %v737 = vrcp.pop 512.0
          %v738 = vmul.f32 512.0, %v737
          %v739 = vsub.f32 1.0, %v738
          %v740 = vmul.f32 %v737, %v739
          %v741 = vadd.f32 %v737, %v740
          %vm742 = vweird.f32 %v737
          %v743 = vsel %vm742, %v737, %v741
          %v744 = vmul.f32 %v581, %v743
          %v745 = vmul.f32 %v586, %v743
          %v746 = vmul.f32 %v591, %v743
          %v747 = vmul.f32 %v596, %v743
          %v748 = vmul.f32 %v601, %v743
          %v749 = vmul.f32 %v606, %v743
          %v750 = vmul.f32 %v611, %v743
          %v751 = vmul.f32 %v616, %v743
          %v752 = vmul.f32 %v621, %v743
          %v753 = vmul.f32 %v626, %v743
          %v754 = vmul.f32 %v631, %v743
          %v755 = vmul.f32 %v636, %v743
          %v756 = vmul.f32 %v641, %v743
          %v757 = vmul.f32 %v646, %v743
          %v758 = vmul.f32 %v651, %v743
          %v759 = vmul.f32 %v656, %v743
          %v760 = vmul.f32 %v661, %v743
          %v761 = vmul.f32 %v666, %v743
          %v762 = vmul.f32 %v671, %v743
          %v763 = vmul.f32 %v676, %v743
          %v764 = vmul.f32 %v681, %v743
          %v765 = vmul.f32 %v686, %v743
          %v766 = vmul.f32 %v691, %v743
          %v767 = vmul.f32 %v696, %v743
          %v768 = vmul.f32 %v701, %v743
          %v769 = vmul.f32 %v706, %v743
          %v770 = vmul.f32 %v711, %v743
          %v771 = vmul.f32 %v716, %v743
          %v772 = vmul.f32 %v721, %v743
          %v773 = vmul.f32 %v726, %v743
          %v774 = vmul.f32 %v731, %v743
          %v775 = vmul.f32 %v736, %v743
          %v776 = vsub.f32 %v449, %v744
          %v777 = vsub.f32 %v450, %v744
          %v778 = vsub.f32 %v451, %v744
          %v779 = vsub.f32 %v452, %v744
          %v780 = vsub.f32 %v453, %v745
          %v781 = vsub.f32 %v454, %v745
          %v782 = vsub.f32 %v455, %v745
          %v783 = vsub.f32 %v456, %v745
          %v784 = vsub.f32 %v457, %v746
          %v785 = vsub.f32 %v458, %v746
          %v786 = vsub.f32 %v459, %v746
          %v787 = vsub.f32 %v460, %v746
          %v788 = vsub.f32 %v461, %v747
          %v789 = vsub.f32 %v462, %v747
          %v790 = vsub.f32 %v463, %v747
          %v791 = vsub.f32 %v464, %v747
          %v792 = vsub.f32 %v465, %v748
          %v793 = vsub.f32 %v466, %v748
          %v794 = vsub.f32 %v467, %v748
          %v795 = vsub.f32 %v468, %v748
          %v796 = vsub.f32 %v469, %v749
          %v797 = vsub.f32 %v470, %v749
          %v798 = vsub.f32 %v471, %v749
          %v799 = vsub.f32 %v472, %v749
          %v800 = vsub.f32 %v473, %v750
          %v801 = vsub.f32 %v474, %v750
          %v802 = vsub.f32 %v475, %v750
          %v803 = vsub.f32 %v476, %v750
          %v804 = vsub.f32 %v477, %v751
          %v805 = vsub.f32 %v478, %v751
          %v806 = vsub.f32 %v479, %v751
          %v807 = vsub.f32 %v480, %v751
          %v808 = vsub.f32 %v481, %v752
          %v809 = vsub.f32 %v482, %v752
          %v810 = vsub.f32 %v483, %v752
          %v811 = vsub.f32 %v484, %v752
          %v812 = vsub.f32 %v485, %v753
          %v813 = vsub.f32 %v486, %v753
          %v814 = vsub.f32 %v487, %v753
          %v815 = vsub.f32 %v488, %v753
          %v816 = vsub.f32 %v489, %v754
          %v817 = vsub.f32 %v490, %v754
          %v818 = vsub.f32 %v491, %v754
          %v819 = vsub.f32 %v492, %v754
          %v820 = vsub.f32 %v493, %v755
          %v821 = vsub.f32 %v494, %v755
          %v822 = vsub.f32 %v495, %v755
          %v823 = vsub.f32 %v496, %v755
          %v824 = vsub.f32 %v497, %v756
          %v825 = vsub.f32 %v498, %v756
          %v826 = vsub.f32 %v499, %v756
          %v827 = vsub.f32 %v500, %v756
          %v828 = vsub.f32 %v501, %v757
          %v829 = vsub.f32 %v502, %v757
          %v830 = vsub.f32 %v503, %v757
          %v831 = vsub.f32 %v504, %v757
          %v832 = vsub.f32 %v505, %v758
          %v833 = vsub.f32 %v506, %v758
          %v834 = vsub.f32 %v507, %v758
          %v835 = vsub.f32 %v508, %v758
          %v836 = vsub.f32 %v509, %v759
          %v837 = vsub.f32 %v510, %v759
          %v838 = vsub.f32 %v511, %v759
          %v839 = vsub.f32 %v512, %v759
          %v840 = vsub.f32 %v513, %v760
          %v841 = vsub.f32 %v514, %v760
          %v842 = vsub.f32 %v515, %v760
          %v843 = vsub.f32 %v516, %v760
          %v844 = vsub.f32 %v517, %v761
          %v845 = vsub.f32 %v518, %v761
          %v846 = vsub.f32 %v519, %v761
          %v847 = vsub.f32 %v520, %v761
          %v848 = vsub.f32 %v521, %v762
          %v849 = vsub.f32 %v522, %v762
          %v850 = vsub.f32 %v523, %v762
          %v851 = vsub.f32 %v524, %v762
          %v852 = vsub.f32 %v525, %v763
          %v853 = vsub.f32 %v526, %v763
          %v854 = vsub.f32 %v527, %v763
          %v855 = vsub.f32 %v528, %v763
          %v856 = vsub.f32 %v529, %v764
          %v857 = vsub.f32 %v530, %v764
          %v858 = vsub.f32 %v531, %v764
          %v859 = vsub.f32 %v532, %v764
          %v860 = vsub.f32 %v533, %v765
          %v861 = vsub.f32 %v534, %v765
          %v862 = vsub.f32 %v535, %v765
          %v863 = vsub.f32 %v536, %v765
          %v864 = vsub.f32 %v537, %v766
          %v865 = vsub.f32 %v538, %v766
          %v866 = vsub.f32 %v539, %v766
          %v867 = vsub.f32 %v540, %v766
          %v868 = vsub.f32 %v541, %v767
          %v869 = vsub.f32 %v542, %v767
          %v870 = vsub.f32 %v543, %v767
          %v871 = vsub.f32 %v544, %v767
          %v872 = vsub.f32 %v545, %v768
          %v873 = vsub.f32 %v546, %v768
          %v874 = vsub.f32 %v547, %v768
          %v875 = vsub.f32 %v548, %v768
          %v876 = vsub.f32 %v549, %v769
          %v877 = vsub.f32 %v550, %v769
          %v878 = vsub.f32 %v551, %v769
          %v879 = vsub.f32 %v552, %v769
          %v880 = vsub.f32 %v553, %v770
          %v881 = vsub.f32 %v554, %v770
          %v882 = vsub.f32 %v555, %v770
          %v883 = vsub.f32 %v556, %v770
          %v884 = vsub.f32 %v557, %v771
          %v885 = vsub.f32 %v558, %v771
          %v886 = vsub.f32 %v559, %v771
          %v887 = vsub.f32 %v560, %v771
          %v888 = vsub.f32 %v561, %v772
          %v889 = vsub.f32 %v562, %v772
          %v890 = vsub.f32 %v563, %v772
          %v891 = vsub.f32 %v564, %v772
          %v892 = vsub.f32 %v565, %v773
          %v893 = vsub.f32 %v566, %v773
          %v894 = vsub.f32 %v567, %v773
          %v895 = vsub.f32 %v568, %v773
          %v896 = vsub.f32 %v569, %v774
          %v897 = vsub.f32 %v570, %v774
          %v898 = vsub.f32 %v571, %v774
          %v899 = vsub.f32 %v572, %v774
          %v900 = vsub.f32 %v573, %v775
          %v901 = vsub.f32 %v574, %v775
          %v902 = vsub.f32 %v575, %v775
          %v903 = vsub.f32 %v576, %v775
          %v904 = vmul.f32 %v776, %v776
          %v905 = vmul.f32 %v777, %v777
          %v906 = vmul.f32 %v778, %v778
          %v907 = vmul.f32 %v779, %v779
          %v908 = vmul.f32 %v780, %v780
          %v909 = vmul.f32 %v781, %v781
          %v910 = vmul.f32 %v782, %v782
          %v911 = vmul.f32 %v783, %v783
          %v912 = vmul.f32 %v784, %v784
          %v913 = vmul.f32 %v785, %v785
          %v914 = vmul.f32 %v786, %v786
          %v915 = vmul.f32 %v787, %v787
          %v916 = vmul.f32 %v788, %v788
          %v917 = vmul.f32 %v789, %v789
          %v918 = vmul.f32 %v790, %v790
          %v919 = vmul.f32 %v791, %v791
          %v920 = vmul.f32 %v792, %v792
          %v921 = vmul.f32 %v793, %v793
          %v922 = vmul.f32 %v794, %v794
          %v923 = vmul.f32 %v795, %v795
          %v924 = vmul.f32 %v796, %v796
          %v925 = vmul.f32 %v797, %v797
          %v926 = vmul.f32 %v798, %v798
          %v927 = vmul.f32 %v799, %v799
          %v928 = vmul.f32 %v800, %v800
          %v929 = vmul.f32 %v801, %v801
          %v930 = vmul.f32 %v802, %v802
          %v931 = vmul.f32 %v803, %v803
          %v932 = vmul.f32 %v804, %v804
          %v933 = vmul.f32 %v805, %v805
          %v934 = vmul.f32 %v806, %v806
          %v935 = vmul.f32 %v807, %v807
          %v936 = vmul.f32 %v808, %v808
          %v937 = vmul.f32 %v809, %v809
          %v938 = vmul.f32 %v810, %v810
          %v939 = vmul.f32 %v811, %v811
          %v940 = vmul.f32 %v812, %v812
          %v941 = vmul.f32 %v813, %v813
          %v942 = vmul.f32 %v814, %v814
          %v943 = vmul.f32 %v815, %v815
          %v944 = vmul.f32 %v816, %v816
          %v945 = vmul.f32 %v817, %v817
          %v946 = vmul.f32 %v818, %v818
          %v947 = vmul.f32 %v819, %v819
          %v948 = vmul.f32 %v820, %v820
          %v949 = vmul.f32 %v821, %v821
          %v950 = vmul.f32 %v822, %v822
          %v951 = vmul.f32 %v823, %v823
          %v952 = vmul.f32 %v824, %v824
          %v953 = vmul.f32 %v825, %v825
          %v954 = vmul.f32 %v826, %v826
          %v955 = vmul.f32 %v827, %v827
          %v956 = vmul.f32 %v828, %v828
          %v957 = vmul.f32 %v829, %v829
          %v958 = vmul.f32 %v830, %v830
          %v959 = vmul.f32 %v831, %v831
          %v960 = vmul.f32 %v832, %v832
          %v961 = vmul.f32 %v833, %v833
          %v962 = vmul.f32 %v834, %v834
          %v963 = vmul.f32 %v835, %v835
          %v964 = vmul.f32 %v836, %v836
          %v965 = vmul.f32 %v837, %v837
          %v966 = vmul.f32 %v838, %v838
          %v967 = vmul.f32 %v839, %v839
          %v968 = vmul.f32 %v840, %v840
          %v969 = vmul.f32 %v841, %v841
          %v970 = vmul.f32 %v842, %v842
          %v971 = vmul.f32 %v843, %v843
          %v972 = vmul.f32 %v844, %v844
          %v973 = vmul.f32 %v845, %v845
          %v974 = vmul.f32 %v846, %v846
          %v975 = vmul.f32 %v847, %v847
          %v976 = vmul.f32 %v848, %v848
          %v977 = vmul.f32 %v849, %v849
          %v978 = vmul.f32 %v850, %v850
          %v979 = vmul.f32 %v851, %v851
          %v980 = vmul.f32 %v852, %v852
          %v981 = vmul.f32 %v853, %v853
          %v982 = vmul.f32 %v854, %v854
          %v983 = vmul.f32 %v855, %v855
          %v984 = vmul.f32 %v856, %v856
          %v985 = vmul.f32 %v857, %v857
          %v986 = vmul.f32 %v858, %v858
          %v987 = vmul.f32 %v859, %v859
          %v988 = vmul.f32 %v860, %v860
          %v989 = vmul.f32 %v861, %v861
          %v990 = vmul.f32 %v862, %v862
          %v991 = vmul.f32 %v863, %v863
          %v992 = vmul.f32 %v864, %v864
          %v993 = vmul.f32 %v865, %v865
          %v994 = vmul.f32 %v866, %v866
          %v995 = vmul.f32 %v867, %v867
          %v996 = vmul.f32 %v868, %v868
          %v997 = vmul.f32 %v869, %v869
          %v998 = vmul.f32 %v870, %v870
          %v999 = vmul.f32 %v871, %v871
          %v1000 = vmul.f32 %v872, %v872
          %v1001 = vmul.f32 %v873, %v873
          %v1002 = vmul.f32 %v874, %v874
          %v1003 = vmul.f32 %v875, %v875
          %v1004 = vmul.f32 %v876, %v876
          %v1005 = vmul.f32 %v877, %v877
          %v1006 = vmul.f32 %v878, %v878
          %v1007 = vmul.f32 %v879, %v879
          %v1008 = vmul.f32 %v880, %v880
          %v1009 = vmul.f32 %v881, %v881
          %v1010 = vmul.f32 %v882, %v882
          %v1011 = vmul.f32 %v883, %v883
          %v1012 = vmul.f32 %v884, %v884
          %v1013 = vmul.f32 %v885, %v885
          %v1014 = vmul.f32 %v886, %v886
          %v1015 = vmul.f32 %v887, %v887
          %v1016 = vmul.f32 %v888, %v888
          %v1017 = vmul.f32 %v889, %v889
          %v1018 = vmul.f32 %v890, %v890
          %v1019 = vmul.f32 %v891, %v891
          %v1020 = vmul.f32 %v892, %v892
          %v1021 = vmul.f32 %v893, %v893
          %v1022 = vmul.f32 %v894, %v894
          %v1023 = vmul.f32 %v895, %v895
          %v1024 = vmul.f32 %v896, %v896
          %v1025 = vmul.f32 %v897, %v897
          %v1026 = vmul.f32 %v898, %v898
          %v1027 = vmul.f32 %v899, %v899
          %v1028 = vmul.f32 %v900, %v900
          %v1029 = vmul.f32 %v901, %v901
          %v1030 = vmul.f32 %v902, %v902
          %v1031 = vmul.f32 %v903, %v903
          %v1032 = vadd.f32 %v904, %v905
          %v1033 = vadd.f32 %v1032, %v906
          %v1034 = vadd.f32 %v1033, %v907
          %1035 = vadd.xlane.f32.xlu0 %v1034
          %v1036 = vpop.xlane.xlu0 %1035
          %v1037 = vadd.f32 %v908, %v909
          %v1038 = vadd.f32 %v1037, %v910
          %v1039 = vadd.f32 %v1038, %v911
          %1040 = vadd.xlane.f32.xlu0 %v1039
          %v1041 = vpop.xlane.xlu0 %1040
          %v1042 = vadd.f32 %v912, %v913
          %v1043 = vadd.f32 %v1042, %v914
          %v1044 = vadd.f32 %v1043, %v915
          %1045 = vadd.xlane.f32.xlu0 %v1044
          %v1046 = vpop.xlane.xlu0 %1045
          %v1047 = vadd.f32 %v916, %v917
          %v1048 = vadd.f32 %v1047, %v918
          %v1049 = vadd.f32 %v1048, %v919
          %1050 = vadd.xlane.f32.xlu0 %v1049
          %v1051 = vpop.xlane.xlu0 %1050
          %v1052 = vadd.f32 %v920, %v921
          %v1053 = vadd.f32 %v1052, %v922
          %v1054 = vadd.f32 %v1053, %v923
          %1055 = vadd.xlane.f32.xlu0 %v1054
          %v1056 = vpop.xlane.xlu0 %1055
          %v1057 = vadd.f32 %v924, %v925
          %v1058 = vadd.f32 %v1057, %v926
          %v1059 = vadd.f32 %v1058, %v927
          %1060 = vadd.xlane.f32.xlu0 %v1059
          %v1061 = vpop.xlane.xlu0 %1060
          %v1062 = vadd.f32 %v928, %v929
          %v1063 = vadd.f32 %v1062, %v930
          %v1064 = vadd.f32 %v1063, %v931
          %1065 = vadd.xlane.f32.xlu0 %v1064
          %v1066 = vpop.xlane.xlu0 %1065
          %v1067 = vadd.f32 %v932, %v933
          %v1068 = vadd.f32 %v1067, %v934
          %v1069 = vadd.f32 %v1068, %v935
          %1070 = vadd.xlane.f32.xlu0 %v1069
          %v1071 = vpop.xlane.xlu0 %1070
          %v1072 = vadd.f32 %v936, %v937
          %v1073 = vadd.f32 %v1072, %v938
          %v1074 = vadd.f32 %v1073, %v939
          %1075 = vadd.xlane.f32.xlu0 %v1074
          %v1076 = vpop.xlane.xlu0 %1075
          %v1077 = vadd.f32 %v940, %v941
          %v1078 = vadd.f32 %v1077, %v942
          %v1079 = vadd.f32 %v1078, %v943
          %1080 = vadd.xlane.f32.xlu0 %v1079
          %v1081 = vpop.xlane.xlu0 %1080
          %v1082 = vadd.f32 %v944, %v945
          %v1083 = vadd.f32 %v1082, %v946
          %v1084 = vadd.f32 %v1083, %v947
          %1085 = vadd.xlane.f32.xlu0 %v1084
          %v1086 = vpop.xlane.xlu0 %1085
          %v1087 = vadd.f32 %v948, %v949
          %v1088 = vadd.f32 %v1087, %v950
          %v1089 = vadd.f32 %v1088, %v951
          %1090 = vadd.xlane.f32.xlu0 %v1089
          %v1091 = vpop.xlane.xlu0 %1090
          %v1092 = vadd.f32 %v952, %v953
          %v1093 = vadd.f32 %v1092, %v954
          %v1094 = vadd.f32 %v1093, %v955
          %1095 = vadd.xlane.f32.xlu0 %v1094
          %v1096 = vpop.xlane.xlu0 %1095
          %v1097 = vadd.f32 %v956, %v957
          %v1098 = vadd.f32 %v1097, %v958
          %v1099 = vadd.f32 %v1098, %v959
          %1100 = vadd.xlane.f32.xlu0 %v1099
          %v1101 = vpop.xlane.xlu0 %1100
          %v1102 = vadd.f32 %v960, %v961
          %v1103 = vadd.f32 %v1102, %v962
          %v1104 = vadd.f32 %v1103, %v963
          %1105 = vadd.xlane.f32.xlu0 %v1104
          %v1106 = vpop.xlane.xlu0 %1105
          %v1107 = vadd.f32 %v964, %v965
          %v1108 = vadd.f32 %v1107, %v966
          %v1109 = vadd.f32 %v1108, %v967
          %1110 = vadd.xlane.f32.xlu0 %v1109
          %v1111 = vpop.xlane.xlu0 %1110
          %v1112 = vadd.f32 %v968, %v969
          %v1113 = vadd.f32 %v1112, %v970
          %v1114 = vadd.f32 %v1113, %v971
          %1115 = vadd.xlane.f32.xlu0 %v1114
          %v1116 = vpop.xlane.xlu0 %1115
          %v1117 = vadd.f32 %v972, %v973
          %v1118 = vadd.f32 %v1117, %v974
          %v1119 = vadd.f32 %v1118, %v975
          %1120 = vadd.xlane.f32.xlu0 %v1119
          %v1121 = vpop.xlane.xlu0 %1120
          %v1122 = vadd.f32 %v976, %v977
          %v1123 = vadd.f32 %v1122, %v978
          %v1124 = vadd.f32 %v1123, %v979
          %1125 = vadd.xlane.f32.xlu0 %v1124
          %v1126 = vpop.xlane.xlu0 %1125
          %v1127 = vadd.f32 %v980, %v981
          %v1128 = vadd.f32 %v1127, %v982
          %v1129 = vadd.f32 %v1128, %v983
          %1130 = vadd.xlane.f32.xlu0 %v1129
          %v1131 = vpop.xlane.xlu0 %1130
          %v1132 = vadd.f32 %v984, %v985
          %v1133 = vadd.f32 %v1132, %v986
          %v1134 = vadd.f32 %v1133, %v987
          %1135 = vadd.xlane.f32.xlu0 %v1134
          %v1136 = vpop.xlane.xlu0 %1135
          %v1137 = vadd.f32 %v988, %v989
          %v1138 = vadd.f32 %v1137, %v990
          %v1139 = vadd.f32 %v1138, %v991
          %1140 = vadd.xlane.f32.xlu0 %v1139
          %v1141 = vpop.xlane.xlu0 %1140
          %v1142 = vadd.f32 %v992, %v993
          %v1143 = vadd.f32 %v1142, %v994
          %v1144 = vadd.f32 %v1143, %v995
          %1145 = vadd.xlane.f32.xlu0 %v1144
          %v1146 = vpop.xlane.xlu0 %1145
          %v1147 = vadd.f32 %v996, %v997
          %v1148 = vadd.f32 %v1147, %v998
          %v1149 = vadd.f32 %v1148, %v999
          %1150 = vadd.xlane.f32.xlu0 %v1149
          %v1151 = vpop.xlane.xlu0 %1150
          %v1152 = vadd.f32 %v1000, %v1001
          %v1153 = vadd.f32 %v1152, %v1002
          %v1154 = vadd.f32 %v1153, %v1003
          %1155 = vadd.xlane.f32.xlu0 %v1154
          %v1156 = vpop.xlane.xlu0 %1155
          %v1157 = vadd.f32 %v1004, %v1005
          %v1158 = vadd.f32 %v1157, %v1006
          %v1159 = vadd.f32 %v1158, %v1007
          %1160 = vadd.xlane.f32.xlu0 %v1159
          %v1161 = vpop.xlane.xlu0 %1160
          %v1162 = vadd.f32 %v1008, %v1009
          %v1163 = vadd.f32 %v1162, %v1010
          %v1164 = vadd.f32 %v1163, %v1011
          %1165 = vadd.xlane.f32.xlu0 %v1164
          %v1166 = vpop.xlane.xlu0 %1165
          %v1167 = vadd.f32 %v1012, %v1013
          %v1168 = vadd.f32 %v1167, %v1014
          %v1169 = vadd.f32 %v1168, %v1015
          %1170 = vadd.xlane.f32.xlu0 %v1169
          %v1171 = vpop.xlane.xlu0 %1170
          %v1172 = vadd.f32 %v1016, %v1017
          %v1173 = vadd.f32 %v1172, %v1018
          %v1174 = vadd.f32 %v1173, %v1019
          %1175 = vadd.xlane.f32.xlu0 %v1174
          %v1176 = vpop.xlane.xlu0 %1175
          %v1177 = vadd.f32 %v1020, %v1021
          %v1178 = vadd.f32 %v1177, %v1022
          %v1179 = vadd.f32 %v1178, %v1023
          %1180 = vadd.xlane.f32.xlu0 %v1179
          %v1181 = vpop.xlane.xlu0 %1180
          %v1182 = vadd.f32 %v1024, %v1025
          %v1183 = vadd.f32 %v1182, %v1026
          %v1184 = vadd.f32 %v1183, %v1027
          %1185 = vadd.xlane.f32.xlu0 %v1184
          %v1186 = vpop.xlane.xlu0 %1185
          %v1187 = vadd.f32 %v1028, %v1029
          %v1188 = vadd.f32 %v1187, %v1030
          %v1189 = vadd.f32 %v1188, %v1031
          %1190 = vadd.xlane.f32.xlu0 %v1189
          %v1191 = vpop.xlane.xlu0 %1190
          %v1192 = vmul.f32 %v1036, %v743
          %v1193 = vmul.f32 %v1041, %v743
          %v1194 = vmul.f32 %v1046, %v743
          %v1195 = vmul.f32 %v1051, %v743
          %v1196 = vmul.f32 %v1056, %v743
          %v1197 = vmul.f32 %v1061, %v743
          %v1198 = vmul.f32 %v1066, %v743
          %v1199 = vmul.f32 %v1071, %v743
          %v1200 = vmul.f32 %v1076, %v743
          %v1201 = vmul.f32 %v1081, %v743
          %v1202 = vmul.f32 %v1086, %v743
          %v1203 = vmul.f32 %v1091, %v743
          %v1204 = vmul.f32 %v1096, %v743
          %v1205 = vmul.f32 %v1101, %v743
          %v1206 = vmul.f32 %v1106, %v743
          %v1207 = vmul.f32 %v1111, %v743
          %v1208 = vmul.f32 %v1116, %v743
          %v1209 = vmul.f32 %v1121, %v743
          %v1210 = vmul.f32 %v1126, %v743
          %v1211 = vmul.f32 %v1131, %v743
          %v1212 = vmul.f32 %v1136, %v743
          %v1213 = vmul.f32 %v1141, %v743
          %v1214 = vmul.f32 %v1146, %v743
          %v1215 = vmul.f32 %v1151, %v743
          %v1216 = vmul.f32 %v1156, %v743
          %v1217 = vmul.f32 %v1161, %v743
          %v1218 = vmul.f32 %v1166, %v743
          %v1219 = vmul.f32 %v1171, %v743
          %v1220 = vmul.f32 %v1176, %v743
          %v1221 = vmul.f32 %v1181, %v743
          %v1222 = vmul.f32 %v1186, %v743
          %v1223 = vmul.f32 %v1191, %v743
          %v1224 = vadd.f32 %v1192, 1e-06
          %v1225 = vadd.f32 %v1193, 1e-06
          %v1226 = vadd.f32 %v1194, 1e-06
          %v1227 = vadd.f32 %v1195, 1e-06
          %v1228 = vadd.f32 %v1196, 1e-06
          %v1229 = vadd.f32 %v1197, 1e-06
          %v1230 = vadd.f32 %v1198, 1e-06
          %v1231 = vadd.f32 %v1199, 1e-06
          %v1232 = vadd.f32 %v1200, 1e-06
          %v1233 = vadd.f32 %v1201, 1e-06
          %v1234 = vadd.f32 %v1202, 1e-06
          %v1235 = vadd.f32 %v1203, 1e-06
          %v1236 = vadd.f32 %v1204, 1e-06
          %v1237 = vadd.f32 %v1205, 1e-06
          %v1238 = vadd.f32 %v1206, 1e-06
          %v1239 = vadd.f32 %v1207, 1e-06
          %v1240 = vadd.f32 %v1208, 1e-06
          %v1241 = vadd.f32 %v1209, 1e-06
          %v1242 = vadd.f32 %v1210, 1e-06
          %v1243 = vadd.f32 %v1211, 1e-06
          %v1244 = vadd.f32 %v1212, 1e-06
          %v1245 = vadd.f32 %v1213, 1e-06
          %v1246 = vadd.f32 %v1214, 1e-06
          %v1247 = vadd.f32 %v1215, 1e-06
          %v1248 = vadd.f32 %v1216, 1e-06
          %v1249 = vadd.f32 %v1217, 1e-06
          %v1250 = vadd.f32 %v1218, 1e-06
          %v1251 = vadd.f32 %v1219, 1e-06
          %v1252 = vadd.f32 %v1220, 1e-06
          %v1253 = vadd.f32 %v1221, 1e-06
          %v1254 = vadd.f32 %v1222, 1e-06
          %v1255 = vadd.f32 %v1223, 1e-06
          %v1256 = vrsqrt.pop %v1224
          %v1257 = vmul.f32 %v1256, %v1224
          %v1258 = vmul.f32 %v1257, %v1256
          %v1259 = vmul.f32 0.5, %v1258
          %v1260 = vsub.f32 1.5, %v1259
          %v1261 = vmul.f32 %v1256, %v1260
          %vm1262 = vweird.f32 %v1224
          %vm1263 = vweird.f32 %v1256
          %vm1264 = vmor %vm1262, %vm1263
          %v1265 = vsel %vm1264, %v1256, %v1261
          %v1266 = vrsqrt.pop %v1225
          %v1267 = vmul.f32 %v1266, %v1225
          %v1268 = vmul.f32 %v1267, %v1266
          %v1269 = vmul.f32 0.5, %v1268
          %v1270 = vsub.f32 1.5, %v1269
          %v1271 = vmul.f32 %v1266, %v1270
          %vm1272 = vweird.f32 %v1225
          %vm1273 = vweird.f32 %v1266
          %vm1274 = vmor %vm1272, %vm1273
          %v1275 = vsel %vm1274, %v1266, %v1271
          %v1276 = vrsqrt.pop %v1226
          %v1277 = vmul.f32 %v1276, %v1226
          %v1278 = vmul.f32 %v1277, %v1276
          %v1279 = vmul.f32 0.5, %v1278
          %v1280 = vsub.f32 1.5, %v1279
          %v1281 = vmul.f32 %v1276, %v1280
          %vm1282 = vweird.f32 %v1226
          %vm1283 = vweird.f32 %v1276
          %vm1284 = vmor %vm1282, %vm1283
          %v1285 = vsel %vm1284, %v1276, %v1281
          %v1286 = vrsqrt.pop %v1227
          %v1287 = vmul.f32 %v1286, %v1227
          %v1288 = vmul.f32 %v1287, %v1286
          %v1289 = vmul.f32 0.5, %v1288
          %v1290 = vsub.f32 1.5, %v1289
          %v1291 = vmul.f32 %v1286, %v1290
          %vm1292 = vweird.f32 %v1227
          %vm1293 = vweird.f32 %v1286
          %vm1294 = vmor %vm1292, %vm1293
          %v1295 = vsel %vm1294, %v1286, %v1291
          %v1296 = vrsqrt.pop %v1228
          %v1297 = vmul.f32 %v1296, %v1228
          %v1298 = vmul.f32 %v1297, %v1296
          %v1299 = vmul.f32 0.5, %v1298
          %v1300 = vsub.f32 1.5, %v1299
          %v1301 = vmul.f32 %v1296, %v1300
          %vm1302 = vweird.f32 %v1228
          %vm1303 = vweird.f32 %v1296
          %vm1304 = vmor %vm1302, %vm1303
          %v1305 = vsel %vm1304, %v1296, %v1301
          %v1306 = vrsqrt.pop %v1229
          %v1307 = vmul.f32 %v1306, %v1229
          %v1308 = vmul.f32 %v1307, %v1306
          %v1309 = vmul.f32 0.5, %v1308
          %v1310 = vsub.f32 1.5, %v1309
          %v1311 = vmul.f32 %v1306, %v1310
          %vm1312 = vweird.f32 %v1229
          %vm1313 = vweird.f32 %v1306
          %vm1314 = vmor %vm1312, %vm1313
          %v1315 = vsel %vm1314, %v1306, %v1311
          %v1316 = vrsqrt.pop %v1230
          %v1317 = vmul.f32 %v1316, %v1230
          %v1318 = vmul.f32 %v1317, %v1316
          %v1319 = vmul.f32 0.5, %v1318
          %v1320 = vsub.f32 1.5, %v1319
          %v1321 = vmul.f32 %v1316, %v1320
          %vm1322 = vweird.f32 %v1230
          %vm1323 = vweird.f32 %v1316
          %vm1324 = vmor %vm1322, %vm1323
          %v1325 = vsel %vm1324, %v1316, %v1321
          %v1326 = vrsqrt.pop %v1231
          %v1327 = vmul.f32 %v1326, %v1231
          %v1328 = vmul.f32 %v1327, %v1326
          %v1329 = vmul.f32 0.5, %v1328
          %v1330 = vsub.f32 1.5, %v1329
          %v1331 = vmul.f32 %v1326, %v1330
          %vm1332 = vweird.f32 %v1231
          %vm1333 = vweird.f32 %v1326
          %vm1334 = vmor %vm1332, %vm1333
          %v1335 = vsel %vm1334, %v1326, %v1331
          %v1336 = vrsqrt.pop %v1232
          %v1337 = vmul.f32 %v1336, %v1232
          %v1338 = vmul.f32 %v1337, %v1336
          %v1339 = vmul.f32 0.5, %v1338
          %v1340 = vsub.f32 1.5, %v1339
          %v1341 = vmul.f32 %v1336, %v1340
          %vm1342 = vweird.f32 %v1232
          %vm1343 = vweird.f32 %v1336
          %vm1344 = vmor %vm1342, %vm1343
          %v1345 = vsel %vm1344, %v1336, %v1341
          %v1346 = vrsqrt.pop %v1233
          %v1347 = vmul.f32 %v1346, %v1233
          %v1348 = vmul.f32 %v1347, %v1346
          %v1349 = vmul.f32 0.5, %v1348
          %v1350 = vsub.f32 1.5, %v1349
          %v1351 = vmul.f32 %v1346, %v1350
          %vm1352 = vweird.f32 %v1233
          %vm1353 = vweird.f32 %v1346
          %vm1354 = vmor %vm1352, %vm1353
          %v1355 = vsel %vm1354, %v1346, %v1351
          %v1356 = vrsqrt.pop %v1234
          %v1357 = vmul.f32 %v1356, %v1234
          %v1358 = vmul.f32 %v1357, %v1356
          %v1359 = vmul.f32 0.5, %v1358
          %v1360 = vsub.f32 1.5, %v1359
          %v1361 = vmul.f32 %v1356, %v1360
          %vm1362 = vweird.f32 %v1234
          %vm1363 = vweird.f32 %v1356
          %vm1364 = vmor %vm1362, %vm1363
          %v1365 = vsel %vm1364, %v1356, %v1361
          %v1366 = vrsqrt.pop %v1235
          %v1367 = vmul.f32 %v1366, %v1235
          %v1368 = vmul.f32 %v1367, %v1366
          %v1369 = vmul.f32 0.5, %v1368
          %v1370 = vsub.f32 1.5, %v1369
          %v1371 = vmul.f32 %v1366, %v1370
          %vm1372 = vweird.f32 %v1235
          %vm1373 = vweird.f32 %v1366
          %vm1374 = vmor %vm1372, %vm1373
          %v1375 = vsel %vm1374, %v1366, %v1371
          %v1376 = vrsqrt.pop %v1236
          %v1377 = vmul.f32 %v1376, %v1236
          %v1378 = vmul.f32 %v1377, %v1376
          %v1379 = vmul.f32 0.5, %v1378
          %v1380 = vsub.f32 1.5, %v1379
          %v1381 = vmul.f32 %v1376, %v1380
          %vm1382 = vweird.f32 %v1236
          %vm1383 = vweird.f32 %v1376
          %vm1384 = vmor %vm1382, %vm1383
          %v1385 = vsel %vm1384, %v1376, %v1381
          %v1386 = vrsqrt.pop %v1237
          %v1387 = vmul.f32 %v1386, %v1237
          %v1388 = vmul.f32 %v1387, %v1386
          %v1389 = vmul.f32 0.5, %v1388
          %v1390 = vsub.f32 1.5, %v1389
          %v1391 = vmul.f32 %v1386, %v1390
          %vm1392 = vweird.f32 %v1237
          %vm1393 = vweird.f32 %v1386
          %vm1394 = vmor %vm1392, %vm1393
          %v1395 = vsel %vm1394, %v1386, %v1391
          %v1396 = vrsqrt.pop %v1238
          %v1397 = vmul.f32 %v1396, %v1238
          %v1398 = vmul.f32 %v1397, %v1396
          %v1399 = vmul.f32 0.5, %v1398
          %v1400 = vsub.f32 1.5, %v1399
          %v1401 = vmul.f32 %v1396, %v1400
          %vm1402 = vweird.f32 %v1238
          %vm1403 = vweird.f32 %v1396
          %vm1404 = vmor %vm1402, %vm1403
          %v1405 = vsel %vm1404, %v1396, %v1401
          %v1406 = vrsqrt.pop %v1239
          %v1407 = vmul.f32 %v1406, %v1239
          %v1408 = vmul.f32 %v1407, %v1406
          %v1409 = vmul.f32 0.5, %v1408
          %v1410 = vsub.f32 1.5, %v1409
          %v1411 = vmul.f32 %v1406, %v1410
          %vm1412 = vweird.f32 %v1239
          %vm1413 = vweird.f32 %v1406
          %vm1414 = vmor %vm1412, %vm1413
          %v1415 = vsel %vm1414, %v1406, %v1411
          %v1416 = vrsqrt.pop %v1240
          %v1417 = vmul.f32 %v1416, %v1240
          %v1418 = vmul.f32 %v1417, %v1416
          %v1419 = vmul.f32 0.5, %v1418
          %v1420 = vsub.f32 1.5, %v1419
          %v1421 = vmul.f32 %v1416, %v1420
          %vm1422 = vweird.f32 %v1240
          %vm1423 = vweird.f32 %v1416
          %vm1424 = vmor %vm1422, %vm1423
          %v1425 = vsel %vm1424, %v1416, %v1421
          %v1426 = vrsqrt.pop %v1241
          %v1427 = vmul.f32 %v1426, %v1241
          %v1428 = vmul.f32 %v1427, %v1426
          %v1429 = vmul.f32 0.5, %v1428
          %v1430 = vsub.f32 1.5, %v1429
          %v1431 = vmul.f32 %v1426, %v1430
          %vm1432 = vweird.f32 %v1241
          %vm1433 = vweird.f32 %v1426
          %vm1434 = vmor %vm1432, %vm1433
          %v1435 = vsel %vm1434, %v1426, %v1431
          %v1436 = vrsqrt.pop %v1242
          %v1437 = vmul.f32 %v1436, %v1242
          %v1438 = vmul.f32 %v1437, %v1436
          %v1439 = vmul.f32 0.5, %v1438
          %v1440 = vsub.f32 1.5, %v1439
          %v1441 = vmul.f32 %v1436, %v1440
          %vm1442 = vweird.f32 %v1242
          %vm1443 = vweird.f32 %v1436
          %vm1444 = vmor %vm1442, %vm1443
          %v1445 = vsel %vm1444, %v1436, %v1441
          %v1446 = vrsqrt.pop %v1243
          %v1447 = vmul.f32 %v1446, %v1243
          %v1448 = vmul.f32 %v1447, %v1446
          %v1449 = vmul.f32 0.5, %v1448
          %v1450 = vsub.f32 1.5, %v1449
          %v1451 = vmul.f32 %v1446, %v1450
          %vm1452 = vweird.f32 %v1243
          %vm1453 = vweird.f32 %v1446
          %vm1454 = vmor %vm1452, %vm1453
          %v1455 = vsel %vm1454, %v1446, %v1451
          %v1456 = vrsqrt.pop %v1244
          %v1457 = vmul.f32 %v1456, %v1244
          %v1458 = vmul.f32 %v1457, %v1456
          %v1459 = vmul.f32 0.5, %v1458
          %v1460 = vsub.f32 1.5, %v1459
          %v1461 = vmul.f32 %v1456, %v1460
          %vm1462 = vweird.f32 %v1244
          %vm1463 = vweird.f32 %v1456
          %vm1464 = vmor %vm1462, %vm1463
          %v1465 = vsel %vm1464, %v1456, %v1461
          %v1466 = vrsqrt.pop %v1245
          %v1467 = vmul.f32 %v1466, %v1245
          %v1468 = vmul.f32 %v1467, %v1466
          %v1469 = vmul.f32 0.5, %v1468
          %v1470 = vsub.f32 1.5, %v1469
          %v1471 = vmul.f32 %v1466, %v1470
          %vm1472 = vweird.f32 %v1245
          %vm1473 = vweird.f32 %v1466
          %vm1474 = vmor %vm1472, %vm1473
          %v1475 = vsel %vm1474, %v1466, %v1471
          %v1476 = vrsqrt.pop %v1246
          %v1477 = vmul.f32 %v1476, %v1246
          %v1478 = vmul.f32 %v1477, %v1476
          %v1479 = vmul.f32 0.5, %v1478
          %v1480 = vsub.f32 1.5, %v1479
          %v1481 = vmul.f32 %v1476, %v1480
          %vm1482 = vweird.f32 %v1246
          %vm1483 = vweird.f32 %v1476
          %vm1484 = vmor %vm1482, %vm1483
          %v1485 = vsel %vm1484, %v1476, %v1481
          %v1486 = vrsqrt.pop %v1247
          %v1487 = vmul.f32 %v1486, %v1247
          %v1488 = vmul.f32 %v1487, %v1486
          %v1489 = vmul.f32 0.5, %v1488
          %v1490 = vsub.f32 1.5, %v1489
          %v1491 = vmul.f32 %v1486, %v1490
          %vm1492 = vweird.f32 %v1247
          %vm1493 = vweird.f32 %v1486
          %vm1494 = vmor %vm1492, %vm1493
          %v1495 = vsel %vm1494, %v1486, %v1491
          %v1496 = vrsqrt.pop %v1248
          %v1497 = vmul.f32 %v1496, %v1248
          %v1498 = vmul.f32 %v1497, %v1496
          %v1499 = vmul.f32 0.5, %v1498
          %v1500 = vsub.f32 1.5, %v1499
          %v1501 = vmul.f32 %v1496, %v1500
          %vm1502 = vweird.f32 %v1248
          %vm1503 = vweird.f32 %v1496
          %vm1504 = vmor %vm1502, %vm1503
          %v1505 = vsel %vm1504, %v1496, %v1501
          %v1506 = vrsqrt.pop %v1249
          %v1507 = vmul.f32 %v1506, %v1249
          %v1508 = vmul.f32 %v1507, %v1506
          %v1509 = vmul.f32 0.5, %v1508
          %v1510 = vsub.f32 1.5, %v1509
          %v1511 = vmul.f32 %v1506, %v1510
          %vm1512 = vweird.f32 %v1249
          %vm1513 = vweird.f32 %v1506
          %vm1514 = vmor %vm1512, %vm1513
          %v1515 = vsel %vm1514, %v1506, %v1511
          %v1516 = vrsqrt.pop %v1250
          %v1517 = vmul.f32 %v1516, %v1250
          %v1518 = vmul.f32 %v1517, %v1516
          %v1519 = vmul.f32 0.5, %v1518
          %v1520 = vsub.f32 1.5, %v1519
          %v1521 = vmul.f32 %v1516, %v1520
          %vm1522 = vweird.f32 %v1250
          %vm1523 = vweird.f32 %v1516
          %vm1524 = vmor %vm1522, %vm1523
          %v1525 = vsel %vm1524, %v1516, %v1521
          %v1526 = vrsqrt.pop %v1251
          %v1527 = vmul.f32 %v1526, %v1251
          %v1528 = vmul.f32 %v1527, %v1526
          %v1529 = vmul.f32 0.5, %v1528
          %v1530 = vsub.f32 1.5, %v1529
          %v1531 = vmul.f32 %v1526, %v1530
          %vm1532 = vweird.f32 %v1251
          %vm1533 = vweird.f32 %v1526
          %vm1534 = vmor %vm1532, %vm1533
          %v1535 = vsel %vm1534, %v1526, %v1531
          %v1536 = vrsqrt.pop %v1252
          %v1537 = vmul.f32 %v1536, %v1252
          %v1538 = vmul.f32 %v1537, %v1536
          %v1539 = vmul.f32 0.5, %v1538
          %v1540 = vsub.f32 1.5, %v1539
          %v1541 = vmul.f32 %v1536, %v1540
          %vm1542 = vweird.f32 %v1252
          %vm1543 = vweird.f32 %v1536
          %vm1544 = vmor %vm1542, %vm1543
          %v1545 = vsel %vm1544, %v1536, %v1541
          %v1546 = vrsqrt.pop %v1253
          %v1547 = vmul.f32 %v1546, %v1253
          %v1548 = vmul.f32 %v1547, %v1546
          %v1549 = vmul.f32 0.5, %v1548
          %v1550 = vsub.f32 1.5, %v1549
          %v1551 = vmul.f32 %v1546, %v1550
          %vm1552 = vweird.f32 %v1253
          %vm1553 = vweird.f32 %v1546
          %vm1554 = vmor %vm1552, %vm1553
          %v1555 = vsel %vm1554, %v1546, %v1551
          %v1556 = vrsqrt.pop %v1254
          %v1557 = vmul.f32 %v1556, %v1254
          %v1558 = vmul.f32 %v1557, %v1556
          %v1559 = vmul.f32 0.5, %v1558
          %v1560 = vsub.f32 1.5, %v1559
          %v1561 = vmul.f32 %v1556, %v1560
          %vm1562 = vweird.f32 %v1254
          %vm1563 = vweird.f32 %v1556
          %vm1564 = vmor %vm1562, %vm1563
          %v1565 = vsel %vm1564, %v1556, %v1561
          %v1566 = vrsqrt.pop %v1255
          %v1567 = vmul.f32 %v1566, %v1255
          %v1568 = vmul.f32 %v1567, %v1566
          %v1569 = vmul.f32 0.5, %v1568
          %v1570 = vsub.f32 1.5, %v1569
          %v1571 = vmul.f32 %v1566, %v1570
          %vm1572 = vweird.f32 %v1255
          %vm1573 = vweird.f32 %v1566
          %vm1574 = vmor %vm1572, %vm1573
          %v1575 = vsel %vm1574, %v1566, %v1571
          %v1576 = vmul.f32 %v776, %v1265
          %v1577 = vmul.f32 %v777, %v1265
          %v1578 = vmul.f32 %v778, %v1265
          %v1579 = vmul.f32 %v779, %v1265
          %v1580 = vmul.f32 %v780, %v1275
          %v1581 = vmul.f32 %v781, %v1275
          %v1582 = vmul.f32 %v782, %v1275
          %v1583 = vmul.f32 %v783, %v1275
          %v1584 = vmul.f32 %v784, %v1285
          %v1585 = vmul.f32 %v785, %v1285
          %v1586 = vmul.f32 %v786, %v1285
          %v1587 = vmul.f32 %v787, %v1285
          %v1588 = vmul.f32 %v788, %v1295
          %v1589 = vmul.f32 %v789, %v1295
          %v1590 = vmul.f32 %v790, %v1295
          %v1591 = vmul.f32 %v791, %v1295
          %v1592 = vmul.f32 %v792, %v1305
          %v1593 = vmul.f32 %v793, %v1305
          %v1594 = vmul.f32 %v794, %v1305
          %v1595 = vmul.f32 %v795, %v1305
          %v1596 = vmul.f32 %v796, %v1315
          %v1597 = vmul.f32 %v797, %v1315
          %v1598 = vmul.f32 %v798, %v1315
          %v1599 = vmul.f32 %v799, %v1315
          %v1600 = vmul.f32 %v800, %v1325
          %v1601 = vmul.f32 %v801, %v1325
          %v1602 = vmul.f32 %v802, %v1325
          %v1603 = vmul.f32 %v803, %v1325
          %v1604 = vmul.f32 %v804, %v1335
          %v1605 = vmul.f32 %v805, %v1335
          %v1606 = vmul.f32 %v806, %v1335
          %v1607 = vmul.f32 %v807, %v1335
          %v1608 = vmul.f32 %v808, %v1345
          %v1609 = vmul.f32 %v809, %v1345
          %v1610 = vmul.f32 %v810, %v1345
          %v1611 = vmul.f32 %v811, %v1345
          %v1612 = vmul.f32 %v812, %v1355
          %v1613 = vmul.f32 %v813, %v1355
          %v1614 = vmul.f32 %v814, %v1355
          %v1615 = vmul.f32 %v815, %v1355
          %v1616 = vmul.f32 %v816, %v1365
          %v1617 = vmul.f32 %v817, %v1365
          %v1618 = vmul.f32 %v818, %v1365
          %v1619 = vmul.f32 %v819, %v1365
          %v1620 = vmul.f32 %v820, %v1375
          %v1621 = vmul.f32 %v821, %v1375
          %v1622 = vmul.f32 %v822, %v1375
          %v1623 = vmul.f32 %v823, %v1375
          %v1624 = vmul.f32 %v824, %v1385
          %v1625 = vmul.f32 %v825, %v1385
          %v1626 = vmul.f32 %v826, %v1385
          %v1627 = vmul.f32 %v827, %v1385
          %v1628 = vmul.f32 %v828, %v1395
          %v1629 = vmul.f32 %v829, %v1395
          %v1630 = vmul.f32 %v830, %v1395
          %v1631 = vmul.f32 %v831, %v1395
          %v1632 = vmul.f32 %v832, %v1405
          %v1633 = vmul.f32 %v833, %v1405
          %v1634 = vmul.f32 %v834, %v1405
          %v1635 = vmul.f32 %v835, %v1405
          %v1636 = vmul.f32 %v836, %v1415
          %v1637 = vmul.f32 %v837, %v1415
          %v1638 = vmul.f32 %v838, %v1415
          %v1639 = vmul.f32 %v839, %v1415
          %v1640 = vmul.f32 %v840, %v1425
          %v1641 = vmul.f32 %v841, %v1425
          %v1642 = vmul.f32 %v842, %v1425
          %v1643 = vmul.f32 %v843, %v1425
          %v1644 = vmul.f32 %v844, %v1435
          %v1645 = vmul.f32 %v845, %v1435
          %v1646 = vmul.f32 %v846, %v1435
          %v1647 = vmul.f32 %v847, %v1435
          %v1648 = vmul.f32 %v848, %v1445
          %v1649 = vmul.f32 %v849, %v1445
          %v1650 = vmul.f32 %v850, %v1445
          %v1651 = vmul.f32 %v851, %v1445
          %v1652 = vmul.f32 %v852, %v1455
          %v1653 = vmul.f32 %v853, %v1455
          %v1654 = vmul.f32 %v854, %v1455
          %v1655 = vmul.f32 %v855, %v1455
          %v1656 = vmul.f32 %v856, %v1465
          %v1657 = vmul.f32 %v857, %v1465
          %v1658 = vmul.f32 %v858, %v1465
          %v1659 = vmul.f32 %v859, %v1465
          %v1660 = vmul.f32 %v860, %v1475
          %v1661 = vmul.f32 %v861, %v1475
          %v1662 = vmul.f32 %v862, %v1475
          %v1663 = vmul.f32 %v863, %v1475
          %v1664 = vmul.f32 %v864, %v1485
          %v1665 = vmul.f32 %v865, %v1485
          %v1666 = vmul.f32 %v866, %v1485
          %v1667 = vmul.f32 %v867, %v1485
          %v1668 = vmul.f32 %v868, %v1495
          %v1669 = vmul.f32 %v869, %v1495
          %v1670 = vmul.f32 %v870, %v1495
          %v1671 = vmul.f32 %v871, %v1495
          %v1672 = vmul.f32 %v872, %v1505
          %v1673 = vmul.f32 %v873, %v1505
          %v1674 = vmul.f32 %v874, %v1505
          %v1675 = vmul.f32 %v875, %v1505
          %v1676 = vmul.f32 %v876, %v1515
          %v1677 = vmul.f32 %v877, %v1515
          %v1678 = vmul.f32 %v878, %v1515
          %v1679 = vmul.f32 %v879, %v1515
          %v1680 = vmul.f32 %v880, %v1525
          %v1681 = vmul.f32 %v881, %v1525
          %v1682 = vmul.f32 %v882, %v1525
          %v1683 = vmul.f32 %v883, %v1525
          %v1684 = vmul.f32 %v884, %v1535
          %v1685 = vmul.f32 %v885, %v1535
          %v1686 = vmul.f32 %v886, %v1535
          %v1687 = vmul.f32 %v887, %v1535
          %v1688 = vmul.f32 %v888, %v1545
          %v1689 = vmul.f32 %v889, %v1545
          %v1690 = vmul.f32 %v890, %v1545
          %v1691 = vmul.f32 %v891, %v1545
          %v1692 = vmul.f32 %v892, %v1555
          %v1693 = vmul.f32 %v893, %v1555
          %v1694 = vmul.f32 %v894, %v1555
          %v1695 = vmul.f32 %v895, %v1555
          %v1696 = vmul.f32 %v896, %v1565
          %v1697 = vmul.f32 %v897, %v1565
          %v1698 = vmul.f32 %v898, %v1565
          %v1699 = vmul.f32 %v899, %v1565
          %v1700 = vmul.f32 %v900, %v1575
          %v1701 = vmul.f32 %v901, %v1575
          %v1702 = vmul.f32 %v902, %v1575
          %v1703 = vmul.f32 %v903, %v1575
          %v1704 = vld [vmem:[#allocation6] sm:$0xf]
          %v1706 = vperm.slane %v1704, 0
          %v1707 = vperm.slane %v1704, 1
          %v1708 = vperm.slane %v1704, 2
          %v1709 = vperm.slane %v1704, 3
          %v1714 = vmul.f32 %v1576, %v1706
          %v1715 = vmul.f32 %v1577, %v1707
          %v1716 = vmul.f32 %v1578, %v1708
          %v1717 = vmul.f32 %v1579, %v1709
          %v1718 = vmul.f32 %v1580, %v1706
          %v1719 = vmul.f32 %v1581, %v1707
          %v1720 = vmul.f32 %v1582, %v1708
          %v1721 = vmul.f32 %v1583, %v1709
          %v1722 = vmul.f32 %v1584, %v1706
          %v1723 = vmul.f32 %v1585, %v1707
          %v1724 = vmul.f32 %v1586, %v1708
          %v1725 = vmul.f32 %v1587, %v1709
          %v1726 = vmul.f32 %v1588, %v1706
          %v1727 = vmul.f32 %v1589, %v1707
          %v1728 = vmul.f32 %v1590, %v1708
          %v1729 = vmul.f32 %v1591, %v1709
          %v1730 = vmul.f32 %v1592, %v1706
          %v1731 = vmul.f32 %v1593, %v1707
          %v1732 = vmul.f32 %v1594, %v1708
          %v1733 = vmul.f32 %v1595, %v1709
          %v1734 = vmul.f32 %v1596, %v1706
          %v1735 = vmul.f32 %v1597, %v1707
          %v1736 = vmul.f32 %v1598, %v1708
          %v1737 = vmul.f32 %v1599, %v1709
          %v1738 = vmul.f32 %v1600, %v1706
          %v1739 = vmul.f32 %v1601, %v1707
          %v1740 = vmul.f32 %v1602, %v1708
          %v1741 = vmul.f32 %v1603, %v1709
          %v1742 = vmul.f32 %v1604, %v1706
          %v1743 = vmul.f32 %v1605, %v1707
          %v1744 = vmul.f32 %v1606, %v1708
          %v1745 = vmul.f32 %v1607, %v1709
          %v1746 = vmul.f32 %v1608, %v1706
          %v1747 = vmul.f32 %v1609, %v1707
          %v1748 = vmul.f32 %v1610, %v1708
          %v1749 = vmul.f32 %v1611, %v1709
          %v1750 = vmul.f32 %v1612, %v1706
          %v1751 = vmul.f32 %v1613, %v1707
          %v1752 = vmul.f32 %v1614, %v1708
          %v1753 = vmul.f32 %v1615, %v1709
          %v1754 = vmul.f32 %v1616, %v1706
          %v1755 = vmul.f32 %v1617, %v1707
          %v1756 = vmul.f32 %v1618, %v1708
          %v1757 = vmul.f32 %v1619, %v1709
          %v1758 = vmul.f32 %v1620, %v1706
          %v1759 = vmul.f32 %v1621, %v1707
          %v1760 = vmul.f32 %v1622, %v1708
          %v1761 = vmul.f32 %v1623, %v1709
          %v1762 = vmul.f32 %v1624, %v1706
          %v1763 = vmul.f32 %v1625, %v1707
          %v1764 = vmul.f32 %v1626, %v1708
          %v1765 = vmul.f32 %v1627, %v1709
          %v1766 = vmul.f32 %v1628, %v1706
          %v1767 = vmul.f32 %v1629, %v1707
          %v1768 = vmul.f32 %v1630, %v1708
          %v1769 = vmul.f32 %v1631, %v1709
          %v1770 = vmul.f32 %v1632, %v1706
          %v1771 = vmul.f32 %v1633, %v1707
          %v1772 = vmul.f32 %v1634, %v1708
          %v1773 = vmul.f32 %v1635, %v1709
          %v1774 = vmul.f32 %v1636, %v1706
          %v1775 = vmul.f32 %v1637, %v1707
          %v1776 = vmul.f32 %v1638, %v1708
          %v1777 = vmul.f32 %v1639, %v1709
          %v1778 = vmul.f32 %v1640, %v1706
          %v1779 = vmul.f32 %v1641, %v1707
          %v1780 = vmul.f32 %v1642, %v1708
          %v1781 = vmul.f32 %v1643, %v1709
          %v1782 = vmul.f32 %v1644, %v1706
          %v1783 = vmul.f32 %v1645, %v1707
          %v1784 = vmul.f32 %v1646, %v1708
          %v1785 = vmul.f32 %v1647, %v1709
          %v1786 = vmul.f32 %v1648, %v1706
          %v1787 = vmul.f32 %v1649, %v1707
          %v1788 = vmul.f32 %v1650, %v1708
          %v1789 = vmul.f32 %v1651, %v1709
          %v1790 = vmul.f32 %v1652, %v1706
          %v1791 = vmul.f32 %v1653, %v1707
          %v1792 = vmul.f32 %v1654, %v1708
          %v1793 = vmul.f32 %v1655, %v1709
          %v1794 = vmul.f32 %v1656, %v1706
          %v1795 = vmul.f32 %v1657, %v1707
          %v1796 = vmul.f32 %v1658, %v1708
          %v1797 = vmul.f32 %v1659, %v1709
          %v1798 = vmul.f32 %v1660, %v1706
          %v1799 = vmul.f32 %v1661, %v1707
          %v1800 = vmul.f32 %v1662, %v1708
          %v1801 = vmul.f32 %v1663, %v1709
          %v1802 = vmul.f32 %v1664, %v1706
          %v1803 = vmul.f32 %v1665, %v1707
          %v1804 = vmul.f32 %v1666, %v1708
          %v1805 = vmul.f32 %v1667, %v1709
          %v1806 = vmul.f32 %v1668, %v1706
          %v1807 = vmul.f32 %v1669, %v1707
          %v1808 = vmul.f32 %v1670, %v1708
          %v1809 = vmul.f32 %v1671, %v1709
          %v1810 = vmul.f32 %v1672, %v1706
          %v1811 = vmul.f32 %v1673, %v1707
          %v1812 = vmul.f32 %v1674, %v1708
          %v1813 = vmul.f32 %v1675, %v1709
          %v1814 = vmul.f32 %v1676, %v1706
          %v1815 = vmul.f32 %v1677, %v1707
          %v1816 = vmul.f32 %v1678, %v1708
          %v1817 = vmul.f32 %v1679, %v1709
          %v1818 = vmul.f32 %v1680, %v1706
          %v1819 = vmul.f32 %v1681, %v1707
          %v1820 = vmul.f32 %v1682, %v1708
          %v1821 = vmul.f32 %v1683, %v1709
          %v1822 = vmul.f32 %v1684, %v1706
          %v1823 = vmul.f32 %v1685, %v1707
          %v1824 = vmul.f32 %v1686, %v1708
          %v1825 = vmul.f32 %v1687, %v1709
          %v1826 = vmul.f32 %v1688, %v1706
          %v1827 = vmul.f32 %v1689, %v1707
          %v1828 = vmul.f32 %v1690, %v1708
          %v1829 = vmul.f32 %v1691, %v1709
          %v1830 = vmul.f32 %v1692, %v1706
          %v1831 = vmul.f32 %v1693, %v1707
          %v1832 = vmul.f32 %v1694, %v1708
          %v1833 = vmul.f32 %v1695, %v1709
          %v1834 = vmul.f32 %v1696, %v1706
          %v1835 = vmul.f32 %v1697, %v1707
          %v1836 = vmul.f32 %v1698, %v1708
          %v1837 = vmul.f32 %v1699, %v1709
          %v1838 = vmul.f32 %v1700, %v1706
          %v1839 = vmul.f32 %v1701, %v1707
          %v1840 = vmul.f32 %v1702, %v1708
          %v1841 = vmul.f32 %v1703, %v1709
          %v1842 = vld [vmem:[#allocation8] sm:$0xf]
          %v1844 = vperm.slane %v1842, 0
          %v1845 = vperm.slane %v1842, 1
          %v1846 = vperm.slane %v1842, 2
          %v1847 = vperm.slane %v1842, 3
          %v1852 = vadd.f32 %v1714, %v1844
          %v1853 = vadd.f32 %v1715, %v1845
          %v1854 = vadd.f32 %v1716, %v1846
          %v1855 = vadd.f32 %v1717, %v1847
          %v1856 = vadd.f32 %v1718, %v1844
          %v1857 = vadd.f32 %v1719, %v1845
          %v1858 = vadd.f32 %v1720, %v1846
          %v1859 = vadd.f32 %v1721, %v1847
          %v1860 = vadd.f32 %v1722, %v1844
          %v1861 = vadd.f32 %v1723, %v1845
          %v1862 = vadd.f32 %v1724, %v1846
          %v1863 = vadd.f32 %v1725, %v1847
          %v1864 = vadd.f32 %v1726, %v1844
          %v1865 = vadd.f32 %v1727, %v1845
          %v1866 = vadd.f32 %v1728, %v1846
          %v1867 = vadd.f32 %v1729, %v1847
          %v1868 = vadd.f32 %v1730, %v1844
          %v1869 = vadd.f32 %v1731, %v1845
          %v1870 = vadd.f32 %v1732, %v1846
          %v1871 = vadd.f32 %v1733, %v1847
          %v1872 = vadd.f32 %v1734, %v1844
          %v1873 = vadd.f32 %v1735, %v1845
          %v1874 = vadd.f32 %v1736, %v1846
          %v1875 = vadd.f32 %v1737, %v1847
          %v1876 = vadd.f32 %v1738, %v1844
          %v1877 = vadd.f32 %v1739, %v1845
          %v1878 = vadd.f32 %v1740, %v1846
          %v1879 = vadd.f32 %v1741, %v1847
          %v1880 = vadd.f32 %v1742, %v1844
          %v1881 = vadd.f32 %v1743, %v1845
          %v1882 = vadd.f32 %v1744, %v1846
          %v1883 = vadd.f32 %v1745, %v1847
          %v1884 = vadd.f32 %v1746, %v1844
          %v1885 = vadd.f32 %v1747, %v1845
          %v1886 = vadd.f32 %v1748, %v1846
          %v1887 = vadd.f32 %v1749, %v1847
          %v1888 = vadd.f32 %v1750, %v1844
          %v1889 = vadd.f32 %v1751, %v1845
          %v1890 = vadd.f32 %v1752, %v1846
          %v1891 = vadd.f32 %v1753, %v1847
          %v1892 = vadd.f32 %v1754, %v1844
          %v1893 = vadd.f32 %v1755, %v1845
          %v1894 = vadd.f32 %v1756, %v1846
          %v1895 = vadd.f32 %v1757, %v1847
          %v1896 = vadd.f32 %v1758, %v1844
          %v1897 = vadd.f32 %v1759, %v1845
          %v1898 = vadd.f32 %v1760, %v1846
          %v1899 = vadd.f32 %v1761, %v1847
          %v1900 = vadd.f32 %v1762, %v1844
          %v1901 = vadd.f32 %v1763, %v1845
          %v1902 = vadd.f32 %v1764, %v1846
          %v1903 = vadd.f32 %v1765, %v1847
          %v1904 = vadd.f32 %v1766, %v1844
          %v1905 = vadd.f32 %v1767, %v1845
          %v1906 = vadd.f32 %v1768, %v1846
          %v1907 = vadd.f32 %v1769, %v1847
          %v1908 = vadd.f32 %v1770, %v1844
          %v1909 = vadd.f32 %v1771, %v1845
          %v1910 = vadd.f32 %v1772, %v1846
          %v1911 = vadd.f32 %v1773, %v1847
          %v1912 = vadd.f32 %v1774, %v1844
          %v1913 = vadd.f32 %v1775, %v1845
          %v1914 = vadd.f32 %v1776, %v1846
          %v1915 = vadd.f32 %v1777, %v1847
          %v1916 = vadd.f32 %v1778, %v1844
          %v1917 = vadd.f32 %v1779, %v1845
          %v1918 = vadd.f32 %v1780, %v1846
          %v1919 = vadd.f32 %v1781, %v1847
          %v1920 = vadd.f32 %v1782, %v1844
          %v1921 = vadd.f32 %v1783, %v1845
          %v1922 = vadd.f32 %v1784, %v1846
          %v1923 = vadd.f32 %v1785, %v1847
          %v1924 = vadd.f32 %v1786, %v1844
          %v1925 = vadd.f32 %v1787, %v1845
          %v1926 = vadd.f32 %v1788, %v1846
          %v1927 = vadd.f32 %v1789, %v1847
          %v1928 = vadd.f32 %v1790, %v1844
          %v1929 = vadd.f32 %v1791, %v1845
          %v1930 = vadd.f32 %v1792, %v1846
          %v1931 = vadd.f32 %v1793, %v1847
          %v1932 = vadd.f32 %v1794, %v1844
          %v1933 = vadd.f32 %v1795, %v1845
          %v1934 = vadd.f32 %v1796, %v1846
          %v1935 = vadd.f32 %v1797, %v1847
          %v1936 = vadd.f32 %v1798, %v1844
          %v1937 = vadd.f32 %v1799, %v1845
          %v1938 = vadd.f32 %v1800, %v1846
          %v1939 = vadd.f32 %v1801, %v1847
          %v1940 = vadd.f32 %v1802, %v1844
          %v1941 = vadd.f32 %v1803, %v1845
          %v1942 = vadd.f32 %v1804, %v1846
          %v1943 = vadd.f32 %v1805, %v1847
          %v1944 = vadd.f32 %v1806, %v1844
          %v1945 = vadd.f32 %v1807, %v1845
          %v1946 = vadd.f32 %v1808, %v1846
          %v1947 = vadd.f32 %v1809, %v1847
          %v1948 = vadd.f32 %v1810, %v1844
          %v1949 = vadd.f32 %v1811, %v1845
          %v1950 = vadd.f32 %v1812, %v1846
          %v1951 = vadd.f32 %v1813, %v1847
          %v1952 = vadd.f32 %v1814, %v1844
          %v1953 = vadd.f32 %v1815, %v1845
          %v1954 = vadd.f32 %v1816, %v1846
          %v1955 = vadd.f32 %v1817, %v1847
          %v1956 = vadd.f32 %v1818, %v1844
          %v1957 = vadd.f32 %v1819, %v1845
          %v1958 = vadd.f32 %v1820, %v1846
          %v1959 = vadd.f32 %v1821, %v1847
          %v1960 = vadd.f32 %v1822, %v1844
          %v1961 = vadd.f32 %v1823, %v1845
          %v1962 = vadd.f32 %v1824, %v1846
          %v1963 = vadd.f32 %v1825, %v1847
          %v1964 = vadd.f32 %v1826, %v1844
          %v1965 = vadd.f32 %v1827, %v1845
          %v1966 = vadd.f32 %v1828, %v1846
          %v1967 = vadd.f32 %v1829, %v1847
          %v1968 = vadd.f32 %v1830, %v1844
          %v1969 = vadd.f32 %v1831, %v1845
          %v1970 = vadd.f32 %v1832, %v1846
          %v1971 = vadd.f32 %v1833, %v1847
          %v1972 = vadd.f32 %v1834, %v1844
          %v1973 = vadd.f32 %v1835, %v1845
          %v1974 = vadd.f32 %v1836, %v1846
          %v1975 = vadd.f32 %v1837, %v1847
          %v1976 = vadd.f32 %v1838, %v1844
          %v1977 = vadd.f32 %v1839, %v1845
          %v1978 = vadd.f32 %v1840, %v1846
          %v1979 = vadd.f32 %v1841, %v1847
          %1980 = vst [vmem:[#allocation2] sm:$0xff] %v1852
          %1981 = vst [vmem:[#allocation2 + $0x8] sm:$0xff] %v1853
          %1982 = vst [vmem:[#allocation2 + $0x10] sm:$0xff] %v1854
          %1983 = vst [vmem:[#allocation2 + $0x18] sm:$0xff] %v1855
          %1984 = vst [vmem:[#allocation2 + $0x20] sm:$0xff] %v1856
          %1985 = vst [vmem:[#allocation2 + $0x28] sm:$0xff] %v1857
          %1986 = vst [vmem:[#allocation2 + $0x30] sm:$0xff] %v1858
          %1987 = vst [vmem:[#allocation2 + $0x38] sm:$0xff] %v1859
          %1988 = vst [vmem:[#allocation2 + $0x40] sm:$0xff] %v1860
          %1989 = vst [vmem:[#allocation2 + $0x48] sm:$0xff] %v1861
          %1990 = vst [vmem:[#allocation2 + $0x50] sm:$0xff] %v1862
          %1991 = vst [vmem:[#allocation2 + $0x58] sm:$0xff] %v1863
          %1992 = vst [vmem:[#allocation2 + $0x60] sm:$0xff] %v1864
          %1993 = vst [vmem:[#allocation2 + $0x68] sm:$0xff] %v1865
          %1994 = vst [vmem:[#allocation2 + $0x70] sm:$0xff] %v1866
          %1995 = vst [vmem:[#allocation2 + $0x78] sm:$0xff] %v1867
          %1996 = vst [vmem:[#allocation2 + $0x80] sm:$0xff] %v1868
          %1997 = vst [vmem:[#allocation2 + $0x88] sm:$0xff] %v1869
          %1998 = vst [vmem:[#allocation2 + $0x90] sm:$0xff] %v1870
          %1999 = vst [vmem:[#allocation2 + $0x98] sm:$0xff] %v1871
          %2000 = vst [vmem:[#allocation2 + $0xa0] sm:$0xff] %v1872
          %2001 = vst [vmem:[#allocation2 + $0xa8] sm:$0xff] %v1873
          %2002 = vst [vmem:[#allocation2 + $0xb0] sm:$0xff] %v1874
          %2003 = vst [vmem:[#allocation2 + $0xb8] sm:$0xff] %v1875
          %2004 = vst [vmem:[#allocation2 + $0xc0] sm:$0xff] %v1876
          %2005 = vst [vmem:[#allocation2 + $0xc8] sm:$0xff] %v1877
          %2006 = vst [vmem:[#allocation2 + $0xd0] sm:$0xff] %v1878
          %2007 = vst [vmem:[#allocation2 + $0xd8] sm:$0xff] %v1879
          %2008 = vst [vmem:[#allocation2 + $0xe0] sm:$0xff] %v1880
          %2009 = vst [vmem:[#allocation2 + $0xe8] sm:$0xff] %v1881
          %2010 = vst [vmem:[#allocation2 + $0xf0] sm:$0xff] %v1882
          %2011 = vst [vmem:[#allocation2 + $0xf8] sm:$0xff] %v1883
          %2012 = vst [vmem:[#allocation2 + $0x100] sm:$0xff] %v1884
          %2013 = vst [vmem:[#allocation2 + $0x108] sm:$0xff] %v1885
          %2014 = vst [vmem:[#allocation2 + $0x110] sm:$0xff] %v1886
          %2015 = vst [vmem:[#allocation2 + $0x118] sm:$0xff] %v1887
          %2016 = vst [vmem:[#allocation2 + $0x120] sm:$0xff] %v1888
          %2017 = vst [vmem:[#allocation2 + $0x128] sm:$0xff] %v1889
          %2018 = vst [vmem:[#allocation2 + $0x130] sm:$0xff] %v1890
          %2019 = vst [vmem:[#allocation2 + $0x138] sm:$0xff] %v1891
          %2020 = vst [vmem:[#allocation2 + $0x140] sm:$0xff] %v1892
          %2021 = vst [vmem:[#allocation2 + $0x148] sm:$0xff] %v1893
          %2022 = vst [vmem:[#allocation2 + $0x150] sm:$0xff] %v1894
          %2023 = vst [vmem:[#allocation2 + $0x158] sm:$0xff] %v1895
          %2024 = vst [vmem:[#allocation2 + $0x160] sm:$0xff] %v1896
          %2025 = vst [vmem:[#allocation2 + $0x168] sm:$0xff] %v1897
          %2026 = vst [vmem:[#allocation2 + $0x170] sm:$0xff] %v1898
          %2027 = vst [vmem:[#allocation2 + $0x178] sm:$0xff] %v1899
          %2028 = vst [vmem:[#allocation2 + $0x180] sm:$0xff] %v1900
          %2029 = vst [vmem:[#allocation2 + $0x188] sm:$0xff] %v1901
          %2030 = vst [vmem:[#allocation2 + $0x190] sm:$0xff] %v1902
          %2031 = vst [vmem:[#allocation2 + $0x198] sm:$0xff] %v1903
          %2032 = vst [vmem:[#allocation2 + $0x1a0] sm:$0xff] %v1904
          %2033 = vst [vmem:[#allocation2 + $0x1a8] sm:$0xff] %v1905
          %2034 = vst [vmem:[#allocation2 + $0x1b0] sm:$0xff] %v1906
          %2035 = vst [vmem:[#allocation2 + $0x1b8] sm:$0xff] %v1907
          %2036 = vst [vmem:[#allocation2 + $0x1c0] sm:$0xff] %v1908
          %2037 = vst [vmem:[#allocation2 + $0x1c8] sm:$0xff] %v1909
          %2038 = vst [vmem:[#allocation2 + $0x1d0] sm:$0xff] %v1910
          %2039 = vst [vmem:[#allocation2 + $0x1d8] sm:$0xff] %v1911
          %2040 = vst [vmem:[#allocation2 + $0x1e0] sm:$0xff] %v1912
          %2041 = vst [vmem:[#allocation2 + $0x1e8] sm:$0xff] %v1913
          %2042 = vst [vmem:[#allocation2 + $0x1f0] sm:$0xff] %v1914
          %2043 = vst [vmem:[#allocation2 + $0x1f8] sm:$0xff] %v1915
          %2044 = vst [vmem:[#allocation2 + $0x200] sm:$0xff] %v1916
          %2045 = vst [vmem:[#allocation2 + $0x208] sm:$0xff] %v1917
          %2046 = vst [vmem:[#allocation2 + $0x210] sm:$0xff] %v1918
          %2047 = vst [vmem:[#allocation2 + $0x218] sm:$0xff] %v1919
          %2048 = vst [vmem:[#allocation2 + $0x220] sm:$0xff] %v1920
          %2049 = vst [vmem:[#allocation2 + $0x228] sm:$0xff] %v1921
          %2050 = vst [vmem:[#allocation2 + $0x230] sm:$0xff] %v1922
          %2051 = vst [vmem:[#allocation2 + $0x238] sm:$0xff] %v1923
          %2052 = vst [vmem:[#allocation2 + $0x240] sm:$0xff] %v1924
          %2053 = vst [vmem:[#allocation2 + $0x248] sm:$0xff] %v1925
          %2054 = vst [vmem:[#allocation2 + $0x250] sm:$0xff] %v1926
          %2055 = vst [vmem:[#allocation2 + $0x258] sm:$0xff] %v1927
          %2056 = vst [vmem:[#allocation2 + $0x260] sm:$0xff] %v1928
          %2057 = vst [vmem:[#allocation2 + $0x268] sm:$0xff] %v1929
          %2058 = vst [vmem:[#allocation2 + $0x270] sm:$0xff] %v1930
          %2059 = vst [vmem:[#allocation2 + $0x278] sm:$0xff] %v1931
          %2060 = vst [vmem:[#allocation2 + $0x280] sm:$0xff] %v1932
          %2061 = vst [vmem:[#allocation2 + $0x288] sm:$0xff] %v1933
          %2062 = vst [vmem:[#allocation2 + $0x290] sm:$0xff] %v1934
          %2063 = vst [vmem:[#allocation2 + $0x298] sm:$0xff] %v1935
          %2064 = vst [vmem:[#allocation2 + $0x2a0] sm:$0xff] %v1936
          %2065 = vst [vmem:[#allocation2 + $0x2a8] sm:$0xff] %v1937
          %2066 = vst [vmem:[#allocation2 + $0x2b0] sm:$0xff] %v1938
          %2067 = vst [vmem:[#allocation2 + $0x2b8] sm:$0xff] %v1939
          %2068 = vst [vmem:[#allocation2 + $0x2c0] sm:$0xff] %v1940
          %2069 = vst [vmem:[#allocation2 + $0x2c8] sm:$0xff] %v1941
          %2070 = vst [vmem:[#allocation2 + $0x2d0] sm:$0xff] %v1942
          %2071 = vst [vmem:[#allocation2 + $0x2d8] sm:$0xff] %v1943
          %2072 = vst [vmem:[#allocation2 + $0x2e0] sm:$0xff] %v1944
          %2073 = vst [vmem:[#allocation2 + $0x2e8] sm:$0xff] %v1945
          %2074 = vst [vmem:[#allocation2 + $0x2f0] sm:$0xff] %v1946
          %2075 = vst [vmem:[#allocation2 + $0x2f8] sm:$0xff] %v1947
          %2076 = vst [vmem:[#allocation2 + $0x300] sm:$0xff] %v1948
          %2077 = vst [vmem:[#allocation2 + $0x308] sm:$0xff] %v1949
          %2078 = vst [vmem:[#allocation2 + $0x310] sm:$0xff] %v1950
          %2079 = vst [vmem:[#allocation2 + $0x318] sm:$0xff] %v1951
          %2080 = vst [vmem:[#allocation2 + $0x320] sm:$0xff] %v1952
          %2081 = vst [vmem:[#allocation2 + $0x328] sm:$0xff] %v1953
          %2082 = vst [vmem:[#allocation2 + $0x330] sm:$0xff] %v1954
          %2083 = vst [vmem:[#allocation2 + $0x338] sm:$0xff] %v1955
          %2084 = vst [vmem:[#allocation2 + $0x340] sm:$0xff] %v1956
          %2085 = vst [vmem:[#allocation2 + $0x348] sm:$0xff] %v1957
          %2086 = vst [vmem:[#allocation2 + $0x350] sm:$0xff] %v1958
          %2087 = vst [vmem:[#allocation2 + $0x358] sm:$0xff] %v1959
          %2088 = vst [vmem:[#allocation2 + $0x360] sm:$0xff] %v1960
          %2089 = vst [vmem:[#allocation2 + $0x368] sm:$0xff] %v1961
          %2090 = vst [vmem:[#allocation2 + $0x370] sm:$0xff] %v1962
          %2091 = vst [vmem:[#allocation2 + $0x378] sm:$0xff] %v1963
          %2092 = vst [vmem:[#allocation2 + $0x380] sm:$0xff] %v1964
          %2093 = vst [vmem:[#allocation2 + $0x388] sm:$0xff] %v1965
          %2094 = vst [vmem:[#allocation2 + $0x390] sm:$0xff] %v1966
          %2095 = vst [vmem:[#allocation2 + $0x398] sm:$0xff] %v1967
          %2096 = vst [vmem:[#allocation2 + $0x3a0] sm:$0xff] %v1968
          %2097 = vst [vmem:[#allocation2 + $0x3a8] sm:$0xff] %v1969
          %2098 = vst [vmem:[#allocation2 + $0x3b0] sm:$0xff] %v1970
          %2099 = vst [vmem:[#allocation2 + $0x3b8] sm:$0xff] %v1971
          %2100 = vst [vmem:[#allocation2 + $0x3c0] sm:$0xff] %v1972
          %2101 = vst [vmem:[#allocation2 + $0x3c8] sm:$0xff] %v1973
          %2102 = vst [vmem:[#allocation2 + $0x3d0] sm:$0xff] %v1974
          %2103 = vst [vmem:[#allocation2 + $0x3d8] sm:$0xff] %v1975
          %2104 = vst [vmem:[#allocation2 + $0x3e0] sm:$0xff] %v1976
          %2105 = vst [vmem:[#allocation2 + $0x3e8] sm:$0xff] %v1977
          %2106 = vst [vmem:[#allocation2 + $0x3f0] sm:$0xff] %v1978
          %2107 = vst [vmem:[#allocation2 + $0x3f8] sm:$0xff] %v1979
        $region72: #{tpu_custom_call.1} parent=43 // pred_fallthru
          _
        %v2108 = vld [vmem:[#allocation2] sm:$0xff]
        %v2109 = vld [vmem:[#allocation2 + $0x8] sm:$0xff]
        %v2110 = vld [vmem:[#allocation2 + $0x10] sm:$0xff]
        %v2111 = vld [vmem:[#allocation2 + $0x18] sm:$0xff]
        %v2112 = vld [vmem:[#allocation2 + $0x20] sm:$0xff]
        %v2113 = vld [vmem:[#allocation2 + $0x28] sm:$0xff]
        %v2114 = vld [vmem:[#allocation2 + $0x30] sm:$0xff]
        %v2115 = vld [vmem:[#allocation2 + $0x38] sm:$0xff]
        %v2116 = vld [vmem:[#allocation2 + $0x40] sm:$0xff]
        %v2117 = vld [vmem:[#allocation2 + $0x48] sm:$0xff]
        %v2118 = vld [vmem:[#allocation2 + $0x50] sm:$0xff]
        %v2119 = vld [vmem:[#allocation2 + $0x58] sm:$0xff]
        %v2120 = vld [vmem:[#allocation2 + $0x60] sm:$0xff]
        %v2121 = vld [vmem:[#allocation2 + $0x68] sm:$0xff]
        %v2122 = vld [vmem:[#allocation2 + $0x70] sm:$0xff]
        %v2123 = vld [vmem:[#allocation2 + $0x78] sm:$0xff]
        %v2124 = vld [vmem:[#allocation2 + $0x80] sm:$0xff]
        %v2125 = vld [vmem:[#allocation2 + $0x88] sm:$0xff]
        %v2126 = vld [vmem:[#allocation2 + $0x90] sm:$0xff]
        %v2127 = vld [vmem:[#allocation2 + $0x98] sm:$0xff]
        %v2128 = vld [vmem:[#allocation2 + $0xa0] sm:$0xff]
        %v2129 = vld [vmem:[#allocation2 + $0xa8] sm:$0xff]
        %v2130 = vld [vmem:[#allocation2 + $0xb0] sm:$0xff]
        %v2131 = vld [vmem:[#allocation2 + $0xb8] sm:$0xff]
        %v2132 = vld [vmem:[#allocation2 + $0xc0] sm:$0xff]
        %v2133 = vld [vmem:[#allocation2 + $0xc8] sm:$0xff]
        %v2134 = vld [vmem:[#allocation2 + $0xd0] sm:$0xff]
        %v2135 = vld [vmem:[#allocation2 + $0xd8] sm:$0xff]
        %v2136 = vld [vmem:[#allocation2 + $0xe0] sm:$0xff]
        %v2137 = vld [vmem:[#allocation2 + $0xe8] sm:$0xff]
        %v2138 = vld [vmem:[#allocation2 + $0xf0] sm:$0xff]
        %v2139 = vld [vmem:[#allocation2 + $0xf8] sm:$0xff]
        %v2140 = vld [vmem:[#allocation2 + $0x100] sm:$0xff]
        %v2141 = vld [vmem:[#allocation2 + $0x108] sm:$0xff]
        %v2142 = vld [vmem:[#allocation2 + $0x110] sm:$0xff]
        %v2143 = vld [vmem:[#allocation2 + $0x118] sm:$0xff]
        %v2144 = vld [vmem:[#allocation2 + $0x120] sm:$0xff]
        %v2145 = vld [vmem:[#allocation2 + $0x128] sm:$0xff]
        %v2146 = vld [vmem:[#allocation2 + $0x130] sm:$0xff]
        %v2147 = vld [vmem:[#allocation2 + $0x138] sm:$0xff]
        %v2148 = vld [vmem:[#allocation2 + $0x140] sm:$0xff]
        %v2149 = vld [vmem:[#allocation2 + $0x148] sm:$0xff]
        %v2150 = vld [vmem:[#allocation2 + $0x150] sm:$0xff]
        %v2151 = vld [vmem:[#allocation2 + $0x158] sm:$0xff]
        %v2152 = vld [vmem:[#allocation2 + $0x160] sm:$0xff]
        %v2153 = vld [vmem:[#allocation2 + $0x168] sm:$0xff]
        %v2154 = vld [vmem:[#allocation2 + $0x170] sm:$0xff]
        %v2155 = vld [vmem:[#allocation2 + $0x178] sm:$0xff]
        %v2156 = vld [vmem:[#allocation2 + $0x180] sm:$0xff]
        %v2157 = vld [vmem:[#allocation2 + $0x188] sm:$0xff]
        %v2158 = vld [vmem:[#allocation2 + $0x190] sm:$0xff]
        %v2159 = vld [vmem:[#allocation2 + $0x198] sm:$0xff]
        %v2160 = vld [vmem:[#allocation2 + $0x1a0] sm:$0xff]
        %v2161 = vld [vmem:[#allocation2 + $0x1a8] sm:$0xff]
        %v2162 = vld [vmem:[#allocation2 + $0x1b0] sm:$0xff]
        %v2163 = vld [vmem:[#allocation2 + $0x1b8] sm:$0xff]
        %v2164 = vld [vmem:[#allocation2 + $0x1c0] sm:$0xff]
        %v2165 = vld [vmem:[#allocation2 + $0x1c8] sm:$0xff]
        %v2166 = vld [vmem:[#allocation2 + $0x1d0] sm:$0xff]
        %v2167 = vld [vmem:[#allocation2 + $0x1d8] sm:$0xff]
        %v2168 = vld [vmem:[#allocation2 + $0x1e0] sm:$0xff]
        %v2169 = vld [vmem:[#allocation2 + $0x1e8] sm:$0xff]
        %v2170 = vld [vmem:[#allocation2 + $0x1f0] sm:$0xff]
        %v2171 = vld [vmem:[#allocation2 + $0x1f8] sm:$0xff]
        %v2172 = vld [vmem:[#allocation2 + $0x200] sm:$0xff]
        %v2173 = vld [vmem:[#allocation2 + $0x208] sm:$0xff]
        %v2174 = vld [vmem:[#allocation2 + $0x210] sm:$0xff]
        %v2175 = vld [vmem:[#allocation2 + $0x218] sm:$0xff]
        %v2176 = vld [vmem:[#allocation2 + $0x220] sm:$0xff]
        %v2177 = vld [vmem:[#allocation2 + $0x228] sm:$0xff]
        %v2178 = vld [vmem:[#allocation2 + $0x230] sm:$0xff]
        %v2179 = vld [vmem:[#allocation2 + $0x238] sm:$0xff]
        %v2180 = vld [vmem:[#allocation2 + $0x240] sm:$0xff]
        %v2181 = vld [vmem:[#allocation2 + $0x248] sm:$0xff]
        %v2182 = vld [vmem:[#allocation2 + $0x250] sm:$0xff]
        %v2183 = vld [vmem:[#allocation2 + $0x258] sm:$0xff]
        %v2184 = vld [vmem:[#allocation2 + $0x260] sm:$0xff]
        %v2185 = vld [vmem:[#allocation2 + $0x268] sm:$0xff]
        %v2186 = vld [vmem:[#allocation2 + $0x270] sm:$0xff]
        %v2187 = vld [vmem:[#allocation2 + $0x278] sm:$0xff]
        %v2188 = vld [vmem:[#allocation2 + $0x280] sm:$0xff]
        %v2189 = vld [vmem:[#allocation2 + $0x288] sm:$0xff]
        %v2190 = vld [vmem:[#allocation2 + $0x290] sm:$0xff]
        %v2191 = vld [vmem:[#allocation2 + $0x298] sm:$0xff]
        %v2192 = vld [vmem:[#allocation2 + $0x2a0] sm:$0xff]
        %v2193 = vld [vmem:[#allocation2 + $0x2a8] sm:$0xff]
        %v2194 = vld [vmem:[#allocation2 + $0x2b0] sm:$0xff]
        %v2195 = vld [vmem:[#allocation2 + $0x2b8] sm:$0xff]
        %v2196 = vld [vmem:[#allocation2 + $0x2c0] sm:$0xff]
        %v2197 = vld [vmem:[#allocation2 + $0x2c8] sm:$0xff]
        %v2198 = vld [vmem:[#allocation2 + $0x2d0] sm:$0xff]
        %v2199 = vld [vmem:[#allocation2 + $0x2d8] sm:$0xff]
        %v2200 = vld [vmem:[#allocation2 + $0x2e0] sm:$0xff]
        %v2201 = vld [vmem:[#allocation2 + $0x2e8] sm:$0xff]
        %v2202 = vld [vmem:[#allocation2 + $0x2f0] sm:$0xff]
        %v2203 = vld [vmem:[#allocation2 + $0x2f8] sm:$0xff]
        %v2204 = vld [vmem:[#allocation2 + $0x300] sm:$0xff]
        %v2205 = vld [vmem:[#allocation2 + $0x308] sm:$0xff]
        %v2206 = vld [vmem:[#allocation2 + $0x310] sm:$0xff]
        %v2207 = vld [vmem:[#allocation2 + $0x318] sm:$0xff]
        %v2208 = vld [vmem:[#allocation2 + $0x320] sm:$0xff]
        %v2209 = vld [vmem:[#allocation2 + $0x328] sm:$0xff]
        %v2210 = vld [vmem:[#allocation2 + $0x330] sm:$0xff]
        %v2211 = vld [vmem:[#allocation2 + $0x338] sm:$0xff]
        %v2212 = vld [vmem:[#allocation2 + $0x340] sm:$0xff]
        %v2213 = vld [vmem:[#allocation2 + $0x348] sm:$0xff]
        %v2214 = vld [vmem:[#allocation2 + $0x350] sm:$0xff]
        %v2215 = vld [vmem:[#allocation2 + $0x358] sm:$0xff]
        %v2216 = vld [vmem:[#allocation2 + $0x360] sm:$0xff]
        %v2217 = vld [vmem:[#allocation2 + $0x368] sm:$0xff]
        %v2218 = vld [vmem:[#allocation2 + $0x370] sm:$0xff]
        %v2219 = vld [vmem:[#allocation2 + $0x378] sm:$0xff]
        %v2220 = vld [vmem:[#allocation2 + $0x380] sm:$0xff]
        %v2221 = vld [vmem:[#allocation2 + $0x388] sm:$0xff]
        %v2222 = vld [vmem:[#allocation2 + $0x390] sm:$0xff]
        %v2223 = vld [vmem:[#allocation2 + $0x398] sm:$0xff]
        %v2224 = vld [vmem:[#allocation2 + $0x3a0] sm:$0xff]
        %v2225 = vld [vmem:[#allocation2 + $0x3a8] sm:$0xff]
        %v2226 = vld [vmem:[#allocation2 + $0x3b0] sm:$0xff]
        %v2227 = vld [vmem:[#allocation2 + $0x3b8] sm:$0xff]
        %v2228 = vld [vmem:[#allocation2 + $0x3c0] sm:$0xff]
        %v2229 = vld [vmem:[#allocation2 + $0x3c8] sm:$0xff]
        %v2230 = vld [vmem:[#allocation2 + $0x3d0] sm:$0xff]
        %v2231 = vld [vmem:[#allocation2 + $0x3d8] sm:$0xff]
        %v2232 = vld [vmem:[#allocation2 + $0x3e0] sm:$0xff]
        %v2233 = vld [vmem:[#allocation2 + $0x3e8] sm:$0xff]
        %v2234 = vld [vmem:[#allocation2 + $0x3f0] sm:$0xff]
        %v2235 = vld [vmem:[#allocation2 + $0x3f8] sm:$0xff]
        %v2236 = vld [vmem:[%s374] sm:$0xff]
        %v2237 = vld [vmem:[%s374 + $0x8] sm:$0xff]
        %v2238 = vld [vmem:[%s374 + $0x10] sm:$0xff]
        %v2239 = vld [vmem:[%s374 + $0x18] sm:$0xff]
        %v2240 = vld [vmem:[%s374 + $0x20] sm:$0xff]
        %v2241 = vld [vmem:[%s374 + $0x28] sm:$0xff]
        %v2242 = vld [vmem:[%s374 + $0x30] sm:$0xff]
        %v2243 = vld [vmem:[%s374 + $0x38] sm:$0xff]
        %v2244 = vld [vmem:[%s374 + $0x40] sm:$0xff]
        %v2245 = vld [vmem:[%s374 + $0x48] sm:$0xff]
        %v2246 = vld [vmem:[%s374 + $0x50] sm:$0xff]
        %v2247 = vld [vmem:[%s374 + $0x58] sm:$0xff]
        %v2248 = vld [vmem:[%s374 + $0x60] sm:$0xff]
        %v2249 = vld [vmem:[%s374 + $0x68] sm:$0xff]
        %v2250 = vld [vmem:[%s374 + $0x70] sm:$0xff]
        %v2251 = vld [vmem:[%s374 + $0x78] sm:$0xff]
        %v2252 = vld [vmem:[%s374 + $0x80] sm:$0xff]
        %v2253 = vld [vmem:[%s374 + $0x88] sm:$0xff]
        %v2254 = vld [vmem:[%s374 + $0x90] sm:$0xff]
        %v2255 = vld [vmem:[%s374 + $0x98] sm:$0xff]
        %v2256 = vld [vmem:[%s374 + $0xa0] sm:$0xff]
        %v2257 = vld [vmem:[%s374 + $0xa8] sm:$0xff]
        %v2258 = vld [vmem:[%s374 + $0xb0] sm:$0xff]
        %v2259 = vld [vmem:[%s374 + $0xb8] sm:$0xff]
        %v2260 = vld [vmem:[%s374 + $0xc0] sm:$0xff]
        %v2261 = vld [vmem:[%s374 + $0xc8] sm:$0xff]
        %v2262 = vld [vmem:[%s374 + $0xd0] sm:$0xff]
        %v2263 = vld [vmem:[%s374 + $0xd8] sm:$0xff]
        %v2264 = vld [vmem:[%s374 + $0xe0] sm:$0xff]
        %v2265 = vld [vmem:[%s374 + $0xe8] sm:$0xff]
        %v2266 = vld [vmem:[%s374 + $0xf0] sm:$0xff]
        %v2267 = vld [vmem:[%s374 + $0xf8] sm:$0xff]
        %v2268 = vld [vmem:[%s374 + $0x100] sm:$0xff]
        %v2269 = vld [vmem:[%s374 + $0x108] sm:$0xff]
        %v2270 = vld [vmem:[%s374 + $0x110] sm:$0xff]
        %v2271 = vld [vmem:[%s374 + $0x118] sm:$0xff]
        %v2272 = vld [vmem:[%s374 + $0x120] sm:$0xff]
        %v2273 = vld [vmem:[%s374 + $0x128] sm:$0xff]
        %v2274 = vld [vmem:[%s374 + $0x130] sm:$0xff]
        %v2275 = vld [vmem:[%s374 + $0x138] sm:$0xff]
        %v2276 = vld [vmem:[%s374 + $0x140] sm:$0xff]
        %v2277 = vld [vmem:[%s374 + $0x148] sm:$0xff]
        %v2278 = vld [vmem:[%s374 + $0x150] sm:$0xff]
        %v2279 = vld [vmem:[%s374 + $0x158] sm:$0xff]
        %v2280 = vld [vmem:[%s374 + $0x160] sm:$0xff]
        %v2281 = vld [vmem:[%s374 + $0x168] sm:$0xff]
        %v2282 = vld [vmem:[%s374 + $0x170] sm:$0xff]
        %v2283 = vld [vmem:[%s374 + $0x178] sm:$0xff]
        %v2284 = vld [vmem:[%s374 + $0x180] sm:$0xff]
        %v2285 = vld [vmem:[%s374 + $0x188] sm:$0xff]
        %v2286 = vld [vmem:[%s374 + $0x190] sm:$0xff]
        %v2287 = vld [vmem:[%s374 + $0x198] sm:$0xff]
        %v2288 = vld [vmem:[%s374 + $0x1a0] sm:$0xff]
        %v2289 = vld [vmem:[%s374 + $0x1a8] sm:$0xff]
        %v2290 = vld [vmem:[%s374 + $0x1b0] sm:$0xff]
        %v2291 = vld [vmem:[%s374 + $0x1b8] sm:$0xff]
        %v2292 = vld [vmem:[%s374 + $0x1c0] sm:$0xff]
        %v2293 = vld [vmem:[%s374 + $0x1c8] sm:$0xff]
        %v2294 = vld [vmem:[%s374 + $0x1d0] sm:$0xff]
        %v2295 = vld [vmem:[%s374 + $0x1d8] sm:$0xff]
        %v2296 = vld [vmem:[%s374 + $0x1e0] sm:$0xff]
        %v2297 = vld [vmem:[%s374 + $0x1e8] sm:$0xff]
        %v2298 = vld [vmem:[%s374 + $0x1f0] sm:$0xff]
        %v2299 = vld [vmem:[%s374 + $0x1f8] sm:$0xff]
        %v2300 = vld [vmem:[%s374 + $0x200] sm:$0xff]
        %v2301 = vld [vmem:[%s374 + $0x208] sm:$0xff]
        %v2302 = vld [vmem:[%s374 + $0x210] sm:$0xff]
        %v2303 = vld [vmem:[%s374 + $0x218] sm:$0xff]
        %v2304 = vld [vmem:[%s374 + $0x220] sm:$0xff]
        %v2305 = vld [vmem:[%s374 + $0x228] sm:$0xff]
        %v2306 = vld [vmem:[%s374 + $0x230] sm:$0xff]
        %v2307 = vld [vmem:[%s374 + $0x238] sm:$0xff]
        %v2308 = vld [vmem:[%s374 + $0x240] sm:$0xff]
        %v2309 = vld [vmem:[%s374 + $0x248] sm:$0xff]
        %v2310 = vld [vmem:[%s374 + $0x250] sm:$0xff]
        %v2311 = vld [vmem:[%s374 + $0x258] sm:$0xff]
        %v2312 = vld [vmem:[%s374 + $0x260] sm:$0xff]
        %v2313 = vld [vmem:[%s374 + $0x268] sm:$0xff]
        %v2314 = vld [vmem:[%s374 + $0x270] sm:$0xff]
        %v2315 = vld [vmem:[%s374 + $0x278] sm:$0xff]
        %v2316 = vld [vmem:[%s374 + $0x280] sm:$0xff]
        %v2317 = vld [vmem:[%s374 + $0x288] sm:$0xff]
        %v2318 = vld [vmem:[%s374 + $0x290] sm:$0xff]
        %v2319 = vld [vmem:[%s374 + $0x298] sm:$0xff]
        %v2320 = vld [vmem:[%s374 + $0x2a0] sm:$0xff]
        %v2321 = vld [vmem:[%s374 + $0x2a8] sm:$0xff]
        %v2322 = vld [vmem:[%s374 + $0x2b0] sm:$0xff]
        %v2323 = vld [vmem:[%s374 + $0x2b8] sm:$0xff]
        %v2324 = vld [vmem:[%s374 + $0x2c0] sm:$0xff]
        %v2325 = vld [vmem:[%s374 + $0x2c8] sm:$0xff]
        %v2326 = vld [vmem:[%s374 + $0x2d0] sm:$0xff]
        %v2327 = vld [vmem:[%s374 + $0x2d8] sm:$0xff]
        %v2328 = vld [vmem:[%s374 + $0x2e0] sm:$0xff]
        %v2329 = vld [vmem:[%s374 + $0x2e8] sm:$0xff]
        %v2330 = vld [vmem:[%s374 + $0x2f0] sm:$0xff]
        %v2331 = vld [vmem:[%s374 + $0x2f8] sm:$0xff]
        %v2332 = vld [vmem:[%s374 + $0x300] sm:$0xff]
        %v2333 = vld [vmem:[%s374 + $0x308] sm:$0xff]
        %v2334 = vld [vmem:[%s374 + $0x310] sm:$0xff]
        %v2335 = vld [vmem:[%s374 + $0x318] sm:$0xff]
        %v2336 = vld [vmem:[%s374 + $0x320] sm:$0xff]
        %v2337 = vld [vmem:[%s374 + $0x328] sm:$0xff]
        %v2338 = vld [vmem:[%s374 + $0x330] sm:$0xff]
        %v2339 = vld [vmem:[%s374 + $0x338] sm:$0xff]
        %v2340 = vld [vmem:[%s374 + $0x340] sm:$0xff]
        %v2341 = vld [vmem:[%s374 + $0x348] sm:$0xff]
        %v2342 = vld [vmem:[%s374 + $0x350] sm:$0xff]
        %v2343 = vld [vmem:[%s374 + $0x358] sm:$0xff]
        %v2344 = vld [vmem:[%s374 + $0x360] sm:$0xff]
        %v2345 = vld [vmem:[%s374 + $0x368] sm:$0xff]
        %v2346 = vld [vmem:[%s374 + $0x370] sm:$0xff]
        %v2347 = vld [vmem:[%s374 + $0x378] sm:$0xff]
        %v2348 = vld [vmem:[%s374 + $0x380] sm:$0xff]
        %v2349 = vld [vmem:[%s374 + $0x388] sm:$0xff]
        %v2350 = vld [vmem:[%s374 + $0x390] sm:$0xff]
        %v2351 = vld [vmem:[%s374 + $0x398] sm:$0xff]
        %v2352 = vld [vmem:[%s374 + $0x3a0] sm:$0xff]
        %v2353 = vld [vmem:[%s374 + $0x3a8] sm:$0xff]
        %v2354 = vld [vmem:[%s374 + $0x3b0] sm:$0xff]
        %v2355 = vld [vmem:[%s374 + $0x3b8] sm:$0xff]
        %v2356 = vld [vmem:[%s374 + $0x3c0] sm:$0xff]
        %v2357 = vld [vmem:[%s374 + $0x3c8] sm:$0xff]
        %v2358 = vld [vmem:[%s374 + $0x3d0] sm:$0xff]
        %v2359 = vld [vmem:[%s374 + $0x3d8] sm:$0xff]
        %v2360 = vld [vmem:[%s374 + $0x3e0] sm:$0xff]
        %v2361 = vld [vmem:[%s374 + $0x3e8] sm:$0xff]
        %v2362 = vld [vmem:[%s374 + $0x3f0] sm:$0xff]
        %v2363 = vld [vmem:[%s374 + $0x3f8] sm:$0xff]
        %v2364 = vld [vmem:[%s374 + $0x400] sm:$0xff]
        %v2365 = vld [vmem:[%s374 + $0x408] sm:$0xff]
        %v2366 = vld [vmem:[%s374 + $0x410] sm:$0xff]
        %v2367 = vld [vmem:[%s374 + $0x418] sm:$0xff]
        %v2368 = vld [vmem:[%s374 + $0x420] sm:$0xff]
        %v2369 = vld [vmem:[%s374 + $0x428] sm:$0xff]
        %v2370 = vld [vmem:[%s374 + $0x430] sm:$0xff]
        %v2371 = vld [vmem:[%s374 + $0x438] sm:$0xff]
        %v2372 = vld [vmem:[%s374 + $0x440] sm:$0xff]
        %v2373 = vld [vmem:[%s374 + $0x448] sm:$0xff]
        %v2374 = vld [vmem:[%s374 + $0x450] sm:$0xff]
        %v2375 = vld [vmem:[%s374 + $0x458] sm:$0xff]
        %v2376 = vld [vmem:[%s374 + $0x460] sm:$0xff]
        %v2377 = vld [vmem:[%s374 + $0x468] sm:$0xff]
        %v2378 = vld [vmem:[%s374 + $0x470] sm:$0xff]
        %v2379 = vld [vmem:[%s374 + $0x478] sm:$0xff]
        %v2380 = vld [vmem:[%s374 + $0x480] sm:$0xff]
        %v2381 = vld [vmem:[%s374 + $0x488] sm:$0xff]
        %v2382 = vld [vmem:[%s374 + $0x490] sm:$0xff]
        %v2383 = vld [vmem:[%s374 + $0x498] sm:$0xff]
        %v2384 = vld [vmem:[%s374 + $0x4a0] sm:$0xff]
        %v2385 = vld [vmem:[%s374 + $0x4a8] sm:$0xff]
        %v2386 = vld [vmem:[%s374 + $0x4b0] sm:$0xff]
        %v2387 = vld [vmem:[%s374 + $0x4b8] sm:$0xff]
        %v2388 = vld [vmem:[%s374 + $0x4c0] sm:$0xff]
        %v2389 = vld [vmem:[%s374 + $0x4c8] sm:$0xff]
        %v2390 = vld [vmem:[%s374 + $0x4d0] sm:$0xff]
        %v2391 = vld [vmem:[%s374 + $0x4d8] sm:$0xff]
        %v2392 = vld [vmem:[%s374 + $0x4e0] sm:$0xff]
        %v2393 = vld [vmem:[%s374 + $0x4e8] sm:$0xff]
        %v2394 = vld [vmem:[%s374 + $0x4f0] sm:$0xff]
        %v2395 = vld [vmem:[%s374 + $0x4f8] sm:$0xff]
        %v2396 = vld [vmem:[%s374 + $0x500] sm:$0xff]
        %v2397 = vld [vmem:[%s374 + $0x508] sm:$0xff]
        %v2398 = vld [vmem:[%s374 + $0x510] sm:$0xff]
        %v2399 = vld [vmem:[%s374 + $0x518] sm:$0xff]
        %v2400 = vld [vmem:[%s374 + $0x520] sm:$0xff]
        %v2401 = vld [vmem:[%s374 + $0x528] sm:$0xff]
        %v2402 = vld [vmem:[%s374 + $0x530] sm:$0xff]
        %v2403 = vld [vmem:[%s374 + $0x538] sm:$0xff]
        %v2404 = vld [vmem:[%s374 + $0x540] sm:$0xff]
        %v2405 = vld [vmem:[%s374 + $0x548] sm:$0xff]
        %v2406 = vld [vmem:[%s374 + $0x550] sm:$0xff]
        %v2407 = vld [vmem:[%s374 + $0x558] sm:$0xff]
        %v2408 = vld [vmem:[%s374 + $0x560] sm:$0xff]
        %v2409 = vld [vmem:[%s374 + $0x568] sm:$0xff]
        %v2410 = vld [vmem:[%s374 + $0x570] sm:$0xff]
        %v2411 = vld [vmem:[%s374 + $0x578] sm:$0xff]
        %v2412 = vld [vmem:[%s374 + $0x580] sm:$0xff]
        %v2413 = vld [vmem:[%s374 + $0x588] sm:$0xff]
        %v2414 = vld [vmem:[%s374 + $0x590] sm:$0xff]
        %v2415 = vld [vmem:[%s374 + $0x598] sm:$0xff]
        %v2416 = vld [vmem:[%s374 + $0x5a0] sm:$0xff]
        %v2417 = vld [vmem:[%s374 + $0x5a8] sm:$0xff]
        %v2418 = vld [vmem:[%s374 + $0x5b0] sm:$0xff]
        %v2419 = vld [vmem:[%s374 + $0x5b8] sm:$0xff]
        %v2420 = vld [vmem:[%s374 + $0x5c0] sm:$0xff]
        %v2421 = vld [vmem:[%s374 + $0x5c8] sm:$0xff]
        %v2422 = vld [vmem:[%s374 + $0x5d0] sm:$0xff]
        %v2423 = vld [vmem:[%s374 + $0x5d8] sm:$0xff]
        %v2424 = vld [vmem:[%s374 + $0x5e0] sm:$0xff]
        %v2425 = vld [vmem:[%s374 + $0x5e8] sm:$0xff]
        %v2426 = vld [vmem:[%s374 + $0x5f0] sm:$0xff]
        %v2427 = vld [vmem:[%s374 + $0x5f8] sm:$0xff]
        %v2428 = vld [vmem:[%s374 + $0x600] sm:$0xff]
        %v2429 = vld [vmem:[%s374 + $0x608] sm:$0xff]
        %v2430 = vld [vmem:[%s374 + $0x610] sm:$0xff]
        %v2431 = vld [vmem:[%s374 + $0x618] sm:$0xff]
        %v2432 = vld [vmem:[%s374 + $0x620] sm:$0xff]
        %v2433 = vld [vmem:[%s374 + $0x628] sm:$0xff]
        %v2434 = vld [vmem:[%s374 + $0x630] sm:$0xff]
        %v2435 = vld [vmem:[%s374 + $0x638] sm:$0xff]
        %v2436 = vld [vmem:[%s374 + $0x640] sm:$0xff]
        %v2437 = vld [vmem:[%s374 + $0x648] sm:$0xff]
        %v2438 = vld [vmem:[%s374 + $0x650] sm:$0xff]
        %v2439 = vld [vmem:[%s374 + $0x658] sm:$0xff]
        %v2440 = vld [vmem:[%s374 + $0x660] sm:$0xff]
        %v2441 = vld [vmem:[%s374 + $0x668] sm:$0xff]
        %v2442 = vld [vmem:[%s374 + $0x670] sm:$0xff]
        %v2443 = vld [vmem:[%s374 + $0x678] sm:$0xff]
        %v2444 = vld [vmem:[%s374 + $0x680] sm:$0xff]
        %v2445 = vld [vmem:[%s374 + $0x688] sm:$0xff]
        %v2446 = vld [vmem:[%s374 + $0x690] sm:$0xff]
        %v2447 = vld [vmem:[%s374 + $0x698] sm:$0xff]
        %v2448 = vld [vmem:[%s374 + $0x6a0] sm:$0xff]
        %v2449 = vld [vmem:[%s374 + $0x6a8] sm:$0xff]
        %v2450 = vld [vmem:[%s374 + $0x6b0] sm:$0xff]
        %v2451 = vld [vmem:[%s374 + $0x6b8] sm:$0xff]
        %v2452 = vld [vmem:[%s374 + $0x6c0] sm:$0xff]
        %v2453 = vld [vmem:[%s374 + $0x6c8] sm:$0xff]
        %v2454 = vld [vmem:[%s374 + $0x6d0] sm:$0xff]
        %v2455 = vld [vmem:[%s374 + $0x6d8] sm:$0xff]
        %v2456 = vld [vmem:[%s374 + $0x6e0] sm:$0xff]
        %v2457 = vld [vmem:[%s374 + $0x6e8] sm:$0xff]
        %v2458 = vld [vmem:[%s374 + $0x6f0] sm:$0xff]
        %v2459 = vld [vmem:[%s374 + $0x6f8] sm:$0xff]
        %v2460 = vld [vmem:[%s374 + $0x700] sm:$0xff]
        %v2461 = vld [vmem:[%s374 + $0x708] sm:$0xff]
        %v2462 = vld [vmem:[%s374 + $0x710] sm:$0xff]
        %v2463 = vld [vmem:[%s374 + $0x718] sm:$0xff]
        %v2464 = vld [vmem:[%s374 + $0x720] sm:$0xff]
        %v2465 = vld [vmem:[%s374 + $0x728] sm:$0xff]
        %v2466 = vld [vmem:[%s374 + $0x730] sm:$0xff]
        %v2467 = vld [vmem:[%s374 + $0x738] sm:$0xff]
        %v2468 = vld [vmem:[%s374 + $0x740] sm:$0xff]
        %v2469 = vld [vmem:[%s374 + $0x748] sm:$0xff]
        %v2470 = vld [vmem:[%s374 + $0x750] sm:$0xff]
        %v2471 = vld [vmem:[%s374 + $0x758] sm:$0xff]
        %v2472 = vld [vmem:[%s374 + $0x760] sm:$0xff]
        %v2473 = vld [vmem:[%s374 + $0x768] sm:$0xff]
        %v2474 = vld [vmem:[%s374 + $0x770] sm:$0xff]
        %v2475 = vld [vmem:[%s374 + $0x778] sm:$0xff]
        %v2476 = vld [vmem:[%s374 + $0x780] sm:$0xff]
        %v2477 = vld [vmem:[%s374 + $0x788] sm:$0xff]
        %v2478 = vld [vmem:[%s374 + $0x790] sm:$0xff]
        %v2479 = vld [vmem:[%s374 + $0x798] sm:$0xff]
        %v2480 = vld [vmem:[%s374 + $0x7a0] sm:$0xff]
        %v2481 = vld [vmem:[%s374 + $0x7a8] sm:$0xff]
        %v2482 = vld [vmem:[%s374 + $0x7b0] sm:$0xff]
        %v2483 = vld [vmem:[%s374 + $0x7b8] sm:$0xff]
        %v2484 = vld [vmem:[%s374 + $0x7c0] sm:$0xff]
        %v2485 = vld [vmem:[%s374 + $0x7c8] sm:$0xff]
        %v2486 = vld [vmem:[%s374 + $0x7d0] sm:$0xff]
        %v2487 = vld [vmem:[%s374 + $0x7d8] sm:$0xff]
        %v2488 = vld [vmem:[%s374 + $0x7e0] sm:$0xff]
        %v2489 = vld [vmem:[%s374 + $0x7e8] sm:$0xff]
        %v2490 = vld [vmem:[%s374 + $0x7f0] sm:$0xff]
        %v2491 = vld [vmem:[%s374 + $0x7f8] sm:$0xff]
        %2492 = vmatpush.msra.mxu0 %v2296
        %2493 = vmatpush.msra.mxu0 %v2292
        %2494 = vmatpush.msra.mxu0 %v2288
        %2495 = vmatpush.msra.mxu0 %v2284
        %2496 = vmatpush.msra.mxu0 %v2280
        %2497 = vmatpush.msra.mxu0 %v2276
        %2498 = vmatpush.msra.mxu0 %v2272
        %2499 = vmatpush.msra.mxu0 %v2268
        %2500 = vmatpush.msra.mxu0 %v2264
        %2501 = vmatpush.msra.mxu0 %v2260
        %2502 = vmatpush.msra.mxu0 %v2256
        %2503 = vmatpush.msra.mxu0 %v2252
        %2504 = vmatpush.msra.mxu0 %v2248
        %2505 = vmatpush.msra.mxu0 %v2244
        %2506 = vmatpush.msra.mxu0 %v2240
        %2507 = vmatpush.msra.mxu0 %v2236
        %2508 = vmatmul.f32.gmra.mxu0 %v2108
        %v2509 = vpop.f32.mrf.mxu0
        %v2510 = vadd.f32 0.0, %v2509
        %2511 = vmatmul.f32.gmra.mxu0 %v2112
        %v2512 = vpop.f32.mrf.mxu0
        %v2513 = vadd.f32 0.0, %v2512
        %2514 = vmatmul.f32.gmra.mxu0 %v2116
        %v2515 = vpop.f32.mrf.mxu0
        %v2516 = vadd.f32 0.0, %v2515
        %2517 = vmatmul.f32.gmra.mxu0 %v2120
        %v2518 = vpop.f32.mrf.mxu0
        %v2519 = vadd.f32 0.0, %v2518
        %2520 = vmatmul.f32.gmra.mxu0 %v2124
        %v2521 = vpop.f32.mrf.mxu0
        %v2522 = vadd.f32 0.0, %v2521
        %2523 = vmatmul.f32.gmra.mxu0 %v2128
        %v2524 = vpop.f32.mrf.mxu0
        %v2525 = vadd.f32 0.0, %v2524
        %2526 = vmatmul.f32.gmra.mxu0 %v2132
        %v2527 = vpop.f32.mrf.mxu0
        %v2528 = vadd.f32 0.0, %v2527
        %2529 = vmatmul.f32.gmra.mxu0 %v2136
        %v2530 = vpop.f32.mrf.mxu0
        %v2531 = vadd.f32 0.0, %v2530
        %2532 = vmatmul.f32.gmra.mxu0 %v2140
        %v2533 = vpop.f32.mrf.mxu0
        %v2534 = vadd.f32 0.0, %v2533
        %2535 = vmatmul.f32.gmra.mxu0 %v2144
        %v2536 = vpop.f32.mrf.mxu0
        %v2537 = vadd.f32 0.0, %v2536
        %2538 = vmatmul.f32.gmra.mxu0 %v2148
        %v2539 = vpop.f32.mrf.mxu0
        %v2540 = vadd.f32 0.0, %v2539
        %2541 = vmatmul.f32.gmra.mxu0 %v2152
        %v2542 = vpop.f32.mrf.mxu0
        %v2543 = vadd.f32 0.0, %v2542
        %2544 = vmatmul.f32.gmra.mxu0 %v2156
        %v2545 = vpop.f32.mrf.mxu0
        %v2546 = vadd.f32 0.0, %v2545
        %2547 = vmatmul.f32.gmra.mxu0 %v2160
        %v2548 = vpop.f32.mrf.mxu0
        %v2549 = vadd.f32 0.0, %v2548
        %2550 = vmatmul.f32.gmra.mxu0 %v2164
        %v2551 = vpop.f32.mrf.mxu0
        %v2552 = vadd.f32 0.0, %v2551
        %2553 = vmatmul.f32.gmra.mxu0 %v2168
        %v2554 = vpop.f32.mrf.mxu0
        %v2555 = vadd.f32 0.0, %v2554
        %2556 = vmatmul.f32.gmra.mxu0 %v2172
        %v2557 = vpop.f32.mrf.mxu0
        %v2558 = vadd.f32 0.0, %v2557
        %2559 = vmatmul.f32.gmra.mxu0 %v2176
        %v2560 = vpop.f32.mrf.mxu0
        %v2561 = vadd.f32 0.0, %v2560
        %2562 = vmatmul.f32.gmra.mxu0 %v2180
        %v2563 = vpop.f32.mrf.mxu0
        %v2564 = vadd.f32 0.0, %v2563
        %2565 = vmatmul.f32.gmra.mxu0 %v2184
        %v2566 = vpop.f32.mrf.mxu0
        %v2567 = vadd.f32 0.0, %v2566
        %2568 = vmatmul.f32.gmra.mxu0 %v2188
        %v2569 = vpop.f32.mrf.mxu0
        %v2570 = vadd.f32 0.0, %v2569
        %2571 = vmatmul.f32.gmra.mxu0 %v2192
        %v2572 = vpop.f32.mrf.mxu0
        %v2573 = vadd.f32 0.0, %v2572
        %2574 = vmatmul.f32.gmra.mxu0 %v2196
        %v2575 = vpop.f32.mrf.mxu0
        %v2576 = vadd.f32 0.0, %v2575
        %2577 = vmatmul.f32.gmra.mxu0 %v2200
        %v2578 = vpop.f32.mrf.mxu0
        %v2579 = vadd.f32 0.0, %v2578
        %2580 = vmatmul.f32.gmra.mxu0 %v2204
        %v2581 = vpop.f32.mrf.mxu0
        %v2582 = vadd.f32 0.0, %v2581
        %2583 = vmatmul.f32.gmra.mxu0 %v2208
        %v2584 = vpop.f32.mrf.mxu0
        %v2585 = vadd.f32 0.0, %v2584
        %2586 = vmatmul.f32.gmra.mxu0 %v2212
        %v2587 = vpop.f32.mrf.mxu0
        %v2588 = vadd.f32 0.0, %v2587
        %2589 = vmatmul.f32.gmra.mxu0 %v2216
        %v2590 = vpop.f32.mrf.mxu0
        %v2591 = vadd.f32 0.0, %v2590
        %2592 = vmatmul.f32.gmra.mxu0 %v2220
        %v2593 = vpop.f32.mrf.mxu0
        %v2594 = vadd.f32 0.0, %v2593
        %2595 = vmatmul.f32.gmra.mxu0 %v2224
        %v2596 = vpop.f32.mrf.mxu0
        %v2597 = vadd.f32 0.0, %v2596
        %2598 = vmatmul.f32.gmra.mxu0 %v2228
        %v2599 = vpop.f32.mrf.mxu0
        %v2600 = vadd.f32 0.0, %v2599
        %2601 = vmatmul.f32.gmra.mxu0 %v2232
        %v2602 = vpop.f32.mrf.mxu0
        %v2603 = vadd.f32 0.0, %v2602
        %2604 = vdwg.mxu0
        %2605 = vmatpush.msra.mxu0 %v2360
        %2606 = vmatpush.msra.mxu0 %v2356
        %2607 = vmatpush.msra.mxu0 %v2352
        %2608 = vmatpush.msra.mxu0 %v2348
        %2609 = vmatpush.msra.mxu0 %v2344
        %2610 = vmatpush.msra.mxu0 %v2340
        %2611 = vmatpush.msra.mxu0 %v2336
        %2612 = vmatpush.msra.mxu0 %v2332
        %2613 = vmatpush.msra.mxu0 %v2328
        %2614 = vmatpush.msra.mxu0 %v2324
        %2615 = vmatpush.msra.mxu0 %v2320
        %2616 = vmatpush.msra.mxu0 %v2316
        %2617 = vmatpush.msra.mxu0 %v2312
        %2618 = vmatpush.msra.mxu0 %v2308
        %2619 = vmatpush.msra.mxu0 %v2304
        %2620 = vmatpush.msra.mxu0 %v2300
        %2621 = vmatmul.f32.gmra.mxu0 %v2109
        %v2622 = vpop.f32.mrf.mxu0
        %v2623 = vadd.f32 %v2510, %v2622
        %2624 = vmatmul.f32.gmra.mxu0 %v2113
        %v2625 = vpop.f32.mrf.mxu0
        %v2626 = vadd.f32 %v2513, %v2625
        %2627 = vmatmul.f32.gmra.mxu0 %v2117
        %v2628 = vpop.f32.mrf.mxu0
        %v2629 = vadd.f32 %v2516, %v2628
        %2630 = vmatmul.f32.gmra.mxu0 %v2121
        %v2631 = vpop.f32.mrf.mxu0
        %v2632 = vadd.f32 %v2519, %v2631
        %2633 = vmatmul.f32.gmra.mxu0 %v2125
        %v2634 = vpop.f32.mrf.mxu0
        %v2635 = vadd.f32 %v2522, %v2634
        %2636 = vmatmul.f32.gmra.mxu0 %v2129
        %v2637 = vpop.f32.mrf.mxu0
        %v2638 = vadd.f32 %v2525, %v2637
        %2639 = vmatmul.f32.gmra.mxu0 %v2133
        %v2640 = vpop.f32.mrf.mxu0
        %v2641 = vadd.f32 %v2528, %v2640
        %2642 = vmatmul.f32.gmra.mxu0 %v2137
        %v2643 = vpop.f32.mrf.mxu0
        %v2644 = vadd.f32 %v2531, %v2643
        %2645 = vmatmul.f32.gmra.mxu0 %v2141
        %v2646 = vpop.f32.mrf.mxu0
        %v2647 = vadd.f32 %v2534, %v2646
        %2648 = vmatmul.f32.gmra.mxu0 %v2145
        %v2649 = vpop.f32.mrf.mxu0
        %v2650 = vadd.f32 %v2537, %v2649
        %2651 = vmatmul.f32.gmra.mxu0 %v2149
        %v2652 = vpop.f32.mrf.mxu0
        %v2653 = vadd.f32 %v2540, %v2652
        %2654 = vmatmul.f32.gmra.mxu0 %v2153
        %v2655 = vpop.f32.mrf.mxu0
        %v2656 = vadd.f32 %v2543, %v2655
        %2657 = vmatmul.f32.gmra.mxu0 %v2157
        %v2658 = vpop.f32.mrf.mxu0
        %v2659 = vadd.f32 %v2546, %v2658
        %2660 = vmatmul.f32.gmra.mxu0 %v2161
        %v2661 = vpop.f32.mrf.mxu0
        %v2662 = vadd.f32 %v2549, %v2661
        %2663 = vmatmul.f32.gmra.mxu0 %v2165
        %v2664 = vpop.f32.mrf.mxu0
        %v2665 = vadd.f32 %v2552, %v2664
        %2666 = vmatmul.f32.gmra.mxu0 %v2169
        %v2667 = vpop.f32.mrf.mxu0
        %v2668 = vadd.f32 %v2555, %v2667
        %2669 = vmatmul.f32.gmra.mxu0 %v2173
        %v2670 = vpop.f32.mrf.mxu0
        %v2671 = vadd.f32 %v2558, %v2670
        %2672 = vmatmul.f32.gmra.mxu0 %v2177
        %v2673 = vpop.f32.mrf.mxu0
        %v2674 = vadd.f32 %v2561, %v2673
        %2675 = vmatmul.f32.gmra.mxu0 %v2181
        %v2676 = vpop.f32.mrf.mxu0
        %v2677 = vadd.f32 %v2564, %v2676
        %2678 = vmatmul.f32.gmra.mxu0 %v2185
        %v2679 = vpop.f32.mrf.mxu0
        %v2680 = vadd.f32 %v2567, %v2679
        %2681 = vmatmul.f32.gmra.mxu0 %v2189
        %v2682 = vpop.f32.mrf.mxu0
        %v2683 = vadd.f32 %v2570, %v2682
        %2684 = vmatmul.f32.gmra.mxu0 %v2193
        %v2685 = vpop.f32.mrf.mxu0
        %v2686 = vadd.f32 %v2573, %v2685
        %2687 = vmatmul.f32.gmra.mxu0 %v2197
        %v2688 = vpop.f32.mrf.mxu0
        %v2689 = vadd.f32 %v2576, %v2688
        %2690 = vmatmul.f32.gmra.mxu0 %v2201
        %v2691 = vpop.f32.mrf.mxu0
        %v2692 = vadd.f32 %v2579, %v2691
        %2693 = vmatmul.f32.gmra.mxu0 %v2205
        %v2694 = vpop.f32.mrf.mxu0
        %v2695 = vadd.f32 %v2582, %v2694
        %2696 = vmatmul.f32.gmra.mxu0 %v2209
        %v2697 = vpop.f32.mrf.mxu0
        %v2698 = vadd.f32 %v2585, %v2697
        %2699 = vmatmul.f32.gmra.mxu0 %v2213
        %v2700 = vpop.f32.mrf.mxu0
        %v2701 = vadd.f32 %v2588, %v2700
        %2702 = vmatmul.f32.gmra.mxu0 %v2217
        %v2703 = vpop.f32.mrf.mxu0
        %v2704 = vadd.f32 %v2591, %v2703
        %2705 = vmatmul.f32.gmra.mxu0 %v2221
        %v2706 = vpop.f32.mrf.mxu0
        %v2707 = vadd.f32 %v2594, %v2706
        %2708 = vmatmul.f32.gmra.mxu0 %v2225
        %v2709 = vpop.f32.mrf.mxu0
        %v2710 = vadd.f32 %v2597, %v2709
        %2711 = vmatmul.f32.gmra.mxu0 %v2229
        %v2712 = vpop.f32.mrf.mxu0
        %v2713 = vadd.f32 %v2600, %v2712
        %2714 = vmatmul.f32.gmra.mxu0 %v2233
        %v2715 = vpop.f32.mrf.mxu0
        %v2716 = vadd.f32 %v2603, %v2715
        %2717 = vdwg.mxu0
        %2718 = vmatpush.msra.mxu0 %v2424
        %2719 = vmatpush.msra.mxu0 %v2420
        %2720 = vmatpush.msra.mxu0 %v2416
        %2721 = vmatpush.msra.mxu0 %v2412
        %2722 = vmatpush.msra.mxu0 %v2408
        %2723 = vmatpush.msra.mxu0 %v2404
        %2724 = vmatpush.msra.mxu0 %v2400
        %2725 = vmatpush.msra.mxu0 %v2396
        %2726 = vmatpush.msra.mxu0 %v2392
        %2727 = vmatpush.msra.mxu0 %v2388
        %2728 = vmatpush.msra.mxu0 %v2384
        %2729 = vmatpush.msra.mxu0 %v2380
        %2730 = vmatpush.msra.mxu0 %v2376
        %2731 = vmatpush.msra.mxu0 %v2372
        %2732 = vmatpush.msra.mxu0 %v2368
        %2733 = vmatpush.msra.mxu0 %v2364
        %2734 = vmatmul.f32.gmra.mxu0 %v2110
        %v2735 = vpop.f32.mrf.mxu0
        %v2736 = vadd.f32 %v2623, %v2735
        %2737 = vmatmul.f32.gmra.mxu0 %v2114
        %v2738 = vpop.f32.mrf.mxu0
        %v2739 = vadd.f32 %v2626, %v2738
        %2740 = vmatmul.f32.gmra.mxu0 %v2118
        %v2741 = vpop.f32.mrf.mxu0
        %v2742 = vadd.f32 %v2629, %v2741
        %2743 = vmatmul.f32.gmra.mxu0 %v2122
        %v2744 = vpop.f32.mrf.mxu0
        %v2745 = vadd.f32 %v2632, %v2744
        %2746 = vmatmul.f32.gmra.mxu0 %v2126
        %v2747 = vpop.f32.mrf.mxu0
        %v2748 = vadd.f32 %v2635, %v2747
        %2749 = vmatmul.f32.gmra.mxu0 %v2130
        %v2750 = vpop.f32.mrf.mxu0
        %v2751 = vadd.f32 %v2638, %v2750
        %2752 = vmatmul.f32.gmra.mxu0 %v2134
        %v2753 = vpop.f32.mrf.mxu0
        %v2754 = vadd.f32 %v2641, %v2753
        %2755 = vmatmul.f32.gmra.mxu0 %v2138
        %v2756 = vpop.f32.mrf.mxu0
        %v2757 = vadd.f32 %v2644, %v2756
        %2758 = vmatmul.f32.gmra.mxu0 %v2142
        %v2759 = vpop.f32.mrf.mxu0
        %v2760 = vadd.f32 %v2647, %v2759
        %2761 = vmatmul.f32.gmra.mxu0 %v2146
        %v2762 = vpop.f32.mrf.mxu0
        %v2763 = vadd.f32 %v2650, %v2762
        %2764 = vmatmul.f32.gmra.mxu0 %v2150
        %v2765 = vpop.f32.mrf.mxu0
        %v2766 = vadd.f32 %v2653, %v2765
        %2767 = vmatmul.f32.gmra.mxu0 %v2154
        %v2768 = vpop.f32.mrf.mxu0
        %v2769 = vadd.f32 %v2656, %v2768
        %2770 = vmatmul.f32.gmra.mxu0 %v2158
        %v2771 = vpop.f32.mrf.mxu0
        %v2772 = vadd.f32 %v2659, %v2771
        %2773 = vmatmul.f32.gmra.mxu0 %v2162
        %v2774 = vpop.f32.mrf.mxu0
        %v2775 = vadd.f32 %v2662, %v2774
        %2776 = vmatmul.f32.gmra.mxu0 %v2166
        %v2777 = vpop.f32.mrf.mxu0
        %v2778 = vadd.f32 %v2665, %v2777
        %2779 = vmatmul.f32.gmra.mxu0 %v2170
        %v2780 = vpop.f32.mrf.mxu0
        %v2781 = vadd.f32 %v2668, %v2780
        %2782 = vmatmul.f32.gmra.mxu0 %v2174
        %v2783 = vpop.f32.mrf.mxu0
        %v2784 = vadd.f32 %v2671, %v2783
        %2785 = vmatmul.f32.gmra.mxu0 %v2178
        %v2786 = vpop.f32.mrf.mxu0
        %v2787 = vadd.f32 %v2674, %v2786
        %2788 = vmatmul.f32.gmra.mxu0 %v2182
        %v2789 = vpop.f32.mrf.mxu0
        %v2790 = vadd.f32 %v2677, %v2789
        %2791 = vmatmul.f32.gmra.mxu0 %v2186
        %v2792 = vpop.f32.mrf.mxu0
        %v2793 = vadd.f32 %v2680, %v2792
        %2794 = vmatmul.f32.gmra.mxu0 %v2190
        %v2795 = vpop.f32.mrf.mxu0
        %v2796 = vadd.f32 %v2683, %v2795
        %2797 = vmatmul.f32.gmra.mxu0 %v2194
        %v2798 = vpop.f32.mrf.mxu0
        %v2799 = vadd.f32 %v2686, %v2798
        %2800 = vmatmul.f32.gmra.mxu0 %v2198
        %v2801 = vpop.f32.mrf.mxu0
        %v2802 = vadd.f32 %v2689, %v2801
        %2803 = vmatmul.f32.gmra.mxu0 %v2202
        %v2804 = vpop.f32.mrf.mxu0
        %v2805 = vadd.f32 %v2692, %v2804
        %2806 = vmatmul.f32.gmra.mxu0 %v2206
        %v2807 = vpop.f32.mrf.mxu0
        %v2808 = vadd.f32 %v2695, %v2807
        %2809 = vmatmul.f32.gmra.mxu0 %v2210
        %v2810 = vpop.f32.mrf.mxu0
        %v2811 = vadd.f32 %v2698, %v2810
        %2812 = vmatmul.f32.gmra.mxu0 %v2214
        %v2813 = vpop.f32.mrf.mxu0
        %v2814 = vadd.f32 %v2701, %v2813
        %2815 = vmatmul.f32.gmra.mxu0 %v2218
        %v2816 = vpop.f32.mrf.mxu0
        %v2817 = vadd.f32 %v2704, %v2816
        %2818 = vmatmul.f32.gmra.mxu0 %v2222
        %v2819 = vpop.f32.mrf.mxu0
        %v2820 = vadd.f32 %v2707, %v2819
        %2821 = vmatmul.f32.gmra.mxu0 %v2226
        %v2822 = vpop.f32.mrf.mxu0
        %v2823 = vadd.f32 %v2710, %v2822
        %2824 = vmatmul.f32.gmra.mxu0 %v2230
        %v2825 = vpop.f32.mrf.mxu0
        %v2826 = vadd.f32 %v2713, %v2825
        %2827 = vmatmul.f32.gmra.mxu0 %v2234
        %v2828 = vpop.f32.mrf.mxu0
        %v2829 = vadd.f32 %v2716, %v2828
        %2830 = vdwg.mxu0
        %2831 = vmatpush.msra.mxu0 %v2488
        %2832 = vmatpush.msra.mxu0 %v2484
        %2833 = vmatpush.msra.mxu0 %v2480
        %2834 = vmatpush.msra.mxu0 %v2476
        %2835 = vmatpush.msra.mxu0 %v2472
        %2836 = vmatpush.msra.mxu0 %v2468
        %2837 = vmatpush.msra.mxu0 %v2464
        %2838 = vmatpush.msra.mxu0 %v2460
        %2839 = vmatpush.msra.mxu0 %v2456
        %2840 = vmatpush.msra.mxu0 %v2452
        %2841 = vmatpush.msra.mxu0 %v2448
        %2842 = vmatpush.msra.mxu0 %v2444
        %2843 = vmatpush.msra.mxu0 %v2440
        %2844 = vmatpush.msra.mxu0 %v2436
        %2845 = vmatpush.msra.mxu0 %v2432
        %2846 = vmatpush.msra.mxu0 %v2428
        %2847 = vmatmul.f32.gmra.mxu0 %v2111
        %v2848 = vpop.f32.mrf.mxu0
        %v2849 = vadd.f32 %v2736, %v2848
        %2850 = vmatmul.f32.gmra.mxu0 %v2115
        %v2851 = vpop.f32.mrf.mxu0
        %v2852 = vadd.f32 %v2739, %v2851
        %2853 = vmatmul.f32.gmra.mxu0 %v2119
        %v2854 = vpop.f32.mrf.mxu0
        %v2855 = vadd.f32 %v2742, %v2854
        %2856 = vmatmul.f32.gmra.mxu0 %v2123
        %v2857 = vpop.f32.mrf.mxu0
        %v2858 = vadd.f32 %v2745, %v2857
        %2859 = vmatmul.f32.gmra.mxu0 %v2127
        %v2860 = vpop.f32.mrf.mxu0
        %v2861 = vadd.f32 %v2748, %v2860
        %2862 = vmatmul.f32.gmra.mxu0 %v2131
        %v2863 = vpop.f32.mrf.mxu0
        %v2864 = vadd.f32 %v2751, %v2863
        %2865 = vmatmul.f32.gmra.mxu0 %v2135
        %v2866 = vpop.f32.mrf.mxu0
        %v2867 = vadd.f32 %v2754, %v2866
        %2868 = vmatmul.f32.gmra.mxu0 %v2139
        %v2869 = vpop.f32.mrf.mxu0
        %v2870 = vadd.f32 %v2757, %v2869
        %2871 = vmatmul.f32.gmra.mxu0 %v2143
        %v2872 = vpop.f32.mrf.mxu0
        %v2873 = vadd.f32 %v2760, %v2872
        %2874 = vmatmul.f32.gmra.mxu0 %v2147
        %v2875 = vpop.f32.mrf.mxu0
        %v2876 = vadd.f32 %v2763, %v2875
        %2877 = vmatmul.f32.gmra.mxu0 %v2151
        %v2878 = vpop.f32.mrf.mxu0
        %v2879 = vadd.f32 %v2766, %v2878
        %2880 = vmatmul.f32.gmra.mxu0 %v2155
        %v2881 = vpop.f32.mrf.mxu0
        %v2882 = vadd.f32 %v2769, %v2881
        %2883 = vmatmul.f32.gmra.mxu0 %v2159
        %v2884 = vpop.f32.mrf.mxu0
        %v2885 = vadd.f32 %v2772, %v2884
        %2886 = vmatmul.f32.gmra.mxu0 %v2163
        %v2887 = vpop.f32.mrf.mxu0
        %v2888 = vadd.f32 %v2775, %v2887
        %2889 = vmatmul.f32.gmra.mxu0 %v2167
        %v2890 = vpop.f32.mrf.mxu0
        %v2891 = vadd.f32 %v2778, %v2890
        %2892 = vmatmul.f32.gmra.mxu0 %v2171
        %v2893 = vpop.f32.mrf.mxu0
        %v2894 = vadd.f32 %v2781, %v2893
        %2895 = vmatmul.f32.gmra.mxu0 %v2175
        %v2896 = vpop.f32.mrf.mxu0
        %v2897 = vadd.f32 %v2784, %v2896
        %2898 = vmatmul.f32.gmra.mxu0 %v2179
        %v2899 = vpop.f32.mrf.mxu0
        %v2900 = vadd.f32 %v2787, %v2899
        %2901 = vmatmul.f32.gmra.mxu0 %v2183
        %v2902 = vpop.f32.mrf.mxu0
        %v2903 = vadd.f32 %v2790, %v2902
        %2904 = vmatmul.f32.gmra.mxu0 %v2187
        %v2905 = vpop.f32.mrf.mxu0
        %v2906 = vadd.f32 %v2793, %v2905
        %2907 = vmatmul.f32.gmra.mxu0 %v2191
        %v2908 = vpop.f32.mrf.mxu0
        %v2909 = vadd.f32 %v2796, %v2908
        %2910 = vmatmul.f32.gmra.mxu0 %v2195
        %v2911 = vpop.f32.mrf.mxu0
        %v2912 = vadd.f32 %v2799, %v2911
        %2913 = vmatmul.f32.gmra.mxu0 %v2199
        %v2914 = vpop.f32.mrf.mxu0
        %v2915 = vadd.f32 %v2802, %v2914
        %2916 = vmatmul.f32.gmra.mxu0 %v2203
        %v2917 = vpop.f32.mrf.mxu0
        %v2918 = vadd.f32 %v2805, %v2917
        %2919 = vmatmul.f32.gmra.mxu0 %v2207
        %v2920 = vpop.f32.mrf.mxu0
        %v2921 = vadd.f32 %v2808, %v2920
        %2922 = vmatmul.f32.gmra.mxu0 %v2211
        %v2923 = vpop.f32.mrf.mxu0
        %v2924 = vadd.f32 %v2811, %v2923
        %2925 = vmatmul.f32.gmra.mxu0 %v2215
        %v2926 = vpop.f32.mrf.mxu0
        %v2927 = vadd.f32 %v2814, %v2926
        %2928 = vmatmul.f32.gmra.mxu0 %v2219
        %v2929 = vpop.f32.mrf.mxu0
        %v2930 = vadd.f32 %v2817, %v2929
        %2931 = vmatmul.f32.gmra.mxu0 %v2223
        %v2932 = vpop.f32.mrf.mxu0
        %v2933 = vadd.f32 %v2820, %v2932
        %2934 = vmatmul.f32.gmra.mxu0 %v2227
        %v2935 = vpop.f32.mrf.mxu0
        %v2936 = vadd.f32 %v2823, %v2935
        %2937 = vmatmul.f32.gmra.mxu0 %v2231
        %v2938 = vpop.f32.mrf.mxu0
        %v2939 = vadd.f32 %v2826, %v2938
        %2940 = vmatmul.f32.gmra.mxu0 %v2235
        %v2941 = vpop.f32.mrf.mxu0
        %v2942 = vadd.f32 %v2829, %v2941
        %2943 = vdwg.mxu0
        %2944 = vmatpush.msra.mxu0 %v2297
        %2945 = vmatpush.msra.mxu0 %v2293
        %2946 = vmatpush.msra.mxu0 %v2289
        %2947 = vmatpush.msra.mxu0 %v2285
        %2948 = vmatpush.msra.mxu0 %v2281
        %2949 = vmatpush.msra.mxu0 %v2277
        %2950 = vmatpush.msra.mxu0 %v2273
        %2951 = vmatpush.msra.mxu0 %v2269
        %2952 = vmatpush.msra.mxu0 %v2265
        %2953 = vmatpush.msra.mxu0 %v2261
        %2954 = vmatpush.msra.mxu0 %v2257
        %2955 = vmatpush.msra.mxu0 %v2253
        %2956 = vmatpush.msra.mxu0 %v2249
        %2957 = vmatpush.msra.mxu0 %v2245
        %2958 = vmatpush.msra.mxu0 %v2241
        %2959 = vmatpush.msra.mxu0 %v2237
        %2960 = vmatmul.f32.gmra.mxu0 %v2108
        %v2961 = vpop.f32.mrf.mxu0
        %v2962 = vadd.f32 0.0, %v2961
        %2963 = vmatmul.f32.gmra.mxu0 %v2112
        %v2964 = vpop.f32.mrf.mxu0
        %v2965 = vadd.f32 0.0, %v2964
        %2966 = vmatmul.f32.gmra.mxu0 %v2116
        %v2967 = vpop.f32.mrf.mxu0
        %v2968 = vadd.f32 0.0, %v2967
        %2969 = vmatmul.f32.gmra.mxu0 %v2120
        %v2970 = vpop.f32.mrf.mxu0
        %v2971 = vadd.f32 0.0, %v2970
        %2972 = vmatmul.f32.gmra.mxu0 %v2124
        %v2973 = vpop.f32.mrf.mxu0
        %v2974 = vadd.f32 0.0, %v2973
        %2975 = vmatmul.f32.gmra.mxu0 %v2128
        %v2976 = vpop.f32.mrf.mxu0
        %v2977 = vadd.f32 0.0, %v2976
        %2978 = vmatmul.f32.gmra.mxu0 %v2132
        %v2979 = vpop.f32.mrf.mxu0
        %v2980 = vadd.f32 0.0, %v2979
        %2981 = vmatmul.f32.gmra.mxu0 %v2136
        %v2982 = vpop.f32.mrf.mxu0
        %v2983 = vadd.f32 0.0, %v2982
        %2984 = vmatmul.f32.gmra.mxu0 %v2140
        %v2985 = vpop.f32.mrf.mxu0
        %v2986 = vadd.f32 0.0, %v2985
        %2987 = vmatmul.f32.gmra.mxu0 %v2144
        %v2988 = vpop.f32.mrf.mxu0
        %v2989 = vadd.f32 0.0, %v2988
        %2990 = vmatmul.f32.gmra.mxu0 %v2148
        %v2991 = vpop.f32.mrf.mxu0
        %v2992 = vadd.f32 0.0, %v2991
        %2993 = vmatmul.f32.gmra.mxu0 %v2152
        %v2994 = vpop.f32.mrf.mxu0
        %v2995 = vadd.f32 0.0, %v2994
        %2996 = vmatmul.f32.gmra.mxu0 %v2156
        %v2997 = vpop.f32.mrf.mxu0
        %v2998 = vadd.f32 0.0, %v2997
        %2999 = vmatmul.f32.gmra.mxu0 %v2160
        %v3000 = vpop.f32.mrf.mxu0
        %v3001 = vadd.f32 0.0, %v3000
        %3002 = vmatmul.f32.gmra.mxu0 %v2164
        %v3003 = vpop.f32.mrf.mxu0
        %v3004 = vadd.f32 0.0, %v3003
        %3005 = vmatmul.f32.gmra.mxu0 %v2168
        %v3006 = vpop.f32.mrf.mxu0
        %v3007 = vadd.f32 0.0, %v3006
        %3008 = vmatmul.f32.gmra.mxu0 %v2172
        %v3009 = vpop.f32.mrf.mxu0
        %v3010 = vadd.f32 0.0, %v3009
        %3011 = vmatmul.f32.gmra.mxu0 %v2176
        %v3012 = vpop.f32.mrf.mxu0
        %v3013 = vadd.f32 0.0, %v3012
        %3014 = vmatmul.f32.gmra.mxu0 %v2180
        %v3015 = vpop.f32.mrf.mxu0
        %v3016 = vadd.f32 0.0, %v3015
        %3017 = vmatmul.f32.gmra.mxu0 %v2184
        %v3018 = vpop.f32.mrf.mxu0
        %v3019 = vadd.f32 0.0, %v3018
        %3020 = vmatmul.f32.gmra.mxu0 %v2188
        %v3021 = vpop.f32.mrf.mxu0
        %v3022 = vadd.f32 0.0, %v3021
        %3023 = vmatmul.f32.gmra.mxu0 %v2192
        %v3024 = vpop.f32.mrf.mxu0
        %v3025 = vadd.f32 0.0, %v3024
        %3026 = vmatmul.f32.gmra.mxu0 %v2196
        %v3027 = vpop.f32.mrf.mxu0
        %v3028 = vadd.f32 0.0, %v3027
        %3029 = vmatmul.f32.gmra.mxu0 %v2200
        %v3030 = vpop.f32.mrf.mxu0
        %v3031 = vadd.f32 0.0, %v3030
        %3032 = vmatmul.f32.gmra.mxu0 %v2204
        %v3033 = vpop.f32.mrf.mxu0
        %v3034 = vadd.f32 0.0, %v3033
        %3035 = vmatmul.f32.gmra.mxu0 %v2208
        %v3036 = vpop.f32.mrf.mxu0
        %v3037 = vadd.f32 0.0, %v3036
        %3038 = vmatmul.f32.gmra.mxu0 %v2212
        %v3039 = vpop.f32.mrf.mxu0
        %v3040 = vadd.f32 0.0, %v3039
        %3041 = vmatmul.f32.gmra.mxu0 %v2216
        %v3042 = vpop.f32.mrf.mxu0
        %v3043 = vadd.f32 0.0, %v3042
        %3044 = vmatmul.f32.gmra.mxu0 %v2220
        %v3045 = vpop.f32.mrf.mxu0
        %v3046 = vadd.f32 0.0, %v3045
        %3047 = vmatmul.f32.gmra.mxu0 %v2224
        %v3048 = vpop.f32.mrf.mxu0
        %v3049 = vadd.f32 0.0, %v3048
        %3050 = vmatmul.f32.gmra.mxu0 %v2228
        %v3051 = vpop.f32.mrf.mxu0
        %v3052 = vadd.f32 0.0, %v3051
        %3053 = vmatmul.f32.gmra.mxu0 %v2232
        %v3054 = vpop.f32.mrf.mxu0
        %v3055 = vadd.f32 0.0, %v3054
        %3056 = vdwg.mxu0
        %3057 = vmatpush.msra.mxu0 %v2361
        %3058 = vmatpush.msra.mxu0 %v2357
        %3059 = vmatpush.msra.mxu0 %v2353
        %3060 = vmatpush.msra.mxu0 %v2349
        %3061 = vmatpush.msra.mxu0 %v2345
        %3062 = vmatpush.msra.mxu0 %v2341
        %3063 = vmatpush.msra.mxu0 %v2337
        %3064 = vmatpush.msra.mxu0 %v2333
        %3065 = vmatpush.msra.mxu0 %v2329
        %3066 = vmatpush.msra.mxu0 %v2325
        %3067 = vmatpush.msra.mxu0 %v2321
        %3068 = vmatpush.msra.mxu0 %v2317
        %3069 = vmatpush.msra.mxu0 %v2313
        %3070 = vmatpush.msra.mxu0 %v2309
        %3071 = vmatpush.msra.mxu0 %v2305
        %3072 = vmatpush.msra.mxu0 %v2301
        %3073 = vmatmul.f32.gmra.mxu0 %v2109
        %v3074 = vpop.f32.mrf.mxu0
        %v3075 = vadd.f32 %v2962, %v3074
        %3076 = vmatmul.f32.gmra.mxu0 %v2113
        %v3077 = vpop.f32.mrf.mxu0
        %v3078 = vadd.f32 %v2965, %v3077
        %3079 = vmatmul.f32.gmra.mxu0 %v2117
        %v3080 = vpop.f32.mrf.mxu0
        %v3081 = vadd.f32 %v2968, %v3080
        %3082 = vmatmul.f32.gmra.mxu0 %v2121
        %v3083 = vpop.f32.mrf.mxu0
        %v3084 = vadd.f32 %v2971, %v3083
        %3085 = vmatmul.f32.gmra.mxu0 %v2125
        %v3086 = vpop.f32.mrf.mxu0
        %v3087 = vadd.f32 %v2974, %v3086
        %3088 = vmatmul.f32.gmra.mxu0 %v2129
        %v3089 = vpop.f32.mrf.mxu0
        %v3090 = vadd.f32 %v2977, %v3089
        %3091 = vmatmul.f32.gmra.mxu0 %v2133
        %v3092 = vpop.f32.mrf.mxu0
        %v3093 = vadd.f32 %v2980, %v3092
        %3094 = vmatmul.f32.gmra.mxu0 %v2137
        %v3095 = vpop.f32.mrf.mxu0
        %v3096 = vadd.f32 %v2983, %v3095
        %3097 = vmatmul.f32.gmra.mxu0 %v2141
        %v3098 = vpop.f32.mrf.mxu0
        %v3099 = vadd.f32 %v2986, %v3098
        %3100 = vmatmul.f32.gmra.mxu0 %v2145
        %v3101 = vpop.f32.mrf.mxu0
        %v3102 = vadd.f32 %v2989, %v3101
        %3103 = vmatmul.f32.gmra.mxu0 %v2149
        %v3104 = vpop.f32.mrf.mxu0
        %v3105 = vadd.f32 %v2992, %v3104
        %3106 = vmatmul.f32.gmra.mxu0 %v2153
        %v3107 = vpop.f32.mrf.mxu0
        %v3108 = vadd.f32 %v2995, %v3107
        %3109 = vmatmul.f32.gmra.mxu0 %v2157
        %v3110 = vpop.f32.mrf.mxu0
        %v3111 = vadd.f32 %v2998, %v3110
        %3112 = vmatmul.f32.gmra.mxu0 %v2161
        %v3113 = vpop.f32.mrf.mxu0
        %v3114 = vadd.f32 %v3001, %v3113
        %3115 = vmatmul.f32.gmra.mxu0 %v2165
        %v3116 = vpop.f32.mrf.mxu0
        %v3117 = vadd.f32 %v3004, %v3116
        %3118 = vmatmul.f32.gmra.mxu0 %v2169
        %v3119 = vpop.f32.mrf.mxu0
        %v3120 = vadd.f32 %v3007, %v3119
        %3121 = vmatmul.f32.gmra.mxu0 %v2173
        %v3122 = vpop.f32.mrf.mxu0
        %v3123 = vadd.f32 %v3010, %v3122
        %3124 = vmatmul.f32.gmra.mxu0 %v2177
        %v3125 = vpop.f32.mrf.mxu0
        %v3126 = vadd.f32 %v3013, %v3125
        %3127 = vmatmul.f32.gmra.mxu0 %v2181
        %v3128 = vpop.f32.mrf.mxu0
        %v3129 = vadd.f32 %v3016, %v3128
        %3130 = vmatmul.f32.gmra.mxu0 %v2185
        %v3131 = vpop.f32.mrf.mxu0
        %v3132 = vadd.f32 %v3019, %v3131
        %3133 = vmatmul.f32.gmra.mxu0 %v2189
        %v3134 = vpop.f32.mrf.mxu0
        %v3135 = vadd.f32 %v3022, %v3134
        %3136 = vmatmul.f32.gmra.mxu0 %v2193
        %v3137 = vpop.f32.mrf.mxu0
        %v3138 = vadd.f32 %v3025, %v3137
        %3139 = vmatmul.f32.gmra.mxu0 %v2197
        %v3140 = vpop.f32.mrf.mxu0
        %v3141 = vadd.f32 %v3028, %v3140
        %3142 = vmatmul.f32.gmra.mxu0 %v2201
        %v3143 = vpop.f32.mrf.mxu0
        %v3144 = vadd.f32 %v3031, %v3143
        %3145 = vmatmul.f32.gmra.mxu0 %v2205
        %v3146 = vpop.f32.mrf.mxu0
        %v3147 = vadd.f32 %v3034, %v3146
        %3148 = vmatmul.f32.gmra.mxu0 %v2209
        %v3149 = vpop.f32.mrf.mxu0
        %v3150 = vadd.f32 %v3037, %v3149
        %3151 = vmatmul.f32.gmra.mxu0 %v2213
        %v3152 = vpop.f32.mrf.mxu0
        %v3153 = vadd.f32 %v3040, %v3152
        %3154 = vmatmul.f32.gmra.mxu0 %v2217
        %v3155 = vpop.f32.mrf.mxu0
        %v3156 = vadd.f32 %v3043, %v3155
        %3157 = vmatmul.f32.gmra.mxu0 %v2221
        %v3158 = vpop.f32.mrf.mxu0
        %v3159 = vadd.f32 %v3046, %v3158
        %3160 = vmatmul.f32.gmra.mxu0 %v2225
        %v3161 = vpop.f32.mrf.mxu0
        %v3162 = vadd.f32 %v3049, %v3161
        %3163 = vmatmul.f32.gmra.mxu0 %v2229
        %v3164 = vpop.f32.mrf.mxu0
        %v3165 = vadd.f32 %v3052, %v3164
        %3166 = vmatmul.f32.gmra.mxu0 %v2233
        %v3167 = vpop.f32.mrf.mxu0
        %v3168 = vadd.f32 %v3055, %v3167
        %3169 = vdwg.mxu0
        %3170 = vmatpush.msra.mxu0 %v2425
        %3171 = vmatpush.msra.mxu0 %v2421
        %3172 = vmatpush.msra.mxu0 %v2417
        %3173 = vmatpush.msra.mxu0 %v2413
        %3174 = vmatpush.msra.mxu0 %v2409
        %3175 = vmatpush.msra.mxu0 %v2405
        %3176 = vmatpush.msra.mxu0 %v2401
        %3177 = vmatpush.msra.mxu0 %v2397
        %3178 = vmatpush.msra.mxu0 %v2393
        %3179 = vmatpush.msra.mxu0 %v2389
        %3180 = vmatpush.msra.mxu0 %v2385
        %3181 = vmatpush.msra.mxu0 %v2381
        %3182 = vmatpush.msra.mxu0 %v2377
        %3183 = vmatpush.msra.mxu0 %v2373
        %3184 = vmatpush.msra.mxu0 %v2369
        %3185 = vmatpush.msra.mxu0 %v2365
        %3186 = vmatmul.f32.gmra.mxu0 %v2110
        %v3187 = vpop.f32.mrf.mxu0
        %v3188 = vadd.f32 %v3075, %v3187
        %3189 = vmatmul.f32.gmra.mxu0 %v2114
        %v3190 = vpop.f32.mrf.mxu0
        %v3191 = vadd.f32 %v3078, %v3190
        %3192 = vmatmul.f32.gmra.mxu0 %v2118
        %v3193 = vpop.f32.mrf.mxu0
        %v3194 = vadd.f32 %v3081, %v3193
        %3195 = vmatmul.f32.gmra.mxu0 %v2122
        %v3196 = vpop.f32.mrf.mxu0
        %v3197 = vadd.f32 %v3084, %v3196
        %3198 = vmatmul.f32.gmra.mxu0 %v2126
        %v3199 = vpop.f32.mrf.mxu0
        %v3200 = vadd.f32 %v3087, %v3199
        %3201 = vmatmul.f32.gmra.mxu0 %v2130
        %v3202 = vpop.f32.mrf.mxu0
        %v3203 = vadd.f32 %v3090, %v3202
        %3204 = vmatmul.f32.gmra.mxu0 %v2134
        %v3205 = vpop.f32.mrf.mxu0
        %v3206 = vadd.f32 %v3093, %v3205
        %3207 = vmatmul.f32.gmra.mxu0 %v2138
        %v3208 = vpop.f32.mrf.mxu0
        %v3209 = vadd.f32 %v3096, %v3208
        %3210 = vmatmul.f32.gmra.mxu0 %v2142
        %v3211 = vpop.f32.mrf.mxu0
        %v3212 = vadd.f32 %v3099, %v3211
        %3213 = vmatmul.f32.gmra.mxu0 %v2146
        %v3214 = vpop.f32.mrf.mxu0
        %v3215 = vadd.f32 %v3102, %v3214
        %3216 = vmatmul.f32.gmra.mxu0 %v2150
        %v3217 = vpop.f32.mrf.mxu0
        %v3218 = vadd.f32 %v3105, %v3217
        %3219 = vmatmul.f32.gmra.mxu0 %v2154
        %v3220 = vpop.f32.mrf.mxu0
        %v3221 = vadd.f32 %v3108, %v3220
        %3222 = vmatmul.f32.gmra.mxu0 %v2158
        %v3223 = vpop.f32.mrf.mxu0
        %v3224 = vadd.f32 %v3111, %v3223
        %3225 = vmatmul.f32.gmra.mxu0 %v2162
        %v3226 = vpop.f32.mrf.mxu0
        %v3227 = vadd.f32 %v3114, %v3226
        %3228 = vmatmul.f32.gmra.mxu0 %v2166
        %v3229 = vpop.f32.mrf.mxu0
        %v3230 = vadd.f32 %v3117, %v3229
        %3231 = vmatmul.f32.gmra.mxu0 %v2170
        %v3232 = vpop.f32.mrf.mxu0
        %v3233 = vadd.f32 %v3120, %v3232
        %3234 = vmatmul.f32.gmra.mxu0 %v2174
        %v3235 = vpop.f32.mrf.mxu0
        %v3236 = vadd.f32 %v3123, %v3235
        %3237 = vmatmul.f32.gmra.mxu0 %v2178
        %v3238 = vpop.f32.mrf.mxu0
        %v3239 = vadd.f32 %v3126, %v3238
        %3240 = vmatmul.f32.gmra.mxu0 %v2182
        %v3241 = vpop.f32.mrf.mxu0
        %v3242 = vadd.f32 %v3129, %v3241
        %3243 = vmatmul.f32.gmra.mxu0 %v2186
        %v3244 = vpop.f32.mrf.mxu0
        %v3245 = vadd.f32 %v3132, %v3244
        %3246 = vmatmul.f32.gmra.mxu0 %v2190
        %v3247 = vpop.f32.mrf.mxu0
        %v3248 = vadd.f32 %v3135, %v3247
        %3249 = vmatmul.f32.gmra.mxu0 %v2194
        %v3250 = vpop.f32.mrf.mxu0
        %v3251 = vadd.f32 %v3138, %v3250
        %3252 = vmatmul.f32.gmra.mxu0 %v2198
        %v3253 = vpop.f32.mrf.mxu0
        %v3254 = vadd.f32 %v3141, %v3253
        %3255 = vmatmul.f32.gmra.mxu0 %v2202
        %v3256 = vpop.f32.mrf.mxu0
        %v3257 = vadd.f32 %v3144, %v3256
        %3258 = vmatmul.f32.gmra.mxu0 %v2206
        %v3259 = vpop.f32.mrf.mxu0
        %v3260 = vadd.f32 %v3147, %v3259
        %3261 = vmatmul.f32.gmra.mxu0 %v2210
        %v3262 = vpop.f32.mrf.mxu0
        %v3263 = vadd.f32 %v3150, %v3262
        %3264 = vmatmul.f32.gmra.mxu0 %v2214
        %v3265 = vpop.f32.mrf.mxu0
        %v3266 = vadd.f32 %v3153, %v3265
        %3267 = vmatmul.f32.gmra.mxu0 %v2218
        %v3268 = vpop.f32.mrf.mxu0
        %v3269 = vadd.f32 %v3156, %v3268
        %3270 = vmatmul.f32.gmra.mxu0 %v2222
        %v3271 = vpop.f32.mrf.mxu0
        %v3272 = vadd.f32 %v3159, %v3271
        %3273 = vmatmul.f32.gmra.mxu0 %v2226
        %v3274 = vpop.f32.mrf.mxu0
        %v3275 = vadd.f32 %v3162, %v3274
        %3276 = vmatmul.f32.gmra.mxu0 %v2230
        %v3277 = vpop.f32.mrf.mxu0
        %v3278 = vadd.f32 %v3165, %v3277
        %3279 = vmatmul.f32.gmra.mxu0 %v2234
        %v3280 = vpop.f32.mrf.mxu0
        %v3281 = vadd.f32 %v3168, %v3280
        %3282 = vdwg.mxu0
        %3283 = vmatpush.msra.mxu0 %v2489
        %3284 = vmatpush.msra.mxu0 %v2485
        %3285 = vmatpush.msra.mxu0 %v2481
        %3286 = vmatpush.msra.mxu0 %v2477
        %3287 = vmatpush.msra.mxu0 %v2473
        %3288 = vmatpush.msra.mxu0 %v2469
        %3289 = vmatpush.msra.mxu0 %v2465
        %3290 = vmatpush.msra.mxu0 %v2461
        %3291 = vmatpush.msra.mxu0 %v2457
        %3292 = vmatpush.msra.mxu0 %v2453
        %3293 = vmatpush.msra.mxu0 %v2449
        %3294 = vmatpush.msra.mxu0 %v2445
        %3295 = vmatpush.msra.mxu0 %v2441
        %3296 = vmatpush.msra.mxu0 %v2437
        %3297 = vmatpush.msra.mxu0 %v2433
        %3298 = vmatpush.msra.mxu0 %v2429
        %3299 = vmatmul.f32.gmra.mxu0 %v2111
        %v3300 = vpop.f32.mrf.mxu0
        %v3301 = vadd.f32 %v3188, %v3300
        %3302 = vmatmul.f32.gmra.mxu0 %v2115
        %v3303 = vpop.f32.mrf.mxu0
        %v3304 = vadd.f32 %v3191, %v3303
        %3305 = vmatmul.f32.gmra.mxu0 %v2119
        %v3306 = vpop.f32.mrf.mxu0
        %v3307 = vadd.f32 %v3194, %v3306
        %3308 = vmatmul.f32.gmra.mxu0 %v2123
        %v3309 = vpop.f32.mrf.mxu0
        %v3310 = vadd.f32 %v3197, %v3309
        %3311 = vmatmul.f32.gmra.mxu0 %v2127
        %v3312 = vpop.f32.mrf.mxu0
        %v3313 = vadd.f32 %v3200, %v3312
        %3314 = vmatmul.f32.gmra.mxu0 %v2131
        %v3315 = vpop.f32.mrf.mxu0
        %v3316 = vadd.f32 %v3203, %v3315
        %3317 = vmatmul.f32.gmra.mxu0 %v2135
        %v3318 = vpop.f32.mrf.mxu0
        %v3319 = vadd.f32 %v3206, %v3318
        %3320 = vmatmul.f32.gmra.mxu0 %v2139
        %v3321 = vpop.f32.mrf.mxu0
        %v3322 = vadd.f32 %v3209, %v3321
        %3323 = vmatmul.f32.gmra.mxu0 %v2143
        %v3324 = vpop.f32.mrf.mxu0
        %v3325 = vadd.f32 %v3212, %v3324
        %3326 = vmatmul.f32.gmra.mxu0 %v2147
        %v3327 = vpop.f32.mrf.mxu0
        %v3328 = vadd.f32 %v3215, %v3327
        %3329 = vmatmul.f32.gmra.mxu0 %v2151
        %v3330 = vpop.f32.mrf.mxu0
        %v3331 = vadd.f32 %v3218, %v3330
        %3332 = vmatmul.f32.gmra.mxu0 %v2155
        %v3333 = vpop.f32.mrf.mxu0
        %v3334 = vadd.f32 %v3221, %v3333
        %3335 = vmatmul.f32.gmra.mxu0 %v2159
        %v3336 = vpop.f32.mrf.mxu0
        %v3337 = vadd.f32 %v3224, %v3336
        %3338 = vmatmul.f32.gmra.mxu0 %v2163
        %v3339 = vpop.f32.mrf.mxu0
        %v3340 = vadd.f32 %v3227, %v3339
        %3341 = vmatmul.f32.gmra.mxu0 %v2167
        %v3342 = vpop.f32.mrf.mxu0
        %v3343 = vadd.f32 %v3230, %v3342
        %3344 = vmatmul.f32.gmra.mxu0 %v2171
        %v3345 = vpop.f32.mrf.mxu0
        %v3346 = vadd.f32 %v3233, %v3345
        %3347 = vmatmul.f32.gmra.mxu0 %v2175
        %v3348 = vpop.f32.mrf.mxu0
        %v3349 = vadd.f32 %v3236, %v3348
        %3350 = vmatmul.f32.gmra.mxu0 %v2179
        %v3351 = vpop.f32.mrf.mxu0
        %v3352 = vadd.f32 %v3239, %v3351
        %3353 = vmatmul.f32.gmra.mxu0 %v2183
        %v3354 = vpop.f32.mrf.mxu0
        %v3355 = vadd.f32 %v3242, %v3354
        %3356 = vmatmul.f32.gmra.mxu0 %v2187
        %v3357 = vpop.f32.mrf.mxu0
        %v3358 = vadd.f32 %v3245, %v3357
        %3359 = vmatmul.f32.gmra.mxu0 %v2191
        %v3360 = vpop.f32.mrf.mxu0
        %v3361 = vadd.f32 %v3248, %v3360
        %3362 = vmatmul.f32.gmra.mxu0 %v2195
        %v3363 = vpop.f32.mrf.mxu0
        %v3364 = vadd.f32 %v3251, %v3363
        %3365 = vmatmul.f32.gmra.mxu0 %v2199
        %v3366 = vpop.f32.mrf.mxu0
        %v3367 = vadd.f32 %v3254, %v3366
        %3368 = vmatmul.f32.gmra.mxu0 %v2203
        %v3369 = vpop.f32.mrf.mxu0
        %v3370 = vadd.f32 %v3257, %v3369
        %3371 = vmatmul.f32.gmra.mxu0 %v2207
        %v3372 = vpop.f32.mrf.mxu0
        %v3373 = vadd.f32 %v3260, %v3372
        %3374 = vmatmul.f32.gmra.mxu0 %v2211
        %v3375 = vpop.f32.mrf.mxu0
        %v3376 = vadd.f32 %v3263, %v3375
        %3377 = vmatmul.f32.gmra.mxu0 %v2215
        %v3378 = vpop.f32.mrf.mxu0
        %v3379 = vadd.f32 %v3266, %v3378
        %3380 = vmatmul.f32.gmra.mxu0 %v2219
        %v3381 = vpop.f32.mrf.mxu0
        %v3382 = vadd.f32 %v3269, %v3381
        %3383 = vmatmul.f32.gmra.mxu0 %v2223
        %v3384 = vpop.f32.mrf.mxu0
        %v3385 = vadd.f32 %v3272, %v3384
        %3386 = vmatmul.f32.gmra.mxu0 %v2227
        %v3387 = vpop.f32.mrf.mxu0
        %v3388 = vadd.f32 %v3275, %v3387
        %3389 = vmatmul.f32.gmra.mxu0 %v2231
        %v3390 = vpop.f32.mrf.mxu0
        %v3391 = vadd.f32 %v3278, %v3390
        %3392 = vmatmul.f32.gmra.mxu0 %v2235
        %v3393 = vpop.f32.mrf.mxu0
        %v3394 = vadd.f32 %v3281, %v3393
        %3395 = vdwg.mxu0
        %3396 = vmatpush.msra.mxu0 %v2298
        %3397 = vmatpush.msra.mxu0 %v2294
        %3398 = vmatpush.msra.mxu0 %v2290
        %3399 = vmatpush.msra.mxu0 %v2286
        %3400 = vmatpush.msra.mxu0 %v2282
        %3401 = vmatpush.msra.mxu0 %v2278
        %3402 = vmatpush.msra.mxu0 %v2274
        %3403 = vmatpush.msra.mxu0 %v2270
        %3404 = vmatpush.msra.mxu0 %v2266
        %3405 = vmatpush.msra.mxu0 %v2262
        %3406 = vmatpush.msra.mxu0 %v2258
        %3407 = vmatpush.msra.mxu0 %v2254
        %3408 = vmatpush.msra.mxu0 %v2250
        %3409 = vmatpush.msra.mxu0 %v2246
        %3410 = vmatpush.msra.mxu0 %v2242
        %3411 = vmatpush.msra.mxu0 %v2238
        %3412 = vmatmul.f32.gmra.mxu0 %v2108
        %v3413 = vpop.f32.mrf.mxu0
        %v3414 = vadd.f32 0.0, %v3413
        %3415 = vmatmul.f32.gmra.mxu0 %v2112
        %v3416 = vpop.f32.mrf.mxu0
        %v3417 = vadd.f32 0.0, %v3416
        %3418 = vmatmul.f32.gmra.mxu0 %v2116
        %v3419 = vpop.f32.mrf.mxu0
        %v3420 = vadd.f32 0.0, %v3419
        %3421 = vmatmul.f32.gmra.mxu0 %v2120
        %v3422 = vpop.f32.mrf.mxu0
        %v3423 = vadd.f32 0.0, %v3422
        %3424 = vmatmul.f32.gmra.mxu0 %v2124
        %v3425 = vpop.f32.mrf.mxu0
        %v3426 = vadd.f32 0.0, %v3425
        %3427 = vmatmul.f32.gmra.mxu0 %v2128
        %v3428 = vpop.f32.mrf.mxu0
        %v3429 = vadd.f32 0.0, %v3428
        %3430 = vmatmul.f32.gmra.mxu0 %v2132
        %v3431 = vpop.f32.mrf.mxu0
        %v3432 = vadd.f32 0.0, %v3431
        %3433 = vmatmul.f32.gmra.mxu0 %v2136
        %v3434 = vpop.f32.mrf.mxu0
        %v3435 = vadd.f32 0.0, %v3434
        %3436 = vmatmul.f32.gmra.mxu0 %v2140
        %v3437 = vpop.f32.mrf.mxu0
        %v3438 = vadd.f32 0.0, %v3437
        %3439 = vmatmul.f32.gmra.mxu0 %v2144
        %v3440 = vpop.f32.mrf.mxu0
        %v3441 = vadd.f32 0.0, %v3440
        %3442 = vmatmul.f32.gmra.mxu0 %v2148
        %v3443 = vpop.f32.mrf.mxu0
        %v3444 = vadd.f32 0.0, %v3443
        %3445 = vmatmul.f32.gmra.mxu0 %v2152
        %v3446 = vpop.f32.mrf.mxu0
        %v3447 = vadd.f32 0.0, %v3446
        %3448 = vmatmul.f32.gmra.mxu0 %v2156
        %v3449 = vpop.f32.mrf.mxu0
        %v3450 = vadd.f32 0.0, %v3449
        %3451 = vmatmul.f32.gmra.mxu0 %v2160
        %v3452 = vpop.f32.mrf.mxu0
        %v3453 = vadd.f32 0.0, %v3452
        %3454 = vmatmul.f32.gmra.mxu0 %v2164
        %v3455 = vpop.f32.mrf.mxu0
        %v3456 = vadd.f32 0.0, %v3455
        %3457 = vmatmul.f32.gmra.mxu0 %v2168
        %v3458 = vpop.f32.mrf.mxu0
        %v3459 = vadd.f32 0.0, %v3458
        %3460 = vmatmul.f32.gmra.mxu0 %v2172
        %v3461 = vpop.f32.mrf.mxu0
        %v3462 = vadd.f32 0.0, %v3461
        %3463 = vmatmul.f32.gmra.mxu0 %v2176
        %v3464 = vpop.f32.mrf.mxu0
        %v3465 = vadd.f32 0.0, %v3464
        %3466 = vmatmul.f32.gmra.mxu0 %v2180
        %v3467 = vpop.f32.mrf.mxu0
        %v3468 = vadd.f32 0.0, %v3467
        %3469 = vmatmul.f32.gmra.mxu0 %v2184
        %v3470 = vpop.f32.mrf.mxu0
        %v3471 = vadd.f32 0.0, %v3470
        %3472 = vmatmul.f32.gmra.mxu0 %v2188
        %v3473 = vpop.f32.mrf.mxu0
        %v3474 = vadd.f32 0.0, %v3473
        %3475 = vmatmul.f32.gmra.mxu0 %v2192
        %v3476 = vpop.f32.mrf.mxu0
        %v3477 = vadd.f32 0.0, %v3476
        %3478 = vmatmul.f32.gmra.mxu0 %v2196
        %v3479 = vpop.f32.mrf.mxu0
        %v3480 = vadd.f32 0.0, %v3479
        %3481 = vmatmul.f32.gmra.mxu0 %v2200
        %v3482 = vpop.f32.mrf.mxu0
        %v3483 = vadd.f32 0.0, %v3482
        %3484 = vmatmul.f32.gmra.mxu0 %v2204
        %v3485 = vpop.f32.mrf.mxu0
        %v3486 = vadd.f32 0.0, %v3485
        %3487 = vmatmul.f32.gmra.mxu0 %v2208
        %v3488 = vpop.f32.mrf.mxu0
        %v3489 = vadd.f32 0.0, %v3488
        %3490 = vmatmul.f32.gmra.mxu0 %v2212
        %v3491 = vpop.f32.mrf.mxu0
        %v3492 = vadd.f32 0.0, %v3491
        %3493 = vmatmul.f32.gmra.mxu0 %v2216
        %v3494 = vpop.f32.mrf.mxu0
        %v3495 = vadd.f32 0.0, %v3494
        %3496 = vmatmul.f32.gmra.mxu0 %v2220
        %v3497 = vpop.f32.mrf.mxu0
        %v3498 = vadd.f32 0.0, %v3497
        %3499 = vmatmul.f32.gmra.mxu0 %v2224
        %v3500 = vpop.f32.mrf.mxu0
        %v3501 = vadd.f32 0.0, %v3500
        %3502 = vmatmul.f32.gmra.mxu0 %v2228
        %v3503 = vpop.f32.mrf.mxu0
        %v3504 = vadd.f32 0.0, %v3503
        %3505 = vmatmul.f32.gmra.mxu0 %v2232
        %v3506 = vpop.f32.mrf.mxu0
        %v3507 = vadd.f32 0.0, %v3506
        %3508 = vdwg.mxu0
        %3509 = vmatpush.msra.mxu0 %v2362
        %3510 = vmatpush.msra.mxu0 %v2358
        %3511 = vmatpush.msra.mxu0 %v2354
        %3512 = vmatpush.msra.mxu0 %v2350
        %3513 = vmatpush.msra.mxu0 %v2346
        %3514 = vmatpush.msra.mxu0 %v2342
        %3515 = vmatpush.msra.mxu0 %v2338
        %3516 = vmatpush.msra.mxu0 %v2334
        %3517 = vmatpush.msra.mxu0 %v2330
        %3518 = vmatpush.msra.mxu0 %v2326
        %3519 = vmatpush.msra.mxu0 %v2322
        %3520 = vmatpush.msra.mxu0 %v2318
        %3521 = vmatpush.msra.mxu0 %v2314
        %3522 = vmatpush.msra.mxu0 %v2310
        %3523 = vmatpush.msra.mxu0 %v2306
        %3524 = vmatpush.msra.mxu0 %v2302
        %3525 = vmatmul.f32.gmra.mxu0 %v2109
        %v3526 = vpop.f32.mrf.mxu0
        %v3527 = vadd.f32 %v3414, %v3526
        %3528 = vmatmul.f32.gmra.mxu0 %v2113
        %v3529 = vpop.f32.mrf.mxu0
        %v3530 = vadd.f32 %v3417, %v3529
        %3531 = vmatmul.f32.gmra.mxu0 %v2117
        %v3532 = vpop.f32.mrf.mxu0
        %v3533 = vadd.f32 %v3420, %v3532
        %3534 = vmatmul.f32.gmra.mxu0 %v2121
        %v3535 = vpop.f32.mrf.mxu0
        %v3536 = vadd.f32 %v3423, %v3535
        %3537 = vmatmul.f32.gmra.mxu0 %v2125
        %v3538 = vpop.f32.mrf.mxu0
        %v3539 = vadd.f32 %v3426, %v3538
        %3540 = vmatmul.f32.gmra.mxu0 %v2129
        %v3541 = vpop.f32.mrf.mxu0
        %v3542 = vadd.f32 %v3429, %v3541
        %3543 = vmatmul.f32.gmra.mxu0 %v2133
        %v3544 = vpop.f32.mrf.mxu0
        %v3545 = vadd.f32 %v3432, %v3544
        %3546 = vmatmul.f32.gmra.mxu0 %v2137
        %v3547 = vpop.f32.mrf.mxu0
        %v3548 = vadd.f32 %v3435, %v3547
        %3549 = vmatmul.f32.gmra.mxu0 %v2141
        %v3550 = vpop.f32.mrf.mxu0
        %v3551 = vadd.f32 %v3438, %v3550
        %3552 = vmatmul.f32.gmra.mxu0 %v2145
        %v3553 = vpop.f32.mrf.mxu0
        %v3554 = vadd.f32 %v3441, %v3553
        %3555 = vmatmul.f32.gmra.mxu0 %v2149
        %v3556 = vpop.f32.mrf.mxu0
        %v3557 = vadd.f32 %v3444, %v3556
        %3558 = vmatmul.f32.gmra.mxu0 %v2153
        %v3559 = vpop.f32.mrf.mxu0
        %v3560 = vadd.f32 %v3447, %v3559
        %3561 = vmatmul.f32.gmra.mxu0 %v2157
        %v3562 = vpop.f32.mrf.mxu0
        %v3563 = vadd.f32 %v3450, %v3562
        %3564 = vmatmul.f32.gmra.mxu0 %v2161
        %v3565 = vpop.f32.mrf.mxu0
        %v3566 = vadd.f32 %v3453, %v3565
        %3567 = vmatmul.f32.gmra.mxu0 %v2165
        %v3568 = vpop.f32.mrf.mxu0
        %v3569 = vadd.f32 %v3456, %v3568
        %3570 = vmatmul.f32.gmra.mxu0 %v2169
        %v3571 = vpop.f32.mrf.mxu0
        %v3572 = vadd.f32 %v3459, %v3571
        %3573 = vmatmul.f32.gmra.mxu0 %v2173
        %v3574 = vpop.f32.mrf.mxu0
        %v3575 = vadd.f32 %v3462, %v3574
        %3576 = vmatmul.f32.gmra.mxu0 %v2177
        %v3577 = vpop.f32.mrf.mxu0
        %v3578 = vadd.f32 %v3465, %v3577
        %3579 = vmatmul.f32.gmra.mxu0 %v2181
        %v3580 = vpop.f32.mrf.mxu0
        %v3581 = vadd.f32 %v3468, %v3580
        %3582 = vmatmul.f32.gmra.mxu0 %v2185
        %v3583 = vpop.f32.mrf.mxu0
        %v3584 = vadd.f32 %v3471, %v3583
        %3585 = vmatmul.f32.gmra.mxu0 %v2189
        %v3586 = vpop.f32.mrf.mxu0
        %v3587 = vadd.f32 %v3474, %v3586
        %3588 = vmatmul.f32.gmra.mxu0 %v2193
        %v3589 = vpop.f32.mrf.mxu0
        %v3590 = vadd.f32 %v3477, %v3589
        %3591 = vmatmul.f32.gmra.mxu0 %v2197
        %v3592 = vpop.f32.mrf.mxu0
        %v3593 = vadd.f32 %v3480, %v3592
        %3594 = vmatmul.f32.gmra.mxu0 %v2201
        %v3595 = vpop.f32.mrf.mxu0
        %v3596 = vadd.f32 %v3483, %v3595
        %3597 = vmatmul.f32.gmra.mxu0 %v2205
        %v3598 = vpop.f32.mrf.mxu0
        %v3599 = vadd.f32 %v3486, %v3598
        %3600 = vmatmul.f32.gmra.mxu0 %v2209
        %v3601 = vpop.f32.mrf.mxu0
        %v3602 = vadd.f32 %v3489, %v3601
        %3603 = vmatmul.f32.gmra.mxu0 %v2213
        %v3604 = vpop.f32.mrf.mxu0
        %v3605 = vadd.f32 %v3492, %v3604
        %3606 = vmatmul.f32.gmra.mxu0 %v2217
        %v3607 = vpop.f32.mrf.mxu0
        %v3608 = vadd.f32 %v3495, %v3607
        %3609 = vmatmul.f32.gmra.mxu0 %v2221
        %v3610 = vpop.f32.mrf.mxu0
        %v3611 = vadd.f32 %v3498, %v3610
        %3612 = vmatmul.f32.gmra.mxu0 %v2225
        %v3613 = vpop.f32.mrf.mxu0
        %v3614 = vadd.f32 %v3501, %v3613
        %3615 = vmatmul.f32.gmra.mxu0 %v2229
        %v3616 = vpop.f32.mrf.mxu0
        %v3617 = vadd.f32 %v3504, %v3616
        %3618 = vmatmul.f32.gmra.mxu0 %v2233
        %v3619 = vpop.f32.mrf.mxu0
        %v3620 = vadd.f32 %v3507, %v3619
        %3621 = vdwg.mxu0
        %3622 = vmatpush.msra.mxu0 %v2426
        %3623 = vmatpush.msra.mxu0 %v2422
        %3624 = vmatpush.msra.mxu0 %v2418
        %3625 = vmatpush.msra.mxu0 %v2414
        %3626 = vmatpush.msra.mxu0 %v2410
        %3627 = vmatpush.msra.mxu0 %v2406
        %3628 = vmatpush.msra.mxu0 %v2402
        %3629 = vmatpush.msra.mxu0 %v2398
        %3630 = vmatpush.msra.mxu0 %v2394
        %3631 = vmatpush.msra.mxu0 %v2390
        %3632 = vmatpush.msra.mxu0 %v2386
        %3633 = vmatpush.msra.mxu0 %v2382
        %3634 = vmatpush.msra.mxu0 %v2378
        %3635 = vmatpush.msra.mxu0 %v2374
        %3636 = vmatpush.msra.mxu0 %v2370
        %3637 = vmatpush.msra.mxu0 %v2366
        %3638 = vmatmul.f32.gmra.mxu0 %v2110
        %v3639 = vpop.f32.mrf.mxu0
        %v3640 = vadd.f32 %v3527, %v3639
        %3641 = vmatmul.f32.gmra.mxu0 %v2114
        %v3642 = vpop.f32.mrf.mxu0
        %v3643 = vadd.f32 %v3530, %v3642
        %3644 = vmatmul.f32.gmra.mxu0 %v2118
        %v3645 = vpop.f32.mrf.mxu0
        %v3646 = vadd.f32 %v3533, %v3645
        %3647 = vmatmul.f32.gmra.mxu0 %v2122
        %v3648 = vpop.f32.mrf.mxu0
        %v3649 = vadd.f32 %v3536, %v3648
        %3650 = vmatmul.f32.gmra.mxu0 %v2126
        %v3651 = vpop.f32.mrf.mxu0
        %v3652 = vadd.f32 %v3539, %v3651
        %3653 = vmatmul.f32.gmra.mxu0 %v2130
        %v3654 = vpop.f32.mrf.mxu0
        %v3655 = vadd.f32 %v3542, %v3654
        %3656 = vmatmul.f32.gmra.mxu0 %v2134
        %v3657 = vpop.f32.mrf.mxu0
        %v3658 = vadd.f32 %v3545, %v3657
        %3659 = vmatmul.f32.gmra.mxu0 %v2138
        %v3660 = vpop.f32.mrf.mxu0
        %v3661 = vadd.f32 %v3548, %v3660
        %3662 = vmatmul.f32.gmra.mxu0 %v2142
        %v3663 = vpop.f32.mrf.mxu0
        %v3664 = vadd.f32 %v3551, %v3663
        %3665 = vmatmul.f32.gmra.mxu0 %v2146
        %v3666 = vpop.f32.mrf.mxu0
        %v3667 = vadd.f32 %v3554, %v3666
        %3668 = vmatmul.f32.gmra.mxu0 %v2150
        %v3669 = vpop.f32.mrf.mxu0
        %v3670 = vadd.f32 %v3557, %v3669
        %3671 = vmatmul.f32.gmra.mxu0 %v2154
        %v3672 = vpop.f32.mrf.mxu0
        %v3673 = vadd.f32 %v3560, %v3672
        %3674 = vmatmul.f32.gmra.mxu0 %v2158
        %v3675 = vpop.f32.mrf.mxu0
        %v3676 = vadd.f32 %v3563, %v3675
        %3677 = vmatmul.f32.gmra.mxu0 %v2162
        %v3678 = vpop.f32.mrf.mxu0
        %v3679 = vadd.f32 %v3566, %v3678
        %3680 = vmatmul.f32.gmra.mxu0 %v2166
        %v3681 = vpop.f32.mrf.mxu0
        %v3682 = vadd.f32 %v3569, %v3681
        %3683 = vmatmul.f32.gmra.mxu0 %v2170
        %v3684 = vpop.f32.mrf.mxu0
        %v3685 = vadd.f32 %v3572, %v3684
        %3686 = vmatmul.f32.gmra.mxu0 %v2174
        %v3687 = vpop.f32.mrf.mxu0
        %v3688 = vadd.f32 %v3575, %v3687
        %3689 = vmatmul.f32.gmra.mxu0 %v2178
        %v3690 = vpop.f32.mrf.mxu0
        %v3691 = vadd.f32 %v3578, %v3690
        %3692 = vmatmul.f32.gmra.mxu0 %v2182
        %v3693 = vpop.f32.mrf.mxu0
        %v3694 = vadd.f32 %v3581, %v3693
        %3695 = vmatmul.f32.gmra.mxu0 %v2186
        %v3696 = vpop.f32.mrf.mxu0
        %v3697 = vadd.f32 %v3584, %v3696
        %3698 = vmatmul.f32.gmra.mxu0 %v2190
        %v3699 = vpop.f32.mrf.mxu0
        %v3700 = vadd.f32 %v3587, %v3699
        %3701 = vmatmul.f32.gmra.mxu0 %v2194
        %v3702 = vpop.f32.mrf.mxu0
        %v3703 = vadd.f32 %v3590, %v3702
        %3704 = vmatmul.f32.gmra.mxu0 %v2198
        %v3705 = vpop.f32.mrf.mxu0
        %v3706 = vadd.f32 %v3593, %v3705
        %3707 = vmatmul.f32.gmra.mxu0 %v2202
        %v3708 = vpop.f32.mrf.mxu0
        %v3709 = vadd.f32 %v3596, %v3708
        %3710 = vmatmul.f32.gmra.mxu0 %v2206
        %v3711 = vpop.f32.mrf.mxu0
        %v3712 = vadd.f32 %v3599, %v3711
        %3713 = vmatmul.f32.gmra.mxu0 %v2210
        %v3714 = vpop.f32.mrf.mxu0
        %v3715 = vadd.f32 %v3602, %v3714
        %3716 = vmatmul.f32.gmra.mxu0 %v2214
        %v3717 = vpop.f32.mrf.mxu0
        %v3718 = vadd.f32 %v3605, %v3717
        %3719 = vmatmul.f32.gmra.mxu0 %v2218
        %v3720 = vpop.f32.mrf.mxu0
        %v3721 = vadd.f32 %v3608, %v3720
        %3722 = vmatmul.f32.gmra.mxu0 %v2222
        %v3723 = vpop.f32.mrf.mxu0
        %v3724 = vadd.f32 %v3611, %v3723
        %3725 = vmatmul.f32.gmra.mxu0 %v2226
        %v3726 = vpop.f32.mrf.mxu0
        %v3727 = vadd.f32 %v3614, %v3726
        %3728 = vmatmul.f32.gmra.mxu0 %v2230
        %v3729 = vpop.f32.mrf.mxu0
        %v3730 = vadd.f32 %v3617, %v3729
        %3731 = vmatmul.f32.gmra.mxu0 %v2234
        %v3732 = vpop.f32.mrf.mxu0
        %v3733 = vadd.f32 %v3620, %v3732
        %3734 = vdwg.mxu0
        %3735 = vmatpush.msra.mxu0 %v2490
        %3736 = vmatpush.msra.mxu0 %v2486
        %3737 = vmatpush.msra.mxu0 %v2482
        %3738 = vmatpush.msra.mxu0 %v2478
        %3739 = vmatpush.msra.mxu0 %v2474
        %3740 = vmatpush.msra.mxu0 %v2470
        %3741 = vmatpush.msra.mxu0 %v2466
        %3742 = vmatpush.msra.mxu0 %v2462
        %3743 = vmatpush.msra.mxu0 %v2458
        %3744 = vmatpush.msra.mxu0 %v2454
        %3745 = vmatpush.msra.mxu0 %v2450
        %3746 = vmatpush.msra.mxu0 %v2446
        %3747 = vmatpush.msra.mxu0 %v2442
        %3748 = vmatpush.msra.mxu0 %v2438
        %3749 = vmatpush.msra.mxu0 %v2434
        %3750 = vmatpush.msra.mxu0 %v2430
        %3751 = vmatmul.f32.gmra.mxu0 %v2111
        %v3752 = vpop.f32.mrf.mxu0
        %v3753 = vadd.f32 %v3640, %v3752
        %3754 = vmatmul.f32.gmra.mxu0 %v2115
        %v3755 = vpop.f32.mrf.mxu0
        %v3756 = vadd.f32 %v3643, %v3755
        %3757 = vmatmul.f32.gmra.mxu0 %v2119
        %v3758 = vpop.f32.mrf.mxu0
        %v3759 = vadd.f32 %v3646, %v3758
        %3760 = vmatmul.f32.gmra.mxu0 %v2123
        %v3761 = vpop.f32.mrf.mxu0
        %v3762 = vadd.f32 %v3649, %v3761
        %3763 = vmatmul.f32.gmra.mxu0 %v2127
        %v3764 = vpop.f32.mrf.mxu0
        %v3765 = vadd.f32 %v3652, %v3764
        %3766 = vmatmul.f32.gmra.mxu0 %v2131
        %v3767 = vpop.f32.mrf.mxu0
        %v3768 = vadd.f32 %v3655, %v3767
        %3769 = vmatmul.f32.gmra.mxu0 %v2135
        %v3770 = vpop.f32.mrf.mxu0
        %v3771 = vadd.f32 %v3658, %v3770
        %3772 = vmatmul.f32.gmra.mxu0 %v2139
        %v3773 = vpop.f32.mrf.mxu0
        %v3774 = vadd.f32 %v3661, %v3773
        %3775 = vmatmul.f32.gmra.mxu0 %v2143
        %v3776 = vpop.f32.mrf.mxu0
        %v3777 = vadd.f32 %v3664, %v3776
        %3778 = vmatmul.f32.gmra.mxu0 %v2147
        %v3779 = vpop.f32.mrf.mxu0
        %v3780 = vadd.f32 %v3667, %v3779
        %3781 = vmatmul.f32.gmra.mxu0 %v2151
        %v3782 = vpop.f32.mrf.mxu0
        %v3783 = vadd.f32 %v3670, %v3782
        %3784 = vmatmul.f32.gmra.mxu0 %v2155
        %v3785 = vpop.f32.mrf.mxu0
        %v3786 = vadd.f32 %v3673, %v3785
        %3787 = vmatmul.f32.gmra.mxu0 %v2159
        %v3788 = vpop.f32.mrf.mxu0
        %v3789 = vadd.f32 %v3676, %v3788
        %3790 = vmatmul.f32.gmra.mxu0 %v2163
        %v3791 = vpop.f32.mrf.mxu0
        %v3792 = vadd.f32 %v3679, %v3791
        %3793 = vmatmul.f32.gmra.mxu0 %v2167
        %v3794 = vpop.f32.mrf.mxu0
        %v3795 = vadd.f32 %v3682, %v3794
        %3796 = vmatmul.f32.gmra.mxu0 %v2171
        %v3797 = vpop.f32.mrf.mxu0
        %v3798 = vadd.f32 %v3685, %v3797
        %3799 = vmatmul.f32.gmra.mxu0 %v2175
        %v3800 = vpop.f32.mrf.mxu0
        %v3801 = vadd.f32 %v3688, %v3800
        %3802 = vmatmul.f32.gmra.mxu0 %v2179
        %v3803 = vpop.f32.mrf.mxu0
        %v3804 = vadd.f32 %v3691, %v3803
        %3805 = vmatmul.f32.gmra.mxu0 %v2183
        %v3806 = vpop.f32.mrf.mxu0
        %v3807 = vadd.f32 %v3694, %v3806
        %3808 = vmatmul.f32.gmra.mxu0 %v2187
        %v3809 = vpop.f32.mrf.mxu0
        %v3810 = vadd.f32 %v3697, %v3809
        %3811 = vmatmul.f32.gmra.mxu0 %v2191
        %v3812 = vpop.f32.mrf.mxu0
        %v3813 = vadd.f32 %v3700, %v3812
        %3814 = vmatmul.f32.gmra.mxu0 %v2195
        %v3815 = vpop.f32.mrf.mxu0
        %v3816 = vadd.f32 %v3703, %v3815
        %3817 = vmatmul.f32.gmra.mxu0 %v2199
        %v3818 = vpop.f32.mrf.mxu0
        %v3819 = vadd.f32 %v3706, %v3818
        %3820 = vmatmul.f32.gmra.mxu0 %v2203
        %v3821 = vpop.f32.mrf.mxu0
        %v3822 = vadd.f32 %v3709, %v3821
        %3823 = vmatmul.f32.gmra.mxu0 %v2207
        %v3824 = vpop.f32.mrf.mxu0
        %v3825 = vadd.f32 %v3712, %v3824
        %3826 = vmatmul.f32.gmra.mxu0 %v2211
        %v3827 = vpop.f32.mrf.mxu0
        %v3828 = vadd.f32 %v3715, %v3827
        %3829 = vmatmul.f32.gmra.mxu0 %v2215
        %v3830 = vpop.f32.mrf.mxu0
        %v3831 = vadd.f32 %v3718, %v3830
        %3832 = vmatmul.f32.gmra.mxu0 %v2219
        %v3833 = vpop.f32.mrf.mxu0
        %v3834 = vadd.f32 %v3721, %v3833
        %3835 = vmatmul.f32.gmra.mxu0 %v2223
        %v3836 = vpop.f32.mrf.mxu0
        %v3837 = vadd.f32 %v3724, %v3836
        %3838 = vmatmul.f32.gmra.mxu0 %v2227
        %v3839 = vpop.f32.mrf.mxu0
        %v3840 = vadd.f32 %v3727, %v3839
        %3841 = vmatmul.f32.gmra.mxu0 %v2231
        %v3842 = vpop.f32.mrf.mxu0
        %v3843 = vadd.f32 %v3730, %v3842
        %3844 = vmatmul.f32.gmra.mxu0 %v2235
        %v3845 = vpop.f32.mrf.mxu0
        %v3846 = vadd.f32 %v3733, %v3845
        %3847 = vdwg.mxu0
        %3848 = vmatpush.msra.mxu0 %v2299
        %3849 = vmatpush.msra.mxu0 %v2295
        %3850 = vmatpush.msra.mxu0 %v2291
        %3851 = vmatpush.msra.mxu0 %v2287
        %3852 = vmatpush.msra.mxu0 %v2283
        %3853 = vmatpush.msra.mxu0 %v2279
        %3854 = vmatpush.msra.mxu0 %v2275
        %3855 = vmatpush.msra.mxu0 %v2271
        %3856 = vmatpush.msra.mxu0 %v2267
        %3857 = vmatpush.msra.mxu0 %v2263
        %3858 = vmatpush.msra.mxu0 %v2259
        %3859 = vmatpush.msra.mxu0 %v2255
        %3860 = vmatpush.msra.mxu0 %v2251
        %3861 = vmatpush.msra.mxu0 %v2247
        %3862 = vmatpush.msra.mxu0 %v2243
        %3863 = vmatpush.msra.mxu0 %v2239
        %3864 = vmatmul.f32.gmra.mxu0 %v2108
        %v3865 = vpop.f32.mrf.mxu0
        %v3866 = vadd.f32 0.0, %v3865
        %3867 = vmatmul.f32.gmra.mxu0 %v2112
        %v3868 = vpop.f32.mrf.mxu0
        %v3869 = vadd.f32 0.0, %v3868
        %3870 = vmatmul.f32.gmra.mxu0 %v2116
        %v3871 = vpop.f32.mrf.mxu0
        %v3872 = vadd.f32 0.0, %v3871
        %3873 = vmatmul.f32.gmra.mxu0 %v2120
        %v3874 = vpop.f32.mrf.mxu0
        %v3875 = vadd.f32 0.0, %v3874
        %3876 = vmatmul.f32.gmra.mxu0 %v2124
        %v3877 = vpop.f32.mrf.mxu0
        %v3878 = vadd.f32 0.0, %v3877
        %3879 = vmatmul.f32.gmra.mxu0 %v2128
        %v3880 = vpop.f32.mrf.mxu0
        %v3881 = vadd.f32 0.0, %v3880
        %3882 = vmatmul.f32.gmra.mxu0 %v2132
        %v3883 = vpop.f32.mrf.mxu0
        %v3884 = vadd.f32 0.0, %v3883
        %3885 = vmatmul.f32.gmra.mxu0 %v2136
        %v3886 = vpop.f32.mrf.mxu0
        %v3887 = vadd.f32 0.0, %v3886
        %3888 = vmatmul.f32.gmra.mxu0 %v2140
        %v3889 = vpop.f32.mrf.mxu0
        %v3890 = vadd.f32 0.0, %v3889
        %3891 = vmatmul.f32.gmra.mxu0 %v2144
        %v3892 = vpop.f32.mrf.mxu0
        %v3893 = vadd.f32 0.0, %v3892
        %3894 = vmatmul.f32.gmra.mxu0 %v2148
        %v3895 = vpop.f32.mrf.mxu0
        %v3896 = vadd.f32 0.0, %v3895
        %3897 = vmatmul.f32.gmra.mxu0 %v2152
        %v3898 = vpop.f32.mrf.mxu0
        %v3899 = vadd.f32 0.0, %v3898
        %3900 = vmatmul.f32.gmra.mxu0 %v2156
        %v3901 = vpop.f32.mrf.mxu0
        %v3902 = vadd.f32 0.0, %v3901
        %3903 = vmatmul.f32.gmra.mxu0 %v2160
        %v3904 = vpop.f32.mrf.mxu0
        %v3905 = vadd.f32 0.0, %v3904
        %3906 = vmatmul.f32.gmra.mxu0 %v2164
        %v3907 = vpop.f32.mrf.mxu0
        %v3908 = vadd.f32 0.0, %v3907
        %3909 = vmatmul.f32.gmra.mxu0 %v2168
        %v3910 = vpop.f32.mrf.mxu0
        %v3911 = vadd.f32 0.0, %v3910
        %3912 = vmatmul.f32.gmra.mxu0 %v2172
        %v3913 = vpop.f32.mrf.mxu0
        %v3914 = vadd.f32 0.0, %v3913
        %3915 = vmatmul.f32.gmra.mxu0 %v2176
        %v3916 = vpop.f32.mrf.mxu0
        %v3917 = vadd.f32 0.0, %v3916
        %3918 = vmatmul.f32.gmra.mxu0 %v2180
        %v3919 = vpop.f32.mrf.mxu0
        %v3920 = vadd.f32 0.0, %v3919
        %3921 = vmatmul.f32.gmra.mxu0 %v2184
        %v3922 = vpop.f32.mrf.mxu0
        %v3923 = vadd.f32 0.0, %v3922
        %3924 = vmatmul.f32.gmra.mxu0 %v2188
        %v3925 = vpop.f32.mrf.mxu0
        %v3926 = vadd.f32 0.0, %v3925
        %3927 = vmatmul.f32.gmra.mxu0 %v2192
        %v3928 = vpop.f32.mrf.mxu0
        %v3929 = vadd.f32 0.0, %v3928
        %3930 = vmatmul.f32.gmra.mxu0 %v2196
        %v3931 = vpop.f32.mrf.mxu0
        %v3932 = vadd.f32 0.0, %v3931
        %3933 = vmatmul.f32.gmra.mxu0 %v2200
        %v3934 = vpop.f32.mrf.mxu0
        %v3935 = vadd.f32 0.0, %v3934
        %3936 = vmatmul.f32.gmra.mxu0 %v2204
        %v3937 = vpop.f32.mrf.mxu0
        %v3938 = vadd.f32 0.0, %v3937
        %3939 = vmatmul.f32.gmra.mxu0 %v2208
        %v3940 = vpop.f32.mrf.mxu0
        %v3941 = vadd.f32 0.0, %v3940
        %3942 = vmatmul.f32.gmra.mxu0 %v2212
        %v3943 = vpop.f32.mrf.mxu0
        %v3944 = vadd.f32 0.0, %v3943
        %3945 = vmatmul.f32.gmra.mxu0 %v2216
        %v3946 = vpop.f32.mrf.mxu0
        %v3947 = vadd.f32 0.0, %v3946
        %3948 = vmatmul.f32.gmra.mxu0 %v2220
        %v3949 = vpop.f32.mrf.mxu0
        %v3950 = vadd.f32 0.0, %v3949
        %3951 = vmatmul.f32.gmra.mxu0 %v2224
        %v3952 = vpop.f32.mrf.mxu0
        %v3953 = vadd.f32 0.0, %v3952
        %3954 = vmatmul.f32.gmra.mxu0 %v2228
        %v3955 = vpop.f32.mrf.mxu0
        %v3956 = vadd.f32 0.0, %v3955
        %3957 = vmatmul.f32.gmra.mxu0 %v2232
        %v3958 = vpop.f32.mrf.mxu0
        %v3959 = vadd.f32 0.0, %v3958
        %3960 = vdwg.mxu0
        %3961 = vmatpush.msra.mxu0 %v2363
        %3962 = vmatpush.msra.mxu0 %v2359
        %3963 = vmatpush.msra.mxu0 %v2355
        %3964 = vmatpush.msra.mxu0 %v2351
        %3965 = vmatpush.msra.mxu0 %v2347
        %3966 = vmatpush.msra.mxu0 %v2343
        %3967 = vmatpush.msra.mxu0 %v2339
        %3968 = vmatpush.msra.mxu0 %v2335
        %3969 = vmatpush.msra.mxu0 %v2331
        %3970 = vmatpush.msra.mxu0 %v2327
        %3971 = vmatpush.msra.mxu0 %v2323
        %3972 = vmatpush.msra.mxu0 %v2319
        %3973 = vmatpush.msra.mxu0 %v2315
        %3974 = vmatpush.msra.mxu0 %v2311
        %3975 = vmatpush.msra.mxu0 %v2307
        %3976 = vmatpush.msra.mxu0 %v2303
        %3977 = vmatmul.f32.gmra.mxu0 %v2109
        %v3978 = vpop.f32.mrf.mxu0
        %v3979 = vadd.f32 %v3866, %v3978
        %3980 = vmatmul.f32.gmra.mxu0 %v2113
        %v3981 = vpop.f32.mrf.mxu0
        %v3982 = vadd.f32 %v3869, %v3981
        %3983 = vmatmul.f32.gmra.mxu0 %v2117
        %v3984 = vpop.f32.mrf.mxu0
        %v3985 = vadd.f32 %v3872, %v3984
        %3986 = vmatmul.f32.gmra.mxu0 %v2121
        %v3987 = vpop.f32.mrf.mxu0
        %v3988 = vadd.f32 %v3875, %v3987
        %3989 = vmatmul.f32.gmra.mxu0 %v2125
        %v3990 = vpop.f32.mrf.mxu0
        %v3991 = vadd.f32 %v3878, %v3990
        %3992 = vmatmul.f32.gmra.mxu0 %v2129
        %v3993 = vpop.f32.mrf.mxu0
        %v3994 = vadd.f32 %v3881, %v3993
        %3995 = vmatmul.f32.gmra.mxu0 %v2133
        %v3996 = vpop.f32.mrf.mxu0
        %v3997 = vadd.f32 %v3884, %v3996
        %3998 = vmatmul.f32.gmra.mxu0 %v2137
        %v3999 = vpop.f32.mrf.mxu0
        %v4000 = vadd.f32 %v3887, %v3999
        %4001 = vmatmul.f32.gmra.mxu0 %v2141
        %v4002 = vpop.f32.mrf.mxu0
        %v4003 = vadd.f32 %v3890, %v4002
        %4004 = vmatmul.f32.gmra.mxu0 %v2145
        %v4005 = vpop.f32.mrf.mxu0
        %v4006 = vadd.f32 %v3893, %v4005
        %4007 = vmatmul.f32.gmra.mxu0 %v2149
        %v4008 = vpop.f32.mrf.mxu0
        %v4009 = vadd.f32 %v3896, %v4008
        %4010 = vmatmul.f32.gmra.mxu0 %v2153
        %v4011 = vpop.f32.mrf.mxu0
        %v4012 = vadd.f32 %v3899, %v4011
        %4013 = vmatmul.f32.gmra.mxu0 %v2157
        %v4014 = vpop.f32.mrf.mxu0
        %v4015 = vadd.f32 %v3902, %v4014
        %4016 = vmatmul.f32.gmra.mxu0 %v2161
        %v4017 = vpop.f32.mrf.mxu0
        %v4018 = vadd.f32 %v3905, %v4017
        %4019 = vmatmul.f32.gmra.mxu0 %v2165
        %v4020 = vpop.f32.mrf.mxu0
        %v4021 = vadd.f32 %v3908, %v4020
        %4022 = vmatmul.f32.gmra.mxu0 %v2169
        %v4023 = vpop.f32.mrf.mxu0
        %v4024 = vadd.f32 %v3911, %v4023
        %4025 = vmatmul.f32.gmra.mxu0 %v2173
        %v4026 = vpop.f32.mrf.mxu0
        %v4027 = vadd.f32 %v3914, %v4026
        %4028 = vmatmul.f32.gmra.mxu0 %v2177
        %v4029 = vpop.f32.mrf.mxu0
        %v4030 = vadd.f32 %v3917, %v4029
        %4031 = vmatmul.f32.gmra.mxu0 %v2181
        %v4032 = vpop.f32.mrf.mxu0
        %v4033 = vadd.f32 %v3920, %v4032
        %4034 = vmatmul.f32.gmra.mxu0 %v2185
        %v4035 = vpop.f32.mrf.mxu0
        %v4036 = vadd.f32 %v3923, %v4035
        %4037 = vmatmul.f32.gmra.mxu0 %v2189
        %v4038 = vpop.f32.mrf.mxu0
        %v4039 = vadd.f32 %v3926, %v4038
        %4040 = vmatmul.f32.gmra.mxu0 %v2193
        %v4041 = vpop.f32.mrf.mxu0
        %v4042 = vadd.f32 %v3929, %v4041
        %4043 = vmatmul.f32.gmra.mxu0 %v2197
        %v4044 = vpop.f32.mrf.mxu0
        %v4045 = vadd.f32 %v3932, %v4044
        %4046 = vmatmul.f32.gmra.mxu0 %v2201
        %v4047 = vpop.f32.mrf.mxu0
        %v4048 = vadd.f32 %v3935, %v4047
        %4049 = vmatmul.f32.gmra.mxu0 %v2205
        %v4050 = vpop.f32.mrf.mxu0
        %v4051 = vadd.f32 %v3938, %v4050
        %4052 = vmatmul.f32.gmra.mxu0 %v2209
        %v4053 = vpop.f32.mrf.mxu0
        %v4054 = vadd.f32 %v3941, %v4053
        %4055 = vmatmul.f32.gmra.mxu0 %v2213
        %v4056 = vpop.f32.mrf.mxu0
        %v4057 = vadd.f32 %v3944, %v4056
        %4058 = vmatmul.f32.gmra.mxu0 %v2217
        %v4059 = vpop.f32.mrf.mxu0
        %v4060 = vadd.f32 %v3947, %v4059
        %4061 = vmatmul.f32.gmra.mxu0 %v2221
        %v4062 = vpop.f32.mrf.mxu0
        %v4063 = vadd.f32 %v3950, %v4062
        %4064 = vmatmul.f32.gmra.mxu0 %v2225
        %v4065 = vpop.f32.mrf.mxu0
        %v4066 = vadd.f32 %v3953, %v4065
        %4067 = vmatmul.f32.gmra.mxu0 %v2229
        %v4068 = vpop.f32.mrf.mxu0
        %v4069 = vadd.f32 %v3956, %v4068
        %4070 = vmatmul.f32.gmra.mxu0 %v2233
        %v4071 = vpop.f32.mrf.mxu0
        %v4072 = vadd.f32 %v3959, %v4071
        %4073 = vdwg.mxu0
        %4074 = vmatpush.msra.mxu0 %v2427
        %4075 = vmatpush.msra.mxu0 %v2423
        %4076 = vmatpush.msra.mxu0 %v2419
        %4077 = vmatpush.msra.mxu0 %v2415
        %4078 = vmatpush.msra.mxu0 %v2411
        %4079 = vmatpush.msra.mxu0 %v2407
        %4080 = vmatpush.msra.mxu0 %v2403
        %4081 = vmatpush.msra.mxu0 %v2399
        %4082 = vmatpush.msra.mxu0 %v2395
        %4083 = vmatpush.msra.mxu0 %v2391
        %4084 = vmatpush.msra.mxu0 %v2387
        %4085 = vmatpush.msra.mxu0 %v2383
        %4086 = vmatpush.msra.mxu0 %v2379
        %4087 = vmatpush.msra.mxu0 %v2375
        %4088 = vmatpush.msra.mxu0 %v2371
        %4089 = vmatpush.msra.mxu0 %v2367
        %4090 = vmatmul.f32.gmra.mxu0 %v2110
        %v4091 = vpop.f32.mrf.mxu0
        %v4092 = vadd.f32 %v3979, %v4091
        %4093 = vmatmul.f32.gmra.mxu0 %v2114
        %v4094 = vpop.f32.mrf.mxu0
        %v4095 = vadd.f32 %v3982, %v4094
        %4096 = vmatmul.f32.gmra.mxu0 %v2118
        %v4097 = vpop.f32.mrf.mxu0
        %v4098 = vadd.f32 %v3985, %v4097
        %4099 = vmatmul.f32.gmra.mxu0 %v2122
        %v4100 = vpop.f32.mrf.mxu0
        %v4101 = vadd.f32 %v3988, %v4100
        %4102 = vmatmul.f32.gmra.mxu0 %v2126
        %v4103 = vpop.f32.mrf.mxu0
        %v4104 = vadd.f32 %v3991, %v4103
        %4105 = vmatmul.f32.gmra.mxu0 %v2130
        %v4106 = vpop.f32.mrf.mxu0
        %v4107 = vadd.f32 %v3994, %v4106
        %4108 = vmatmul.f32.gmra.mxu0 %v2134
        %v4109 = vpop.f32.mrf.mxu0
        %v4110 = vadd.f32 %v3997, %v4109
        %4111 = vmatmul.f32.gmra.mxu0 %v2138
        %v4112 = vpop.f32.mrf.mxu0
        %v4113 = vadd.f32 %v4000, %v4112
        %4114 = vmatmul.f32.gmra.mxu0 %v2142
        %v4115 = vpop.f32.mrf.mxu0
        %v4116 = vadd.f32 %v4003, %v4115
        %4117 = vmatmul.f32.gmra.mxu0 %v2146
        %v4118 = vpop.f32.mrf.mxu0
        %v4119 = vadd.f32 %v4006, %v4118
        %4120 = vmatmul.f32.gmra.mxu0 %v2150
        %v4121 = vpop.f32.mrf.mxu0
        %v4122 = vadd.f32 %v4009, %v4121
        %4123 = vmatmul.f32.gmra.mxu0 %v2154
        %v4124 = vpop.f32.mrf.mxu0
        %v4125 = vadd.f32 %v4012, %v4124
        %4126 = vmatmul.f32.gmra.mxu0 %v2158
        %v4127 = vpop.f32.mrf.mxu0
        %v4128 = vadd.f32 %v4015, %v4127
        %4129 = vmatmul.f32.gmra.mxu0 %v2162
        %v4130 = vpop.f32.mrf.mxu0
        %v4131 = vadd.f32 %v4018, %v4130
        %4132 = vmatmul.f32.gmra.mxu0 %v2166
        %v4133 = vpop.f32.mrf.mxu0
        %v4134 = vadd.f32 %v4021, %v4133
        %4135 = vmatmul.f32.gmra.mxu0 %v2170
        %v4136 = vpop.f32.mrf.mxu0
        %v4137 = vadd.f32 %v4024, %v4136
        %4138 = vmatmul.f32.gmra.mxu0 %v2174
        %v4139 = vpop.f32.mrf.mxu0
        %v4140 = vadd.f32 %v4027, %v4139
        %4141 = vmatmul.f32.gmra.mxu0 %v2178
        %v4142 = vpop.f32.mrf.mxu0
        %v4143 = vadd.f32 %v4030, %v4142
        %4144 = vmatmul.f32.gmra.mxu0 %v2182
        %v4145 = vpop.f32.mrf.mxu0
        %v4146 = vadd.f32 %v4033, %v4145
        %4147 = vmatmul.f32.gmra.mxu0 %v2186
        %v4148 = vpop.f32.mrf.mxu0
        %v4149 = vadd.f32 %v4036, %v4148
        %4150 = vmatmul.f32.gmra.mxu0 %v2190
        %v4151 = vpop.f32.mrf.mxu0
        %v4152 = vadd.f32 %v4039, %v4151
        %4153 = vmatmul.f32.gmra.mxu0 %v2194
        %v4154 = vpop.f32.mrf.mxu0
        %v4155 = vadd.f32 %v4042, %v4154
        %4156 = vmatmul.f32.gmra.mxu0 %v2198
        %v4157 = vpop.f32.mrf.mxu0
        %v4158 = vadd.f32 %v4045, %v4157
        %4159 = vmatmul.f32.gmra.mxu0 %v2202
        %v4160 = vpop.f32.mrf.mxu0
        %v4161 = vadd.f32 %v4048, %v4160
        %4162 = vmatmul.f32.gmra.mxu0 %v2206
        %v4163 = vpop.f32.mrf.mxu0
        %v4164 = vadd.f32 %v4051, %v4163
        %4165 = vmatmul.f32.gmra.mxu0 %v2210
        %v4166 = vpop.f32.mrf.mxu0
        %v4167 = vadd.f32 %v4054, %v4166
        %4168 = vmatmul.f32.gmra.mxu0 %v2214
        %v4169 = vpop.f32.mrf.mxu0
        %v4170 = vadd.f32 %v4057, %v4169
        %4171 = vmatmul.f32.gmra.mxu0 %v2218
        %v4172 = vpop.f32.mrf.mxu0
        %v4173 = vadd.f32 %v4060, %v4172
        %4174 = vmatmul.f32.gmra.mxu0 %v2222
        %v4175 = vpop.f32.mrf.mxu0
        %v4176 = vadd.f32 %v4063, %v4175
        %4177 = vmatmul.f32.gmra.mxu0 %v2226
        %v4178 = vpop.f32.mrf.mxu0
        %v4179 = vadd.f32 %v4066, %v4178
        %4180 = vmatmul.f32.gmra.mxu0 %v2230
        %v4181 = vpop.f32.mrf.mxu0
        %v4182 = vadd.f32 %v4069, %v4181
        %4183 = vmatmul.f32.gmra.mxu0 %v2234
        %v4184 = vpop.f32.mrf.mxu0
        %v4185 = vadd.f32 %v4072, %v4184
        %4186 = vdwg.mxu0
        %4187 = vmatpush.msra.mxu0 %v2491
        %4188 = vmatpush.msra.mxu0 %v2487
        %4189 = vmatpush.msra.mxu0 %v2483
        %4190 = vmatpush.msra.mxu0 %v2479
        %4191 = vmatpush.msra.mxu0 %v2475
        %4192 = vmatpush.msra.mxu0 %v2471
        %4193 = vmatpush.msra.mxu0 %v2467
        %4194 = vmatpush.msra.mxu0 %v2463
        %4195 = vmatpush.msra.mxu0 %v2459
        %4196 = vmatpush.msra.mxu0 %v2455
        %4197 = vmatpush.msra.mxu0 %v2451
        %4198 = vmatpush.msra.mxu0 %v2447
        %4199 = vmatpush.msra.mxu0 %v2443
        %4200 = vmatpush.msra.mxu0 %v2439
        %4201 = vmatpush.msra.mxu0 %v2435
        %4202 = vmatpush.msra.mxu0 %v2431
        %4203 = vmatmul.f32.gmra.mxu0 %v2111
        %v4204 = vpop.f32.mrf.mxu0
        %v4205 = vadd.f32 %v4092, %v4204
        %4206 = vmatmul.f32.gmra.mxu0 %v2115
        %v4207 = vpop.f32.mrf.mxu0
        %v4208 = vadd.f32 %v4095, %v4207
        %4209 = vmatmul.f32.gmra.mxu0 %v2119
        %v4210 = vpop.f32.mrf.mxu0
        %v4211 = vadd.f32 %v4098, %v4210
        %4212 = vmatmul.f32.gmra.mxu0 %v2123
        %v4213 = vpop.f32.mrf.mxu0
        %v4214 = vadd.f32 %v4101, %v4213
        %4215 = vmatmul.f32.gmra.mxu0 %v2127
        %v4216 = vpop.f32.mrf.mxu0
        %v4217 = vadd.f32 %v4104, %v4216
        %4218 = vmatmul.f32.gmra.mxu0 %v2131
        %v4219 = vpop.f32.mrf.mxu0
        %v4220 = vadd.f32 %v4107, %v4219
        %4221 = vmatmul.f32.gmra.mxu0 %v2135
        %v4222 = vpop.f32.mrf.mxu0
        %v4223 = vadd.f32 %v4110, %v4222
        %4224 = vmatmul.f32.gmra.mxu0 %v2139
        %v4225 = vpop.f32.mrf.mxu0
        %v4226 = vadd.f32 %v4113, %v4225
        %4227 = vmatmul.f32.gmra.mxu0 %v2143
        %v4228 = vpop.f32.mrf.mxu0
        %v4229 = vadd.f32 %v4116, %v4228
        %4230 = vmatmul.f32.gmra.mxu0 %v2147
        %v4231 = vpop.f32.mrf.mxu0
        %v4232 = vadd.f32 %v4119, %v4231
        %4233 = vmatmul.f32.gmra.mxu0 %v2151
        %v4234 = vpop.f32.mrf.mxu0
        %v4235 = vadd.f32 %v4122, %v4234
        %4236 = vmatmul.f32.gmra.mxu0 %v2155
        %v4237 = vpop.f32.mrf.mxu0
        %v4238 = vadd.f32 %v4125, %v4237
        %4239 = vmatmul.f32.gmra.mxu0 %v2159
        %v4240 = vpop.f32.mrf.mxu0
        %v4241 = vadd.f32 %v4128, %v4240
        %4242 = vmatmul.f32.gmra.mxu0 %v2163
        %v4243 = vpop.f32.mrf.mxu0
        %v4244 = vadd.f32 %v4131, %v4243
        %4245 = vmatmul.f32.gmra.mxu0 %v2167
        %v4246 = vpop.f32.mrf.mxu0
        %v4247 = vadd.f32 %v4134, %v4246
        %4248 = vmatmul.f32.gmra.mxu0 %v2171
        %v4249 = vpop.f32.mrf.mxu0
        %v4250 = vadd.f32 %v4137, %v4249
        %4251 = vmatmul.f32.gmra.mxu0 %v2175
        %v4252 = vpop.f32.mrf.mxu0
        %v4253 = vadd.f32 %v4140, %v4252
        %4254 = vmatmul.f32.gmra.mxu0 %v2179
        %v4255 = vpop.f32.mrf.mxu0
        %v4256 = vadd.f32 %v4143, %v4255
        %4257 = vmatmul.f32.gmra.mxu0 %v2183
        %v4258 = vpop.f32.mrf.mxu0
        %v4259 = vadd.f32 %v4146, %v4258
        %4260 = vmatmul.f32.gmra.mxu0 %v2187
        %v4261 = vpop.f32.mrf.mxu0
        %v4262 = vadd.f32 %v4149, %v4261
        %4263 = vmatmul.f32.gmra.mxu0 %v2191
        %v4264 = vpop.f32.mrf.mxu0
        %v4265 = vadd.f32 %v4152, %v4264
        %4266 = vmatmul.f32.gmra.mxu0 %v2195
        %v4267 = vpop.f32.mrf.mxu0
        %v4268 = vadd.f32 %v4155, %v4267
        %4269 = vmatmul.f32.gmra.mxu0 %v2199
        %v4270 = vpop.f32.mrf.mxu0
        %v4271 = vadd.f32 %v4158, %v4270
        %4272 = vmatmul.f32.gmra.mxu0 %v2203
        %v4273 = vpop.f32.mrf.mxu0
        %v4274 = vadd.f32 %v4161, %v4273
        %4275 = vmatmul.f32.gmra.mxu0 %v2207
        %v4276 = vpop.f32.mrf.mxu0
        %v4277 = vadd.f32 %v4164, %v4276
        %4278 = vmatmul.f32.gmra.mxu0 %v2211
        %v4279 = vpop.f32.mrf.mxu0
        %v4280 = vadd.f32 %v4167, %v4279
        %4281 = vmatmul.f32.gmra.mxu0 %v2215
        %v4282 = vpop.f32.mrf.mxu0
        %v4283 = vadd.f32 %v4170, %v4282
        %4284 = vmatmul.f32.gmra.mxu0 %v2219
        %v4285 = vpop.f32.mrf.mxu0
        %v4286 = vadd.f32 %v4173, %v4285
        %4287 = vmatmul.f32.gmra.mxu0 %v2223
        %v4288 = vpop.f32.mrf.mxu0
        %v4289 = vadd.f32 %v4176, %v4288
        %4290 = vmatmul.f32.gmra.mxu0 %v2227
        %v4291 = vpop.f32.mrf.mxu0
        %v4292 = vadd.f32 %v4179, %v4291
        %4293 = vmatmul.f32.gmra.mxu0 %v2231
        %v4294 = vpop.f32.mrf.mxu0
        %v4295 = vadd.f32 %v4182, %v4294
        %4296 = vmatmul.f32.gmra.mxu0 %v2235
        %v4297 = vpop.f32.mrf.mxu0
        %v4298 = vadd.f32 %v4185, %v4297
        %4299 = vdwg.mxu0
        %s4300 = smul.u32 %s35, 512
        %p4301 = scmp.lt.s32.totalorder %s4300, 1024
        // Predicated region
        $region73: #{tpu_custom_call.1} parent=43 // pred_check
          %p4302 = pneg %p4301
        $region74: #{tpu_custom_call.1} parent=43 // pred_check_branch
          %4304 = sbr.rel (%p4302) target = $region76
        $region75: #{tpu_custom_call.1} parent=43 // pred_region
          %v4305 = vld [vmem:[%s384] sm:$0xff]
          %v4306 = vld [vmem:[%s384 + $0x8] sm:$0xff]
          %v4307 = vld [vmem:[%s384 + $0x10] sm:$0xff]
          %v4308 = vld [vmem:[%s384 + $0x18] sm:$0xff]
          %v4309 = vld [vmem:[%s384 + $0x20] sm:$0xff]
          %v4310 = vld [vmem:[%s384 + $0x28] sm:$0xff]
          %v4311 = vld [vmem:[%s384 + $0x30] sm:$0xff]
          %v4312 = vld [vmem:[%s384 + $0x38] sm:$0xff]
          %v4313 = vld [vmem:[%s384 + $0x40] sm:$0xff]
          %v4314 = vld [vmem:[%s384 + $0x48] sm:$0xff]
          %v4315 = vld [vmem:[%s384 + $0x50] sm:$0xff]
          %v4316 = vld [vmem:[%s384 + $0x58] sm:$0xff]
          %v4317 = vld [vmem:[%s384 + $0x60] sm:$0xff]
          %v4318 = vld [vmem:[%s384 + $0x68] sm:$0xff]
          %v4319 = vld [vmem:[%s384 + $0x70] sm:$0xff]
          %v4320 = vld [vmem:[%s384 + $0x78] sm:$0xff]
          %v4321 = vld [vmem:[%s384 + $0x80] sm:$0xff]
          %v4322 = vld [vmem:[%s384 + $0x88] sm:$0xff]
          %v4323 = vld [vmem:[%s384 + $0x90] sm:$0xff]
          %v4324 = vld [vmem:[%s384 + $0x98] sm:$0xff]
          %v4325 = vld [vmem:[%s384 + $0xa0] sm:$0xff]
          %v4326 = vld [vmem:[%s384 + $0xa8] sm:$0xff]
          %v4327 = vld [vmem:[%s384 + $0xb0] sm:$0xff]
          %v4328 = vld [vmem:[%s384 + $0xb8] sm:$0xff]
          %v4329 = vld [vmem:[%s384 + $0xc0] sm:$0xff]
          %v4330 = vld [vmem:[%s384 + $0xc8] sm:$0xff]
          %v4331 = vld [vmem:[%s384 + $0xd0] sm:$0xff]
          %v4332 = vld [vmem:[%s384 + $0xd8] sm:$0xff]
          %v4333 = vld [vmem:[%s384 + $0xe0] sm:$0xff]
          %v4334 = vld [vmem:[%s384 + $0xe8] sm:$0xff]
          %v4335 = vld [vmem:[%s384 + $0xf0] sm:$0xff]
          %v4336 = vld [vmem:[%s384 + $0xf8] sm:$0xff]
          %v4337 = vmul.f32 %v2849, %v4305
          %v4338 = vmul.f32 %v2852, %v4306
          %v4339 = vmul.f32 %v2855, %v4307
          %v4340 = vmul.f32 %v2858, %v4308
          %v4341 = vmul.f32 %v2861, %v4309
          %v4342 = vmul.f32 %v2864, %v4310
          %v4343 = vmul.f32 %v2867, %v4311
          %v4344 = vmul.f32 %v2870, %v4312
          %v4345 = vmul.f32 %v2873, %v4313
          %v4346 = vmul.f32 %v2876, %v4314
          %v4347 = vmul.f32 %v2879, %v4315
          %v4348 = vmul.f32 %v2882, %v4316
          %v4349 = vmul.f32 %v2885, %v4317
          %v4350 = vmul.f32 %v2888, %v4318
          %v4351 = vmul.f32 %v2891, %v4319
          %v4352 = vmul.f32 %v2894, %v4320
          %v4353 = vmul.f32 %v2897, %v4321
          %v4354 = vmul.f32 %v2900, %v4322
          %v4355 = vmul.f32 %v2903, %v4323
          %v4356 = vmul.f32 %v2906, %v4324
          %v4357 = vmul.f32 %v2909, %v4325
          %v4358 = vmul.f32 %v2912, %v4326
          %v4359 = vmul.f32 %v2915, %v4327
          %v4360 = vmul.f32 %v2918, %v4328
          %v4361 = vmul.f32 %v2921, %v4329
          %v4362 = vmul.f32 %v2924, %v4330
          %v4363 = vmul.f32 %v2927, %v4331
          %v4364 = vmul.f32 %v2930, %v4332
          %v4365 = vmul.f32 %v2933, %v4333
          %v4366 = vmul.f32 %v2936, %v4334
          %v4367 = vmul.f32 %v2939, %v4335
          %v4368 = vmul.f32 %v2942, %v4336
          %4369 = vrot.lane.b32.xlu0 %v2849, 64
          %v4370 = vpop.permute.xlu0 %4369
          %4371 = vrot.lane.b32.xlu0 %v2852, 64
          %v4372 = vpop.permute.xlu0 %4371
          %4373 = vrot.lane.b32.xlu0 %v2855, 64
          %v4374 = vpop.permute.xlu0 %4373
          %4375 = vrot.lane.b32.xlu0 %v2858, 64
          %v4376 = vpop.permute.xlu0 %4375
          %4377 = vrot.lane.b32.xlu0 %v2861, 64
          %v4378 = vpop.permute.xlu0 %4377
          %4379 = vrot.lane.b32.xlu0 %v2864, 64
          %v4380 = vpop.permute.xlu0 %4379
          %4381 = vrot.lane.b32.xlu0 %v2867, 64
          %v4382 = vpop.permute.xlu0 %4381
          %4383 = vrot.lane.b32.xlu0 %v2870, 64
          %v4384 = vpop.permute.xlu0 %4383
          %4385 = vrot.lane.b32.xlu0 %v2873, 64
          %v4386 = vpop.permute.xlu0 %4385
          %4387 = vrot.lane.b32.xlu0 %v2876, 64
          %v4388 = vpop.permute.xlu0 %4387
          %4389 = vrot.lane.b32.xlu0 %v2879, 64
          %v4390 = vpop.permute.xlu0 %4389
          %4391 = vrot.lane.b32.xlu0 %v2882, 64
          %v4392 = vpop.permute.xlu0 %4391
          %4393 = vrot.lane.b32.xlu0 %v2885, 64
          %v4394 = vpop.permute.xlu0 %4393
          %4395 = vrot.lane.b32.xlu0 %v2888, 64
          %v4396 = vpop.permute.xlu0 %4395
          %4397 = vrot.lane.b32.xlu0 %v2891, 64
          %v4398 = vpop.permute.xlu0 %4397
          %4399 = vrot.lane.b32.xlu0 %v2894, 64
          %v4400 = vpop.permute.xlu0 %4399
          %4401 = vrot.lane.b32.xlu0 %v2897, 64
          %v4402 = vpop.permute.xlu0 %4401
          %4403 = vrot.lane.b32.xlu0 %v2900, 64
          %v4404 = vpop.permute.xlu0 %4403
          %4405 = vrot.lane.b32.xlu0 %v2903, 64
          %v4406 = vpop.permute.xlu0 %4405
          %4407 = vrot.lane.b32.xlu0 %v2906, 64
          %v4408 = vpop.permute.xlu0 %4407
          %4409 = vrot.lane.b32.xlu0 %v2909, 64
          %v4410 = vpop.permute.xlu0 %4409
          %4411 = vrot.lane.b32.xlu0 %v2912, 64
          %v4412 = vpop.permute.xlu0 %4411
          %4413 = vrot.lane.b32.xlu0 %v2915, 64
          %v4414 = vpop.permute.xlu0 %4413
          %4415 = vrot.lane.b32.xlu0 %v2918, 64
          %v4416 = vpop.permute.xlu0 %4415
          %4417 = vrot.lane.b32.xlu0 %v2921, 64
          %v4418 = vpop.permute.xlu0 %4417
          %4419 = vrot.lane.b32.xlu0 %v2924, 64
          %v4420 = vpop.permute.xlu0 %4419
          %4421 = vrot.lane.b32.xlu0 %v2927, 64
          %v4422 = vpop.permute.xlu0 %4421
          %4423 = vrot.lane.b32.xlu0 %v2930, 64
          %v4424 = vpop.permute.xlu0 %4423
          %4425 = vrot.lane.b32.xlu0 %v2933, 64
          %v4426 = vpop.permute.xlu0 %4425
          %4427 = vrot.lane.b32.xlu0 %v2936, 64
          %v4428 = vpop.permute.xlu0 %4427
          %4429 = vrot.lane.b32.xlu0 %v2939, 64
          %v4430 = vpop.permute.xlu0 %4429
          %4431 = vrot.lane.b32.xlu0 %v2942, 64
          %v4432 = vpop.permute.xlu0 %4431
          %v4433 = vld [vmem:[%s394] sm:$0xff]
          %v4434 = vld [vmem:[%s394 + $0x8] sm:$0xff]
          %v4435 = vld [vmem:[%s394 + $0x10] sm:$0xff]
          %v4436 = vld [vmem:[%s394 + $0x18] sm:$0xff]
          %v4437 = vld [vmem:[%s394 + $0x20] sm:$0xff]
          %v4438 = vld [vmem:[%s394 + $0x28] sm:$0xff]
          %v4439 = vld [vmem:[%s394 + $0x30] sm:$0xff]
          %v4440 = vld [vmem:[%s394 + $0x38] sm:$0xff]
          %v4441 = vld [vmem:[%s394 + $0x40] sm:$0xff]
          %v4442 = vld [vmem:[%s394 + $0x48] sm:$0xff]
          %v4443 = vld [vmem:[%s394 + $0x50] sm:$0xff]
          %v4444 = vld [vmem:[%s394 + $0x58] sm:$0xff]
          %v4445 = vld [vmem:[%s394 + $0x60] sm:$0xff]
          %v4446 = vld [vmem:[%s394 + $0x68] sm:$0xff]
          %v4447 = vld [vmem:[%s394 + $0x70] sm:$0xff]
          %v4448 = vld [vmem:[%s394 + $0x78] sm:$0xff]
          %v4449 = vld [vmem:[%s394 + $0x80] sm:$0xff]
          %v4450 = vld [vmem:[%s394 + $0x88] sm:$0xff]
          %v4451 = vld [vmem:[%s394 + $0x90] sm:$0xff]
          %v4452 = vld [vmem:[%s394 + $0x98] sm:$0xff]
          %v4453 = vld [vmem:[%s394 + $0xa0] sm:$0xff]
          %v4454 = vld [vmem:[%s394 + $0xa8] sm:$0xff]
          %v4455 = vld [vmem:[%s394 + $0xb0] sm:$0xff]
          %v4456 = vld [vmem:[%s394 + $0xb8] sm:$0xff]
          %v4457 = vld [vmem:[%s394 + $0xc0] sm:$0xff]
          %v4458 = vld [vmem:[%s394 + $0xc8] sm:$0xff]
          %v4459 = vld [vmem:[%s394 + $0xd0] sm:$0xff]
          %v4460 = vld [vmem:[%s394 + $0xd8] sm:$0xff]
          %v4461 = vld [vmem:[%s394 + $0xe0] sm:$0xff]
          %v4462 = vld [vmem:[%s394 + $0xe8] sm:$0xff]
          %v4463 = vld [vmem:[%s394 + $0xf0] sm:$0xff]
          %v4464 = vld [vmem:[%s394 + $0xf8] sm:$0xff]
          %v4465 = vmul.f32 %v4370, %v4433
          %v4466 = vmul.f32 %v4372, %v4434
          %v4467 = vmul.f32 %v4374, %v4435
          %v4468 = vmul.f32 %v4376, %v4436
          %v4469 = vmul.f32 %v4378, %v4437
          %v4470 = vmul.f32 %v4380, %v4438
          %v4471 = vmul.f32 %v4382, %v4439
          %v4472 = vmul.f32 %v4384, %v4440
          %v4473 = vmul.f32 %v4386, %v4441
          %v4474 = vmul.f32 %v4388, %v4442
          %v4475 = vmul.f32 %v4390, %v4443
          %v4476 = vmul.f32 %v4392, %v4444
          %v4477 = vmul.f32 %v4394, %v4445
          %v4478 = vmul.f32 %v4396, %v4446
          %v4479 = vmul.f32 %v4398, %v4447
          %v4480 = vmul.f32 %v4400, %v4448
          %v4481 = vmul.f32 %v4402, %v4449
          %v4482 = vmul.f32 %v4404, %v4450
          %v4483 = vmul.f32 %v4406, %v4451
          %v4484 = vmul.f32 %v4408, %v4452
          %v4485 = vmul.f32 %v4410, %v4453
          %v4486 = vmul.f32 %v4412, %v4454
          %v4487 = vmul.f32 %v4414, %v4455
          %v4488 = vmul.f32 %v4416, %v4456
          %v4489 = vmul.f32 %v4418, %v4457
          %v4490 = vmul.f32 %v4420, %v4458
          %v4491 = vmul.f32 %v4422, %v4459
          %v4492 = vmul.f32 %v4424, %v4460
          %v4493 = vmul.f32 %v4426, %v4461
          %v4494 = vmul.f32 %v4428, %v4462
          %v4495 = vmul.f32 %v4430, %v4463
          %v4496 = vmul.f32 %v4432, %v4464
          %v4497 = vadd.f32 %v4337, %v4465
          %v4498 = vadd.f32 %v4338, %v4466
          %v4499 = vadd.f32 %v4339, %v4467
          %v4500 = vadd.f32 %v4340, %v4468
          %v4501 = vadd.f32 %v4341, %v4469
          %v4502 = vadd.f32 %v4342, %v4470
          %v4503 = vadd.f32 %v4343, %v4471
          %v4504 = vadd.f32 %v4344, %v4472
          %v4505 = vadd.f32 %v4345, %v4473
          %v4506 = vadd.f32 %v4346, %v4474
          %v4507 = vadd.f32 %v4347, %v4475
          %v4508 = vadd.f32 %v4348, %v4476
          %v4509 = vadd.f32 %v4349, %v4477
          %v4510 = vadd.f32 %v4350, %v4478
          %v4511 = vadd.f32 %v4351, %v4479
          %v4512 = vadd.f32 %v4352, %v4480
          %v4513 = vadd.f32 %v4353, %v4481
          %v4514 = vadd.f32 %v4354, %v4482
          %v4515 = vadd.f32 %v4355, %v4483
          %v4516 = vadd.f32 %v4356, %v4484
          %v4517 = vadd.f32 %v4357, %v4485
          %v4518 = vadd.f32 %v4358, %v4486
          %v4519 = vadd.f32 %v4359, %v4487
          %v4520 = vadd.f32 %v4360, %v4488
          %v4521 = vadd.f32 %v4361, %v4489
          %v4522 = vadd.f32 %v4362, %v4490
          %v4523 = vadd.f32 %v4363, %v4491
          %v4524 = vadd.f32 %v4364, %v4492
          %v4525 = vadd.f32 %v4365, %v4493
          %v4526 = vadd.f32 %v4366, %v4494
          %v4527 = vadd.f32 %v4367, %v4495
          %v4528 = vadd.f32 %v4368, %v4496
          %v4529 = vmul.f32 %v3301, %v4305
          %v4530 = vmul.f32 %v3304, %v4306
          %v4531 = vmul.f32 %v3307, %v4307
          %v4532 = vmul.f32 %v3310, %v4308
          %v4533 = vmul.f32 %v3313, %v4309
          %v4534 = vmul.f32 %v3316, %v4310
          %v4535 = vmul.f32 %v3319, %v4311
          %v4536 = vmul.f32 %v3322, %v4312
          %v4537 = vmul.f32 %v3325, %v4313
          %v4538 = vmul.f32 %v3328, %v4314
          %v4539 = vmul.f32 %v3331, %v4315
          %v4540 = vmul.f32 %v3334, %v4316
          %v4541 = vmul.f32 %v3337, %v4317
          %v4542 = vmul.f32 %v3340, %v4318
          %v4543 = vmul.f32 %v3343, %v4319
          %v4544 = vmul.f32 %v3346, %v4320
          %v4545 = vmul.f32 %v3349, %v4321
          %v4546 = vmul.f32 %v3352, %v4322
          %v4547 = vmul.f32 %v3355, %v4323
          %v4548 = vmul.f32 %v3358, %v4324
          %v4549 = vmul.f32 %v3361, %v4325
          %v4550 = vmul.f32 %v3364, %v4326
          %v4551 = vmul.f32 %v3367, %v4327
          %v4552 = vmul.f32 %v3370, %v4328
          %v4553 = vmul.f32 %v3373, %v4329
          %v4554 = vmul.f32 %v3376, %v4330
          %v4555 = vmul.f32 %v3379, %v4331
          %v4556 = vmul.f32 %v3382, %v4332
          %v4557 = vmul.f32 %v3385, %v4333
          %v4558 = vmul.f32 %v3388, %v4334
          %v4559 = vmul.f32 %v3391, %v4335
          %v4560 = vmul.f32 %v3394, %v4336
          %4561 = vrot.lane.b32.xlu0 %v3301, 64
          %v4562 = vpop.permute.xlu0 %4561
          %4563 = vrot.lane.b32.xlu0 %v3304, 64
          %v4564 = vpop.permute.xlu0 %4563
          %4565 = vrot.lane.b32.xlu0 %v3307, 64
          %v4566 = vpop.permute.xlu0 %4565
          %4567 = vrot.lane.b32.xlu0 %v3310, 64
          %v4568 = vpop.permute.xlu0 %4567
          %4569 = vrot.lane.b32.xlu0 %v3313, 64
          %v4570 = vpop.permute.xlu0 %4569
          %4571 = vrot.lane.b32.xlu0 %v3316, 64
          %v4572 = vpop.permute.xlu0 %4571
          %4573 = vrot.lane.b32.xlu0 %v3319, 64
          %v4574 = vpop.permute.xlu0 %4573
          %4575 = vrot.lane.b32.xlu0 %v3322, 64
          %v4576 = vpop.permute.xlu0 %4575
          %4577 = vrot.lane.b32.xlu0 %v3325, 64
          %v4578 = vpop.permute.xlu0 %4577
          %4579 = vrot.lane.b32.xlu0 %v3328, 64
          %v4580 = vpop.permute.xlu0 %4579
          %4581 = vrot.lane.b32.xlu0 %v3331, 64
          %v4582 = vpop.permute.xlu0 %4581
          %4583 = vrot.lane.b32.xlu0 %v3334, 64
          %v4584 = vpop.permute.xlu0 %4583
          %4585 = vrot.lane.b32.xlu0 %v3337, 64
          %v4586 = vpop.permute.xlu0 %4585
          %4587 = vrot.lane.b32.xlu0 %v3340, 64
          %v4588 = vpop.permute.xlu0 %4587
          %4589 = vrot.lane.b32.xlu0 %v3343, 64
          %v4590 = vpop.permute.xlu0 %4589
          %4591 = vrot.lane.b32.xlu0 %v3346, 64
          %v4592 = vpop.permute.xlu0 %4591
          %4593 = vrot.lane.b32.xlu0 %v3349, 64
          %v4594 = vpop.permute.xlu0 %4593
          %4595 = vrot.lane.b32.xlu0 %v3352, 64
          %v4596 = vpop.permute.xlu0 %4595
          %4597 = vrot.lane.b32.xlu0 %v3355, 64
          %v4598 = vpop.permute.xlu0 %4597
          %4599 = vrot.lane.b32.xlu0 %v3358, 64
          %v4600 = vpop.permute.xlu0 %4599
          %4601 = vrot.lane.b32.xlu0 %v3361, 64
          %v4602 = vpop.permute.xlu0 %4601
          %4603 = vrot.lane.b32.xlu0 %v3364, 64
          %v4604 = vpop.permute.xlu0 %4603
          %4605 = vrot.lane.b32.xlu0 %v3367, 64
          %v4606 = vpop.permute.xlu0 %4605
          %4607 = vrot.lane.b32.xlu0 %v3370, 64
          %v4608 = vpop.permute.xlu0 %4607
          %4609 = vrot.lane.b32.xlu0 %v3373, 64
          %v4610 = vpop.permute.xlu0 %4609
          %4611 = vrot.lane.b32.xlu0 %v3376, 64
          %v4612 = vpop.permute.xlu0 %4611
          %4613 = vrot.lane.b32.xlu0 %v3379, 64
          %v4614 = vpop.permute.xlu0 %4613
          %4615 = vrot.lane.b32.xlu0 %v3382, 64
          %v4616 = vpop.permute.xlu0 %4615
          %4617 = vrot.lane.b32.xlu0 %v3385, 64
          %v4618 = vpop.permute.xlu0 %4617
          %4619 = vrot.lane.b32.xlu0 %v3388, 64
          %v4620 = vpop.permute.xlu0 %4619
          %4621 = vrot.lane.b32.xlu0 %v3391, 64
          %v4622 = vpop.permute.xlu0 %4621
          %4623 = vrot.lane.b32.xlu0 %v3394, 64
          %v4624 = vpop.permute.xlu0 %4623
          %v4625 = vmul.f32 %v4562, %v4433
          %v4626 = vmul.f32 %v4564, %v4434
          %v4627 = vmul.f32 %v4566, %v4435
          %v4628 = vmul.f32 %v4568, %v4436
          %v4629 = vmul.f32 %v4570, %v4437
          %v4630 = vmul.f32 %v4572, %v4438
          %v4631 = vmul.f32 %v4574, %v4439
          %v4632 = vmul.f32 %v4576, %v4440
          %v4633 = vmul.f32 %v4578, %v4441
          %v4634 = vmul.f32 %v4580, %v4442
          %v4635 = vmul.f32 %v4582, %v4443
          %v4636 = vmul.f32 %v4584, %v4444
          %v4637 = vmul.f32 %v4586, %v4445
          %v4638 = vmul.f32 %v4588, %v4446
          %v4639 = vmul.f32 %v4590, %v4447
          %v4640 = vmul.f32 %v4592, %v4448
          %v4641 = vmul.f32 %v4594, %v4449
          %v4642 = vmul.f32 %v4596, %v4450
          %v4643 = vmul.f32 %v4598, %v4451
          %v4644 = vmul.f32 %v4600, %v4452
          %v4645 = vmul.f32 %v4602, %v4453
          %v4646 = vmul.f32 %v4604, %v4454
          %v4647 = vmul.f32 %v4606, %v4455
          %v4648 = vmul.f32 %v4608, %v4456
          %v4649 = vmul.f32 %v4610, %v4457
          %v4650 = vmul.f32 %v4612, %v4458
          %v4651 = vmul.f32 %v4614, %v4459
          %v4652 = vmul.f32 %v4616, %v4460
          %v4653 = vmul.f32 %v4618, %v4461
          %v4654 = vmul.f32 %v4620, %v4462
          %v4655 = vmul.f32 %v4622, %v4463
          %v4656 = vmul.f32 %v4624, %v4464
          %v4657 = vadd.f32 %v4529, %v4625
          %v4658 = vadd.f32 %v4530, %v4626
          %v4659 = vadd.f32 %v4531, %v4627
          %v4660 = vadd.f32 %v4532, %v4628
          %v4661 = vadd.f32 %v4533, %v4629
          %v4662 = vadd.f32 %v4534, %v4630
          %v4663 = vadd.f32 %v4535, %v4631
          %v4664 = vadd.f32 %v4536, %v4632
          %v4665 = vadd.f32 %v4537, %v4633
          %v4666 = vadd.f32 %v4538, %v4634
          %v4667 = vadd.f32 %v4539, %v4635
          %v4668 = vadd.f32 %v4540, %v4636
          %v4669 = vadd.f32 %v4541, %v4637
          %v4670 = vadd.f32 %v4542, %v4638
          %v4671 = vadd.f32 %v4543, %v4639
          %v4672 = vadd.f32 %v4544, %v4640
          %v4673 = vadd.f32 %v4545, %v4641
          %v4674 = vadd.f32 %v4546, %v4642
          %v4675 = vadd.f32 %v4547, %v4643
          %v4676 = vadd.f32 %v4548, %v4644
          %v4677 = vadd.f32 %v4549, %v4645
          %v4678 = vadd.f32 %v4550, %v4646
          %v4679 = vadd.f32 %v4551, %v4647
          %v4680 = vadd.f32 %v4552, %v4648
          %v4681 = vadd.f32 %v4553, %v4649
          %v4682 = vadd.f32 %v4554, %v4650
          %v4683 = vadd.f32 %v4555, %v4651
          %v4684 = vadd.f32 %v4556, %v4652
          %v4685 = vadd.f32 %v4557, %v4653
          %v4686 = vadd.f32 %v4558, %v4654
          %v4687 = vadd.f32 %v4559, %v4655
          %v4688 = vadd.f32 %v4560, %v4656
          %v4689 = vmul.f32 %v3753, %v4305
          %v4690 = vmul.f32 %v3756, %v4306
          %v4691 = vmul.f32 %v3759, %v4307
          %v4692 = vmul.f32 %v3762, %v4308
          %v4693 = vmul.f32 %v3765, %v4309
          %v4694 = vmul.f32 %v3768, %v4310
          %v4695 = vmul.f32 %v3771, %v4311
          %v4696 = vmul.f32 %v3774, %v4312
          %v4697 = vmul.f32 %v3777, %v4313
          %v4698 = vmul.f32 %v3780, %v4314
          %v4699 = vmul.f32 %v3783, %v4315
          %v4700 = vmul.f32 %v3786, %v4316
          %v4701 = vmul.f32 %v3789, %v4317
          %v4702 = vmul.f32 %v3792, %v4318
          %v4703 = vmul.f32 %v3795, %v4319
          %v4704 = vmul.f32 %v3798, %v4320
          %v4705 = vmul.f32 %v3801, %v4321
          %v4706 = vmul.f32 %v3804, %v4322
          %v4707 = vmul.f32 %v3807, %v4323
          %v4708 = vmul.f32 %v3810, %v4324
          %v4709 = vmul.f32 %v3813, %v4325
          %v4710 = vmul.f32 %v3816, %v4326
          %v4711 = vmul.f32 %v3819, %v4327
          %v4712 = vmul.f32 %v3822, %v4328
          %v4713 = vmul.f32 %v3825, %v4329
          %v4714 = vmul.f32 %v3828, %v4330
          %v4715 = vmul.f32 %v3831, %v4331
          %v4716 = vmul.f32 %v3834, %v4332
          %v4717 = vmul.f32 %v3837, %v4333
          %v4718 = vmul.f32 %v3840, %v4334
          %v4719 = vmul.f32 %v3843, %v4335
          %v4720 = vmul.f32 %v3846, %v4336
          %4721 = vrot.lane.b32.xlu0 %v3753, 64
          %v4722 = vpop.permute.xlu0 %4721
          %4723 = vrot.lane.b32.xlu0 %v3756, 64
          %v4724 = vpop.permute.xlu0 %4723
          %4725 = vrot.lane.b32.xlu0 %v3759, 64
          %v4726 = vpop.permute.xlu0 %4725
          %4727 = vrot.lane.b32.xlu0 %v3762, 64
          %v4728 = vpop.permute.xlu0 %4727
          %4729 = vrot.lane.b32.xlu0 %v3765, 64
          %v4730 = vpop.permute.xlu0 %4729
          %4731 = vrot.lane.b32.xlu0 %v3768, 64
          %v4732 = vpop.permute.xlu0 %4731
          %4733 = vrot.lane.b32.xlu0 %v3771, 64
          %v4734 = vpop.permute.xlu0 %4733
          %4735 = vrot.lane.b32.xlu0 %v3774, 64
          %v4736 = vpop.permute.xlu0 %4735
          %4737 = vrot.lane.b32.xlu0 %v3777, 64
          %v4738 = vpop.permute.xlu0 %4737
          %4739 = vrot.lane.b32.xlu0 %v3780, 64
          %v4740 = vpop.permute.xlu0 %4739
          %4741 = vrot.lane.b32.xlu0 %v3783, 64
          %v4742 = vpop.permute.xlu0 %4741
          %4743 = vrot.lane.b32.xlu0 %v3786, 64
          %v4744 = vpop.permute.xlu0 %4743
          %4745 = vrot.lane.b32.xlu0 %v3789, 64
          %v4746 = vpop.permute.xlu0 %4745
          %4747 = vrot.lane.b32.xlu0 %v3792, 64
          %v4748 = vpop.permute.xlu0 %4747
          %4749 = vrot.lane.b32.xlu0 %v3795, 64
          %v4750 = vpop.permute.xlu0 %4749
          %4751 = vrot.lane.b32.xlu0 %v3798, 64
          %v4752 = vpop.permute.xlu0 %4751
          %4753 = vrot.lane.b32.xlu0 %v3801, 64
          %v4754 = vpop.permute.xlu0 %4753
          %4755 = vrot.lane.b32.xlu0 %v3804, 64
          %v4756 = vpop.permute.xlu0 %4755
          %4757 = vrot.lane.b32.xlu0 %v3807, 64
          %v4758 = vpop.permute.xlu0 %4757
          %4759 = vrot.lane.b32.xlu0 %v3810, 64
          %v4760 = vpop.permute.xlu0 %4759
          %4761 = vrot.lane.b32.xlu0 %v3813, 64
          %v4762 = vpop.permute.xlu0 %4761
          %4763 = vrot.lane.b32.xlu0 %v3816, 64
          %v4764 = vpop.permute.xlu0 %4763
          %4765 = vrot.lane.b32.xlu0 %v3819, 64
          %v4766 = vpop.permute.xlu0 %4765
          %4767 = vrot.lane.b32.xlu0 %v3822, 64
          %v4768 = vpop.permute.xlu0 %4767
          %4769 = vrot.lane.b32.xlu0 %v3825, 64
          %v4770 = vpop.permute.xlu0 %4769
          %4771 = vrot.lane.b32.xlu0 %v3828, 64
          %v4772 = vpop.permute.xlu0 %4771
          %4773 = vrot.lane.b32.xlu0 %v3831, 64
          %v4774 = vpop.permute.xlu0 %4773
          %4775 = vrot.lane.b32.xlu0 %v3834, 64
          %v4776 = vpop.permute.xlu0 %4775
          %4777 = vrot.lane.b32.xlu0 %v3837, 64
          %v4778 = vpop.permute.xlu0 %4777
          %4779 = vrot.lane.b32.xlu0 %v3840, 64
          %v4780 = vpop.permute.xlu0 %4779
          %4781 = vrot.lane.b32.xlu0 %v3843, 64
          %v4782 = vpop.permute.xlu0 %4781
          %4783 = vrot.lane.b32.xlu0 %v3846, 64
          %v4784 = vpop.permute.xlu0 %4783
          %v4785 = vmul.f32 %v4722, %v4433
          %v4786 = vmul.f32 %v4724, %v4434
          %v4787 = vmul.f32 %v4726, %v4435
          %v4788 = vmul.f32 %v4728, %v4436
          %v4789 = vmul.f32 %v4730, %v4437
          %v4790 = vmul.f32 %v4732, %v4438
          %v4791 = vmul.f32 %v4734, %v4439
          %v4792 = vmul.f32 %v4736, %v4440
          %v4793 = vmul.f32 %v4738, %v4441
          %v4794 = vmul.f32 %v4740, %v4442
          %v4795 = vmul.f32 %v4742, %v4443
          %v4796 = vmul.f32 %v4744, %v4444
          %v4797 = vmul.f32 %v4746, %v4445
          %v4798 = vmul.f32 %v4748, %v4446
          %v4799 = vmul.f32 %v4750, %v4447
          %v4800 = vmul.f32 %v4752, %v4448
          %v4801 = vmul.f32 %v4754, %v4449
          %v4802 = vmul.f32 %v4756, %v4450
          %v4803 = vmul.f32 %v4758, %v4451
          %v4804 = vmul.f32 %v4760, %v4452
          %v4805 = vmul.f32 %v4762, %v4453
          %v4806 = vmul.f32 %v4764, %v4454
          %v4807 = vmul.f32 %v4766, %v4455
          %v4808 = vmul.f32 %v4768, %v4456
          %v4809 = vmul.f32 %v4770, %v4457
          %v4810 = vmul.f32 %v4772, %v4458
          %v4811 = vmul.f32 %v4774, %v4459
          %v4812 = vmul.f32 %v4776, %v4460
          %v4813 = vmul.f32 %v4778, %v4461
          %v4814 = vmul.f32 %v4780, %v4462
          %v4815 = vmul.f32 %v4782, %v4463
          %v4816 = vmul.f32 %v4784, %v4464
          %v4817 = vadd.f32 %v4689, %v4785
          %v4818 = vadd.f32 %v4690, %v4786
          %v4819 = vadd.f32 %v4691, %v4787
          %v4820 = vadd.f32 %v4692, %v4788
          %v4821 = vadd.f32 %v4693, %v4789
          %v4822 = vadd.f32 %v4694, %v4790
          %v4823 = vadd.f32 %v4695, %v4791
          %v4824 = vadd.f32 %v4696, %v4792
          %v4825 = vadd.f32 %v4697, %v4793
          %v4826 = vadd.f32 %v4698, %v4794
          %v4827 = vadd.f32 %v4699, %v4795
          %v4828 = vadd.f32 %v4700, %v4796
          %v4829 = vadd.f32 %v4701, %v4797
          %v4830 = vadd.f32 %v4702, %v4798
          %v4831 = vadd.f32 %v4703, %v4799
          %v4832 = vadd.f32 %v4704, %v4800
          %v4833 = vadd.f32 %v4705, %v4801
          %v4834 = vadd.f32 %v4706, %v4802
          %v4835 = vadd.f32 %v4707, %v4803
          %v4836 = vadd.f32 %v4708, %v4804
          %v4837 = vadd.f32 %v4709, %v4805
          %v4838 = vadd.f32 %v4710, %v4806
          %v4839 = vadd.f32 %v4711, %v4807
          %v4840 = vadd.f32 %v4712, %v4808
          %v4841 = vadd.f32 %v4713, %v4809
          %v4842 = vadd.f32 %v4714, %v4810
          %v4843 = vadd.f32 %v4715, %v4811
          %v4844 = vadd.f32 %v4716, %v4812
          %v4845 = vadd.f32 %v4717, %v4813
          %v4846 = vadd.f32 %v4718, %v4814
          %v4847 = vadd.f32 %v4719, %v4815
          %v4848 = vadd.f32 %v4720, %v4816
          %v4849 = vmul.f32 %v4205, %v4305
          %v4850 = vmul.f32 %v4208, %v4306
          %v4851 = vmul.f32 %v4211, %v4307
          %v4852 = vmul.f32 %v4214, %v4308
          %v4853 = vmul.f32 %v4217, %v4309
          %v4854 = vmul.f32 %v4220, %v4310
          %v4855 = vmul.f32 %v4223, %v4311
          %v4856 = vmul.f32 %v4226, %v4312
          %v4857 = vmul.f32 %v4229, %v4313
          %v4858 = vmul.f32 %v4232, %v4314
          %v4859 = vmul.f32 %v4235, %v4315
          %v4860 = vmul.f32 %v4238, %v4316
          %v4861 = vmul.f32 %v4241, %v4317
          %v4862 = vmul.f32 %v4244, %v4318
          %v4863 = vmul.f32 %v4247, %v4319
          %v4864 = vmul.f32 %v4250, %v4320
          %v4865 = vmul.f32 %v4253, %v4321
          %v4866 = vmul.f32 %v4256, %v4322
          %v4867 = vmul.f32 %v4259, %v4323
          %v4868 = vmul.f32 %v4262, %v4324
          %v4869 = vmul.f32 %v4265, %v4325
          %v4870 = vmul.f32 %v4268, %v4326
          %v4871 = vmul.f32 %v4271, %v4327
          %v4872 = vmul.f32 %v4274, %v4328
          %v4873 = vmul.f32 %v4277, %v4329
          %v4874 = vmul.f32 %v4280, %v4330
          %v4875 = vmul.f32 %v4283, %v4331
          %v4876 = vmul.f32 %v4286, %v4332
          %v4877 = vmul.f32 %v4289, %v4333
          %v4878 = vmul.f32 %v4292, %v4334
          %v4879 = vmul.f32 %v4295, %v4335
          %v4880 = vmul.f32 %v4298, %v4336
          %4881 = vrot.lane.b32.xlu0 %v4205, 64
          %v4882 = vpop.permute.xlu0 %4881
          %4883 = vrot.lane.b32.xlu0 %v4208, 64
          %v4884 = vpop.permute.xlu0 %4883
          %4885 = vrot.lane.b32.xlu0 %v4211, 64
          %v4886 = vpop.permute.xlu0 %4885
          %4887 = vrot.lane.b32.xlu0 %v4214, 64
          %v4888 = vpop.permute.xlu0 %4887
          %4889 = vrot.lane.b32.xlu0 %v4217, 64
          %v4890 = vpop.permute.xlu0 %4889
          %4891 = vrot.lane.b32.xlu0 %v4220, 64
          %v4892 = vpop.permute.xlu0 %4891
          %4893 = vrot.lane.b32.xlu0 %v4223, 64
          %v4894 = vpop.permute.xlu0 %4893
          %4895 = vrot.lane.b32.xlu0 %v4226, 64
          %v4896 = vpop.permute.xlu0 %4895
          %4897 = vrot.lane.b32.xlu0 %v4229, 64
          %v4898 = vpop.permute.xlu0 %4897
          %4899 = vrot.lane.b32.xlu0 %v4232, 64
          %v4900 = vpop.permute.xlu0 %4899
          %4901 = vrot.lane.b32.xlu0 %v4235, 64
          %v4902 = vpop.permute.xlu0 %4901
          %4903 = vrot.lane.b32.xlu0 %v4238, 64
          %v4904 = vpop.permute.xlu0 %4903
          %4905 = vrot.lane.b32.xlu0 %v4241, 64
          %v4906 = vpop.permute.xlu0 %4905
          %4907 = vrot.lane.b32.xlu0 %v4244, 64
          %v4908 = vpop.permute.xlu0 %4907
          %4909 = vrot.lane.b32.xlu0 %v4247, 64
          %v4910 = vpop.permute.xlu0 %4909
          %4911 = vrot.lane.b32.xlu0 %v4250, 64
          %v4912 = vpop.permute.xlu0 %4911
          %4913 = vrot.lane.b32.xlu0 %v4253, 64
          %v4914 = vpop.permute.xlu0 %4913
          %4915 = vrot.lane.b32.xlu0 %v4256, 64
          %v4916 = vpop.permute.xlu0 %4915
          %4917 = vrot.lane.b32.xlu0 %v4259, 64
          %v4918 = vpop.permute.xlu0 %4917
          %4919 = vrot.lane.b32.xlu0 %v4262, 64
          %v4920 = vpop.permute.xlu0 %4919
          %4921 = vrot.lane.b32.xlu0 %v4265, 64
          %v4922 = vpop.permute.xlu0 %4921
          %4923 = vrot.lane.b32.xlu0 %v4268, 64
          %v4924 = vpop.permute.xlu0 %4923
          %4925 = vrot.lane.b32.xlu0 %v4271, 64
          %v4926 = vpop.permute.xlu0 %4925
          %4927 = vrot.lane.b32.xlu0 %v4274, 64
          %v4928 = vpop.permute.xlu0 %4927
          %4929 = vrot.lane.b32.xlu0 %v4277, 64
          %v4930 = vpop.permute.xlu0 %4929
          %4931 = vrot.lane.b32.xlu0 %v4280, 64
          %v4932 = vpop.permute.xlu0 %4931
          %4933 = vrot.lane.b32.xlu0 %v4283, 64
          %v4934 = vpop.permute.xlu0 %4933
          %4935 = vrot.lane.b32.xlu0 %v4286, 64
          %v4936 = vpop.permute.xlu0 %4935
          %4937 = vrot.lane.b32.xlu0 %v4289, 64
          %v4938 = vpop.permute.xlu0 %4937
          %4939 = vrot.lane.b32.xlu0 %v4292, 64
          %v4940 = vpop.permute.xlu0 %4939
          %4941 = vrot.lane.b32.xlu0 %v4295, 64
          %v4942 = vpop.permute.xlu0 %4941
          %4943 = vrot.lane.b32.xlu0 %v4298, 64
          %v4944 = vpop.permute.xlu0 %4943
          %v4945 = vmul.f32 %v4882, %v4433
          %v4946 = vmul.f32 %v4884, %v4434
          %v4947 = vmul.f32 %v4886, %v4435
          %v4948 = vmul.f32 %v4888, %v4436
          %v4949 = vmul.f32 %v4890, %v4437
          %v4950 = vmul.f32 %v4892, %v4438
          %v4951 = vmul.f32 %v4894, %v4439
          %v4952 = vmul.f32 %v4896, %v4440
          %v4953 = vmul.f32 %v4898, %v4441
          %v4954 = vmul.f32 %v4900, %v4442
          %v4955 = vmul.f32 %v4902, %v4443
          %v4956 = vmul.f32 %v4904, %v4444
          %v4957 = vmul.f32 %v4906, %v4445
          %v4958 = vmul.f32 %v4908, %v4446
          %v4959 = vmul.f32 %v4910, %v4447
          %v4960 = vmul.f32 %v4912, %v4448
          %v4961 = vmul.f32 %v4914, %v4449
          %v4962 = vmul.f32 %v4916, %v4450
          %v4963 = vmul.f32 %v4918, %v4451
          %v4964 = vmul.f32 %v4920, %v4452
          %v4965 = vmul.f32 %v4922, %v4453
          %v4966 = vmul.f32 %v4924, %v4454
          %v4967 = vmul.f32 %v4926, %v4455
          %v4968 = vmul.f32 %v4928, %v4456
          %v4969 = vmul.f32 %v4930, %v4457
          %v4970 = vmul.f32 %v4932, %v4458
          %v4971 = vmul.f32 %v4934, %v4459
          %v4972 = vmul.f32 %v4936, %v4460
          %v4973 = vmul.f32 %v4938, %v4461
          %v4974 = vmul.f32 %v4940, %v4462
          %v4975 = vmul.f32 %v4942, %v4463
          %v4976 = vmul.f32 %v4944, %v4464
          %v4977 = vadd.f32 %v4849, %v4945
          %v4978 = vadd.f32 %v4850, %v4946
          %v4979 = vadd.f32 %v4851, %v4947
          %v4980 = vadd.f32 %v4852, %v4948
          %v4981 = vadd.f32 %v4853, %v4949
          %v4982 = vadd.f32 %v4854, %v4950
          %v4983 = vadd.f32 %v4855, %v4951
          %v4984 = vadd.f32 %v4856, %v4952
          %v4985 = vadd.f32 %v4857, %v4953
          %v4986 = vadd.f32 %v4858, %v4954
          %v4987 = vadd.f32 %v4859, %v4955
          %v4988 = vadd.f32 %v4860, %v4956
          %v4989 = vadd.f32 %v4861, %v4957
          %v4990 = vadd.f32 %v4862, %v4958
          %v4991 = vadd.f32 %v4863, %v4959
          %v4992 = vadd.f32 %v4864, %v4960
          %v4993 = vadd.f32 %v4865, %v4961
          %v4994 = vadd.f32 %v4866, %v4962
          %v4995 = vadd.f32 %v4867, %v4963
          %v4996 = vadd.f32 %v4868, %v4964
          %v4997 = vadd.f32 %v4869, %v4965
          %v4998 = vadd.f32 %v4870, %v4966
          %v4999 = vadd.f32 %v4871, %v4967
          %v5000 = vadd.f32 %v4872, %v4968
          %v5001 = vadd.f32 %v4873, %v4969
          %v5002 = vadd.f32 %v4874, %v4970
          %v5003 = vadd.f32 %v4875, %v4971
          %v5004 = vadd.f32 %v4876, %v4972
          %v5005 = vadd.f32 %v4877, %v4973
          %v5006 = vadd.f32 %v4878, %v4974
          %v5007 = vadd.f32 %v4879, %v4975
          %v5008 = vadd.f32 %v4880, %v4976
          %p5009 = scmp.lt.s32.totalorder %s4300, 512
          %s5010 = scalar_select %p5009, 0.088388346, 1.0
          %v5011 = vstv %s5010
          %v5012 = vmul.f32 %v4497, %v5011
          %v5013 = vmul.f32 %v4657, %v5011
          %v5014 = vmul.f32 %v4817, %v5011
          %v5015 = vmul.f32 %v4977, %v5011
          %v5016 = vmul.f32 %v4498, %v5011
          %v5017 = vmul.f32 %v4658, %v5011
          %v5018 = vmul.f32 %v4818, %v5011
          %v5019 = vmul.f32 %v4978, %v5011
          %v5020 = vmul.f32 %v4499, %v5011
          %v5021 = vmul.f32 %v4659, %v5011
          %v5022 = vmul.f32 %v4819, %v5011
          %v5023 = vmul.f32 %v4979, %v5011
          %v5024 = vmul.f32 %v4500, %v5011
          %v5025 = vmul.f32 %v4660, %v5011
          %v5026 = vmul.f32 %v4820, %v5011
          %v5027 = vmul.f32 %v4980, %v5011
          %v5028 = vmul.f32 %v4501, %v5011
          %v5029 = vmul.f32 %v4661, %v5011
          %v5030 = vmul.f32 %v4821, %v5011
          %v5031 = vmul.f32 %v4981, %v5011
          %v5032 = vmul.f32 %v4502, %v5011
          %v5033 = vmul.f32 %v4662, %v5011
          %v5034 = vmul.f32 %v4822, %v5011
          %v5035 = vmul.f32 %v4982, %v5011
          %v5036 = vmul.f32 %v4503, %v5011
          %v5037 = vmul.f32 %v4663, %v5011
          %v5038 = vmul.f32 %v4823, %v5011
          %v5039 = vmul.f32 %v4983, %v5011
          %v5040 = vmul.f32 %v4504, %v5011
          %v5041 = vmul.f32 %v4664, %v5011
          %v5042 = vmul.f32 %v4824, %v5011
          %v5043 = vmul.f32 %v4984, %v5011
          %v5044 = vmul.f32 %v4505, %v5011
          %v5045 = vmul.f32 %v4665, %v5011
          %v5046 = vmul.f32 %v4825, %v5011
          %v5047 = vmul.f32 %v4985, %v5011
          %v5048 = vmul.f32 %v4506, %v5011
          %v5049 = vmul.f32 %v4666, %v5011
          %v5050 = vmul.f32 %v4826, %v5011
          %v5051 = vmul.f32 %v4986, %v5011
          %v5052 = vmul.f32 %v4507, %v5011
          %v5053 = vmul.f32 %v4667, %v5011
          %v5054 = vmul.f32 %v4827, %v5011
          %v5055 = vmul.f32 %v4987, %v5011
          %v5056 = vmul.f32 %v4508, %v5011
          %v5057 = vmul.f32 %v4668, %v5011
          %v5058 = vmul.f32 %v4828, %v5011
          %v5059 = vmul.f32 %v4988, %v5011
          %v5060 = vmul.f32 %v4509, %v5011
          %v5061 = vmul.f32 %v4669, %v5011
          %v5062 = vmul.f32 %v4829, %v5011
          %v5063 = vmul.f32 %v4989, %v5011
          %v5064 = vmul.f32 %v4510, %v5011
          %v5065 = vmul.f32 %v4670, %v5011
          %v5066 = vmul.f32 %v4830, %v5011
          %v5067 = vmul.f32 %v4990, %v5011
          %v5068 = vmul.f32 %v4511, %v5011
          %v5069 = vmul.f32 %v4671, %v5011
          %v5070 = vmul.f32 %v4831, %v5011
          %v5071 = vmul.f32 %v4991, %v5011
          %v5072 = vmul.f32 %v4512, %v5011
          %v5073 = vmul.f32 %v4672, %v5011
          %v5074 = vmul.f32 %v4832, %v5011
          %v5075 = vmul.f32 %v4992, %v5011
          %v5076 = vmul.f32 %v4513, %v5011
          %v5077 = vmul.f32 %v4673, %v5011
          %v5078 = vmul.f32 %v4833, %v5011
          %v5079 = vmul.f32 %v4993, %v5011
          %v5080 = vmul.f32 %v4514, %v5011
          %v5081 = vmul.f32 %v4674, %v5011
          %v5082 = vmul.f32 %v4834, %v5011
          %v5083 = vmul.f32 %v4994, %v5011
          %v5084 = vmul.f32 %v4515, %v5011
          %v5085 = vmul.f32 %v4675, %v5011
          %v5086 = vmul.f32 %v4835, %v5011
          %v5087 = vmul.f32 %v4995, %v5011
          %v5088 = vmul.f32 %v4516, %v5011
          %v5089 = vmul.f32 %v4676, %v5011
          %v5090 = vmul.f32 %v4836, %v5011
          %v5091 = vmul.f32 %v4996, %v5011
          %v5092 = vmul.f32 %v4517, %v5011
          %v5093 = vmul.f32 %v4677, %v5011
          %v5094 = vmul.f32 %v4837, %v5011
          %v5095 = vmul.f32 %v4997, %v5011
          %v5096 = vmul.f32 %v4518, %v5011
          %v5097 = vmul.f32 %v4678, %v5011
          %v5098 = vmul.f32 %v4838, %v5011
          %v5099 = vmul.f32 %v4998, %v5011
          %v5100 = vmul.f32 %v4519, %v5011
          %v5101 = vmul.f32 %v4679, %v5011
          %v5102 = vmul.f32 %v4839, %v5011
          %v5103 = vmul.f32 %v4999, %v5011
          %v5104 = vmul.f32 %v4520, %v5011
          %v5105 = vmul.f32 %v4680, %v5011
          %v5106 = vmul.f32 %v4840, %v5011
          %v5107 = vmul.f32 %v5000, %v5011
          %v5108 = vmul.f32 %v4521, %v5011
          %v5109 = vmul.f32 %v4681, %v5011
          %v5110 = vmul.f32 %v4841, %v5011
          %v5111 = vmul.f32 %v5001, %v5011
          %v5112 = vmul.f32 %v4522, %v5011
          %v5113 = vmul.f32 %v4682, %v5011
          %v5114 = vmul.f32 %v4842, %v5011
          %v5115 = vmul.f32 %v5002, %v5011
          %v5116 = vmul.f32 %v4523, %v5011
          %v5117 = vmul.f32 %v4683, %v5011
          %v5118 = vmul.f32 %v4843, %v5011
          %v5119 = vmul.f32 %v5003, %v5011
          %v5120 = vmul.f32 %v4524, %v5011
          %v5121 = vmul.f32 %v4684, %v5011
          %v5122 = vmul.f32 %v4844, %v5011
          %v5123 = vmul.f32 %v5004, %v5011
          %v5124 = vmul.f32 %v4525, %v5011
          %v5125 = vmul.f32 %v4685, %v5011
          %v5126 = vmul.f32 %v4845, %v5011
          %v5127 = vmul.f32 %v5005, %v5011
          %v5128 = vmul.f32 %v4526, %v5011
          %v5129 = vmul.f32 %v4686, %v5011
          %v5130 = vmul.f32 %v4846, %v5011
          %v5131 = vmul.f32 %v5006, %v5011
          %v5132 = vmul.f32 %v4527, %v5011
          %v5133 = vmul.f32 %v4687, %v5011
          %v5134 = vmul.f32 %v4847, %v5011
          %v5135 = vmul.f32 %v5007, %v5011
          %v5136 = vmul.f32 %v4528, %v5011
          %v5137 = vmul.f32 %v4688, %v5011
          %v5138 = vmul.f32 %v4848, %v5011
          %v5139 = vmul.f32 %v5008, %v5011
          %5140 = vst [vmem:[%s438] sm:$0xff] %v5012
          %5141 = vst [vmem:[%s438 + $0x8] sm:$0xff] %v5013
          %5142 = vst [vmem:[%s438 + $0x10] sm:$0xff] %v5014
          %5143 = vst [vmem:[%s438 + $0x18] sm:$0xff] %v5015
          %5144 = vst [vmem:[%s438 + $0x20] sm:$0xff] %v5016
          %5145 = vst [vmem:[%s438 + $0x28] sm:$0xff] %v5017
          %5146 = vst [vmem:[%s438 + $0x30] sm:$0xff] %v5018
          %5147 = vst [vmem:[%s438 + $0x38] sm:$0xff] %v5019
          %5148 = vst [vmem:[%s438 + $0x40] sm:$0xff] %v5020
          %5149 = vst [vmem:[%s438 + $0x48] sm:$0xff] %v5021
          %5150 = vst [vmem:[%s438 + $0x50] sm:$0xff] %v5022
          %5151 = vst [vmem:[%s438 + $0x58] sm:$0xff] %v5023
          %5152 = vst [vmem:[%s438 + $0x60] sm:$0xff] %v5024
          %5153 = vst [vmem:[%s438 + $0x68] sm:$0xff] %v5025
          %5154 = vst [vmem:[%s438 + $0x70] sm:$0xff] %v5026
          %5155 = vst [vmem:[%s438 + $0x78] sm:$0xff] %v5027
          %5156 = vst [vmem:[%s438 + $0x80] sm:$0xff] %v5028
          %5157 = vst [vmem:[%s438 + $0x88] sm:$0xff] %v5029
          %5158 = vst [vmem:[%s438 + $0x90] sm:$0xff] %v5030
          %5159 = vst [vmem:[%s438 + $0x98] sm:$0xff] %v5031
          %5160 = vst [vmem:[%s438 + $0xa0] sm:$0xff] %v5032
          %5161 = vst [vmem:[%s438 + $0xa8] sm:$0xff] %v5033
          %5162 = vst [vmem:[%s438 + $0xb0] sm:$0xff] %v5034
          %5163 = vst [vmem:[%s438 + $0xb8] sm:$0xff] %v5035
          %5164 = vst [vmem:[%s438 + $0xc0] sm:$0xff] %v5036
          %5165 = vst [vmem:[%s438 + $0xc8] sm:$0xff] %v5037
          %5166 = vst [vmem:[%s438 + $0xd0] sm:$0xff] %v5038
          %5167 = vst [vmem:[%s438 + $0xd8] sm:$0xff] %v5039
          %5168 = vst [vmem:[%s438 + $0xe0] sm:$0xff] %v5040
          %5169 = vst [vmem:[%s438 + $0xe8] sm:$0xff] %v5041
          %5170 = vst [vmem:[%s438 + $0xf0] sm:$0xff] %v5042
          %5171 = vst [vmem:[%s438 + $0xf8] sm:$0xff] %v5043
          %5172 = vst [vmem:[%s438 + $0x100] sm:$0xff] %v5044
          %5173 = vst [vmem:[%s438 + $0x108] sm:$0xff] %v5045
          %5174 = vst [vmem:[%s438 + $0x110] sm:$0xff] %v5046
          %5175 = vst [vmem:[%s438 + $0x118] sm:$0xff] %v5047
          %5176 = vst [vmem:[%s438 + $0x120] sm:$0xff] %v5048
          %5177 = vst [vmem:[%s438 + $0x128] sm:$0xff] %v5049
          %5178 = vst [vmem:[%s438 + $0x130] sm:$0xff] %v5050
          %5179 = vst [vmem:[%s438 + $0x138] sm:$0xff] %v5051
          %5180 = vst [vmem:[%s438 + $0x140] sm:$0xff] %v5052
          %5181 = vst [vmem:[%s438 + $0x148] sm:$0xff] %v5053
          %5182 = vst [vmem:[%s438 + $0x150] sm:$0xff] %v5054
          %5183 = vst [vmem:[%s438 + $0x158] sm:$0xff] %v5055
          %5184 = vst [vmem:[%s438 + $0x160] sm:$0xff] %v5056
          %5185 = vst [vmem:[%s438 + $0x168] sm:$0xff] %v5057
          %5186 = vst [vmem:[%s438 + $0x170] sm:$0xff] %v5058
          %5187 = vst [vmem:[%s438 + $0x178] sm:$0xff] %v5059
          %5188 = vst [vmem:[%s438 + $0x180] sm:$0xff] %v5060
          %5189 = vst [vmem:[%s438 + $0x188] sm:$0xff] %v5061
          %5190 = vst [vmem:[%s438 + $0x190] sm:$0xff] %v5062
          %5191 = vst [vmem:[%s438 + $0x198] sm:$0xff] %v5063
          %5192 = vst [vmem:[%s438 + $0x1a0] sm:$0xff] %v5064
          %5193 = vst [vmem:[%s438 + $0x1a8] sm:$0xff] %v5065
          %5194 = vst [vmem:[%s438 + $0x1b0] sm:$0xff] %v5066
          %5195 = vst [vmem:[%s438 + $0x1b8] sm:$0xff] %v5067
          %5196 = vst [vmem:[%s438 + $0x1c0] sm:$0xff] %v5068
          %5197 = vst [vmem:[%s438 + $0x1c8] sm:$0xff] %v5069
          %5198 = vst [vmem:[%s438 + $0x1d0] sm:$0xff] %v5070
          %5199 = vst [vmem:[%s438 + $0x1d8] sm:$0xff] %v5071
          %5200 = vst [vmem:[%s438 + $0x1e0] sm:$0xff] %v5072
          %5201 = vst [vmem:[%s438 + $0x1e8] sm:$0xff] %v5073
          %5202 = vst [vmem:[%s438 + $0x1f0] sm:$0xff] %v5074
          %5203 = vst [vmem:[%s438 + $0x1f8] sm:$0xff] %v5075
          %5204 = vst [vmem:[%s438 + $0x200] sm:$0xff] %v5076
          %5205 = vst [vmem:[%s438 + $0x208] sm:$0xff] %v5077
          %5206 = vst [vmem:[%s438 + $0x210] sm:$0xff] %v5078
          %5207 = vst [vmem:[%s438 + $0x218] sm:$0xff] %v5079
          %5208 = vst [vmem:[%s438 + $0x220] sm:$0xff] %v5080
          %5209 = vst [vmem:[%s438 + $0x228] sm:$0xff] %v5081
          %5210 = vst [vmem:[%s438 + $0x230] sm:$0xff] %v5082
          %5211 = vst [vmem:[%s438 + $0x238] sm:$0xff] %v5083
          %5212 = vst [vmem:[%s438 + $0x240] sm:$0xff] %v5084
          %5213 = vst [vmem:[%s438 + $0x248] sm:$0xff] %v5085
          %5214 = vst [vmem:[%s438 + $0x250] sm:$0xff] %v5086
          %5215 = vst [vmem:[%s438 + $0x258] sm:$0xff] %v5087
          %5216 = vst [vmem:[%s438 + $0x260] sm:$0xff] %v5088
          %5217 = vst [vmem:[%s438 + $0x268] sm:$0xff] %v5089
          %5218 = vst [vmem:[%s438 + $0x270] sm:$0xff] %v5090
          %5219 = vst [vmem:[%s438 + $0x278] sm:$0xff] %v5091
          %5220 = vst [vmem:[%s438 + $0x280] sm:$0xff] %v5092
          %5221 = vst [vmem:[%s438 + $0x288] sm:$0xff] %v5093
          %5222 = vst [vmem:[%s438 + $0x290] sm:$0xff] %v5094
          %5223 = vst [vmem:[%s438 + $0x298] sm:$0xff] %v5095
          %5224 = vst [vmem:[%s438 + $0x2a0] sm:$0xff] %v5096
          %5225 = vst [vmem:[%s438 + $0x2a8] sm:$0xff] %v5097
          %5226 = vst [vmem:[%s438 + $0x2b0] sm:$0xff] %v5098
          %5227 = vst [vmem:[%s438 + $0x2b8] sm:$0xff] %v5099
          %5228 = vst [vmem:[%s438 + $0x2c0] sm:$0xff] %v5100
          %5229 = vst [vmem:[%s438 + $0x2c8] sm:$0xff] %v5101
          %5230 = vst [vmem:[%s438 + $0x2d0] sm:$0xff] %v5102
          %5231 = vst [vmem:[%s438 + $0x2d8] sm:$0xff] %v5103
          %5232 = vst [vmem:[%s438 + $0x2e0] sm:$0xff] %v5104
          %5233 = vst [vmem:[%s438 + $0x2e8] sm:$0xff] %v5105
          %5234 = vst [vmem:[%s438 + $0x2f0] sm:$0xff] %v5106
          %5235 = vst [vmem:[%s438 + $0x2f8] sm:$0xff] %v5107
          %5236 = vst [vmem:[%s438 + $0x300] sm:$0xff] %v5108
          %5237 = vst [vmem:[%s438 + $0x308] sm:$0xff] %v5109
          %5238 = vst [vmem:[%s438 + $0x310] sm:$0xff] %v5110
          %5239 = vst [vmem:[%s438 + $0x318] sm:$0xff] %v5111
          %5240 = vst [vmem:[%s438 + $0x320] sm:$0xff] %v5112
          %5241 = vst [vmem:[%s438 + $0x328] sm:$0xff] %v5113
          %5242 = vst [vmem:[%s438 + $0x330] sm:$0xff] %v5114
          %5243 = vst [vmem:[%s438 + $0x338] sm:$0xff] %v5115
          %5244 = vst [vmem:[%s438 + $0x340] sm:$0xff] %v5116
          %5245 = vst [vmem:[%s438 + $0x348] sm:$0xff] %v5117
          %5246 = vst [vmem:[%s438 + $0x350] sm:$0xff] %v5118
          %5247 = vst [vmem:[%s438 + $0x358] sm:$0xff] %v5119
          %5248 = vst [vmem:[%s438 + $0x360] sm:$0xff] %v5120
          %5249 = vst [vmem:[%s438 + $0x368] sm:$0xff] %v5121
          %5250 = vst [vmem:[%s438 + $0x370] sm:$0xff] %v5122
          %5251 = vst [vmem:[%s438 + $0x378] sm:$0xff] %v5123
          %5252 = vst [vmem:[%s438 + $0x380] sm:$0xff] %v5124
          %5253 = vst [vmem:[%s438 + $0x388] sm:$0xff] %v5125
          %5254 = vst [vmem:[%s438 + $0x390] sm:$0xff] %v5126
          %5255 = vst [vmem:[%s438 + $0x398] sm:$0xff] %v5127
          %5256 = vst [vmem:[%s438 + $0x3a0] sm:$0xff] %v5128
          %5257 = vst [vmem:[%s438 + $0x3a8] sm:$0xff] %v5129
          %5258 = vst [vmem:[%s438 + $0x3b0] sm:$0xff] %v5130
          %5259 = vst [vmem:[%s438 + $0x3b8] sm:$0xff] %v5131
          %5260 = vst [vmem:[%s438 + $0x3c0] sm:$0xff] %v5132
          %5261 = vst [vmem:[%s438 + $0x3c8] sm:$0xff] %v5133
          %5262 = vst [vmem:[%s438 + $0x3d0] sm:$0xff] %v5134
          %5263 = vst [vmem:[%s438 + $0x3d8] sm:$0xff] %v5135
          %5264 = vst [vmem:[%s438 + $0x3e0] sm:$0xff] %v5136
          %5265 = vst [vmem:[%s438 + $0x3e8] sm:$0xff] %v5137
          %5266 = vst [vmem:[%s438 + $0x3f0] sm:$0xff] %v5138
          %5267 = vst [vmem:[%s438 + $0x3f8] sm:$0xff] %v5139
        $region76: #{tpu_custom_call.1} parent=43 // pred_fallthru
          _
        %p5268 = scmp.ge.s32.totalorder %s4300, 1024
        // Predicated region
        $region77: #{tpu_custom_call.1} parent=43 // pred_check
          %p5269 = pneg %p5268
        $region78: #{tpu_custom_call.1} parent=43 // pred_check_branch
          %5271 = sbr.rel (%p5269) target = $region80
        $region79: #{tpu_custom_call.1} parent=43 // pred_region
          %5272 = vst [vmem:[%s438] sm:$0xff] %v2849
          %5273 = vst [vmem:[%s438 + $0x8] sm:$0xff] %v3301
          %5274 = vst [vmem:[%s438 + $0x10] sm:$0xff] %v3753
          %5275 = vst [vmem:[%s438 + $0x18] sm:$0xff] %v4205
          %5276 = vst [vmem:[%s438 + $0x20] sm:$0xff] %v2852
          %5277 = vst [vmem:[%s438 + $0x28] sm:$0xff] %v3304
          %5278 = vst [vmem:[%s438 + $0x30] sm:$0xff] %v3756
          %5279 = vst [vmem:[%s438 + $0x38] sm:$0xff] %v4208
          %5280 = vst [vmem:[%s438 + $0x40] sm:$0xff] %v2855
          %5281 = vst [vmem:[%s438 + $0x48] sm:$0xff] %v3307
          %5282 = vst [vmem:[%s438 + $0x50] sm:$0xff] %v3759
          %5283 = vst [vmem:[%s438 + $0x58] sm:$0xff] %v4211
          %5284 = vst [vmem:[%s438 + $0x60] sm:$0xff] %v2858
          %5285 = vst [vmem:[%s438 + $0x68] sm:$0xff] %v3310
          %5286 = vst [vmem:[%s438 + $0x70] sm:$0xff] %v3762
          %5287 = vst [vmem:[%s438 + $0x78] sm:$0xff] %v4214
          %5288 = vst [vmem:[%s438 + $0x80] sm:$0xff] %v2861
          %5289 = vst [vmem:[%s438 + $0x88] sm:$0xff] %v3313
          %5290 = vst [vmem:[%s438 + $0x90] sm:$0xff] %v3765
          %5291 = vst [vmem:[%s438 + $0x98] sm:$0xff] %v4217
          %5292 = vst [vmem:[%s438 + $0xa0] sm:$0xff] %v2864
          %5293 = vst [vmem:[%s438 + $0xa8] sm:$0xff] %v3316
          %5294 = vst [vmem:[%s438 + $0xb0] sm:$0xff] %v3768
          %5295 = vst [vmem:[%s438 + $0xb8] sm:$0xff] %v4220
          %5296 = vst [vmem:[%s438 + $0xc0] sm:$0xff] %v2867
          %5297 = vst [vmem:[%s438 + $0xc8] sm:$0xff] %v3319
          %5298 = vst [vmem:[%s438 + $0xd0] sm:$0xff] %v3771
          %5299 = vst [vmem:[%s438 + $0xd8] sm:$0xff] %v4223
          %5300 = vst [vmem:[%s438 + $0xe0] sm:$0xff] %v2870
          %5301 = vst [vmem:[%s438 + $0xe8] sm:$0xff] %v3322
          %5302 = vst [vmem:[%s438 + $0xf0] sm:$0xff] %v3774
          %5303 = vst [vmem:[%s438 + $0xf8] sm:$0xff] %v4226
          %5304 = vst [vmem:[%s438 + $0x100] sm:$0xff] %v2873
          %5305 = vst [vmem:[%s438 + $0x108] sm:$0xff] %v3325
          %5306 = vst [vmem:[%s438 + $0x110] sm:$0xff] %v3777
          %5307 = vst [vmem:[%s438 + $0x118] sm:$0xff] %v4229
          %5308 = vst [vmem:[%s438 + $0x120] sm:$0xff] %v2876
          %5309 = vst [vmem:[%s438 + $0x128] sm:$0xff] %v3328
          %5310 = vst [vmem:[%s438 + $0x130] sm:$0xff] %v3780
          %5311 = vst [vmem:[%s438 + $0x138] sm:$0xff] %v4232
          %5312 = vst [vmem:[%s438 + $0x140] sm:$0xff] %v2879
          %5313 = vst [vmem:[%s438 + $0x148] sm:$0xff] %v3331
          %5314 = vst [vmem:[%s438 + $0x150] sm:$0xff] %v3783
          %5315 = vst [vmem:[%s438 + $0x158] sm:$0xff] %v4235
          %5316 = vst [vmem:[%s438 + $0x160] sm:$0xff] %v2882
          %5317 = vst [vmem:[%s438 + $0x168] sm:$0xff] %v3334
          %5318 = vst [vmem:[%s438 + $0x170] sm:$0xff] %v3786
          %5319 = vst [vmem:[%s438 + $0x178] sm:$0xff] %v4238
          %5320 = vst [vmem:[%s438 + $0x180] sm:$0xff] %v2885
          %5321 = vst [vmem:[%s438 + $0x188] sm:$0xff] %v3337
          %5322 = vst [vmem:[%s438 + $0x190] sm:$0xff] %v3789
          %5323 = vst [vmem:[%s438 + $0x198] sm:$0xff] %v4241
          %5324 = vst [vmem:[%s438 + $0x1a0] sm:$0xff] %v2888
          %5325 = vst [vmem:[%s438 + $0x1a8] sm:$0xff] %v3340
          %5326 = vst [vmem:[%s438 + $0x1b0] sm:$0xff] %v3792
          %5327 = vst [vmem:[%s438 + $0x1b8] sm:$0xff] %v4244
          %5328 = vst [vmem:[%s438 + $0x1c0] sm:$0xff] %v2891
          %5329 = vst [vmem:[%s438 + $0x1c8] sm:$0xff] %v3343
          %5330 = vst [vmem:[%s438 + $0x1d0] sm:$0xff] %v3795
          %5331 = vst [vmem:[%s438 + $0x1d8] sm:$0xff] %v4247
          %5332 = vst [vmem:[%s438 + $0x1e0] sm:$0xff] %v2894
          %5333 = vst [vmem:[%s438 + $0x1e8] sm:$0xff] %v3346
          %5334 = vst [vmem:[%s438 + $0x1f0] sm:$0xff] %v3798
          %5335 = vst [vmem:[%s438 + $0x1f8] sm:$0xff] %v4250
          %5336 = vst [vmem:[%s438 + $0x200] sm:$0xff] %v2897
          %5337 = vst [vmem:[%s438 + $0x208] sm:$0xff] %v3349
          %5338 = vst [vmem:[%s438 + $0x210] sm:$0xff] %v3801
          %5339 = vst [vmem:[%s438 + $0x218] sm:$0xff] %v4253
          %5340 = vst [vmem:[%s438 + $0x220] sm:$0xff] %v2900
          %5341 = vst [vmem:[%s438 + $0x228] sm:$0xff] %v3352
          %5342 = vst [vmem:[%s438 + $0x230] sm:$0xff] %v3804
          %5343 = vst [vmem:[%s438 + $0x238] sm:$0xff] %v4256
          %5344 = vst [vmem:[%s438 + $0x240] sm:$0xff] %v2903
          %5345 = vst [vmem:[%s438 + $0x248] sm:$0xff] %v3355
          %5346 = vst [vmem:[%s438 + $0x250] sm:$0xff] %v3807
          %5347 = vst [vmem:[%s438 + $0x258] sm:$0xff] %v4259
          %5348 = vst [vmem:[%s438 + $0x260] sm:$0xff] %v2906
          %5349 = vst [vmem:[%s438 + $0x268] sm:$0xff] %v3358
          %5350 = vst [vmem:[%s438 + $0x270] sm:$0xff] %v3810
          %5351 = vst [vmem:[%s438 + $0x278] sm:$0xff] %v4262
          %5352 = vst [vmem:[%s438 + $0x280] sm:$0xff] %v2909
          %5353 = vst [vmem:[%s438 + $0x288] sm:$0xff] %v3361
          %5354 = vst [vmem:[%s438 + $0x290] sm:$0xff] %v3813
          %5355 = vst [vmem:[%s438 + $0x298] sm:$0xff] %v4265
          %5356 = vst [vmem:[%s438 + $0x2a0] sm:$0xff] %v2912
          %5357 = vst [vmem:[%s438 + $0x2a8] sm:$0xff] %v3364
          %5358 = vst [vmem:[%s438 + $0x2b0] sm:$0xff] %v3816
          %5359 = vst [vmem:[%s438 + $0x2b8] sm:$0xff] %v4268
          %5360 = vst [vmem:[%s438 + $0x2c0] sm:$0xff] %v2915
          %5361 = vst [vmem:[%s438 + $0x2c8] sm:$0xff] %v3367
          %5362 = vst [vmem:[%s438 + $0x2d0] sm:$0xff] %v3819
          %5363 = vst [vmem:[%s438 + $0x2d8] sm:$0xff] %v4271
          %5364 = vst [vmem:[%s438 + $0x2e0] sm:$0xff] %v2918
          %5365 = vst [vmem:[%s438 + $0x2e8] sm:$0xff] %v3370
          %5366 = vst [vmem:[%s438 + $0x2f0] sm:$0xff] %v3822
          %5367 = vst [vmem:[%s438 + $0x2f8] sm:$0xff] %v4274
          %5368 = vst [vmem:[%s438 + $0x300] sm:$0xff] %v2921
          %5369 = vst [vmem:[%s438 + $0x308] sm:$0xff] %v3373
          %5370 = vst [vmem:[%s438 + $0x310] sm:$0xff] %v3825
          %5371 = vst [vmem:[%s438 + $0x318] sm:$0xff] %v4277
          %5372 = vst [vmem:[%s438 + $0x320] sm:$0xff] %v2924
          %5373 = vst [vmem:[%s438 + $0x328] sm:$0xff] %v3376
          %5374 = vst [vmem:[%s438 + $0x330] sm:$0xff] %v3828
          %5375 = vst [vmem:[%s438 + $0x338] sm:$0xff] %v4280
          %5376 = vst [vmem:[%s438 + $0x340] sm:$0xff] %v2927
          %5377 = vst [vmem:[%s438 + $0x348] sm:$0xff] %v3379
          %5378 = vst [vmem:[%s438 + $0x350] sm:$0xff] %v3831
          %5379 = vst [vmem:[%s438 + $0x358] sm:$0xff] %v4283
          %5380 = vst [vmem:[%s438 + $0x360] sm:$0xff] %v2930
          %5381 = vst [vmem:[%s438 + $0x368] sm:$0xff] %v3382
          %5382 = vst [vmem:[%s438 + $0x370] sm:$0xff] %v3834
          %5383 = vst [vmem:[%s438 + $0x378] sm:$0xff] %v4286
          %5384 = vst [vmem:[%s438 + $0x380] sm:$0xff] %v2933
          %5385 = vst [vmem:[%s438 + $0x388] sm:$0xff] %v3385
          %5386 = vst [vmem:[%s438 + $0x390] sm:$0xff] %v3837
          %5387 = vst [vmem:[%s438 + $0x398] sm:$0xff] %v4289
          %5388 = vst [vmem:[%s438 + $0x3a0] sm:$0xff] %v2936
          %5389 = vst [vmem:[%s438 + $0x3a8] sm:$0xff] %v3388
          %5390 = vst [vmem:[%s438 + $0x3b0] sm:$0xff] %v3840
          %5391 = vst [vmem:[%s438 + $0x3b8] sm:$0xff] %v4292
          %5392 = vst [vmem:[%s438 + $0x3c0] sm:$0xff] %v2939
          %5393 = vst [vmem:[%s438 + $0x3c8] sm:$0xff] %v3391
          %5394 = vst [vmem:[%s438 + $0x3d0] sm:$0xff] %v3843
          %5395 = vst [vmem:[%s438 + $0x3d8] sm:$0xff] %v4295
          %5396 = vst [vmem:[%s438 + $0x3e0] sm:$0xff] %v2942
          %5397 = vst [vmem:[%s438 + $0x3e8] sm:$0xff] %v3394
          %5398 = vst [vmem:[%s438 + $0x3f0] sm:$0xff] %v3846
          %5399 = vst [vmem:[%s438 + $0x3f8] sm:$0xff] %v4298
        $region80: #{tpu_custom_call.1} parent=43 // pred_fallthru
          _
        %s5400 = sand.u32 %s198, 1
        %s5401 = scalar_lea.sflag [#allocation5], %s5400
        %s5402 = sand.u32 %s198, 1
        %s5403 = smul.addr %s5402, 1024
        %s5404 = scalar_lea.vmem [#allocation14], %s5403
        // Predicated region
        $region81: #{tpu_custom_call.1} parent=43 // pred_check
          %p5405 = pneg %p208
        $region82: #{tpu_custom_call.1} parent=43 // pred_check_branch
          %5407 = sbr.rel (%p5405) target = $region84
        $region83: #{tpu_custom_call.1} parent=43 // pred_region
          %s5408 = smul.u32 32, %s34
          %s5409 = smul.u32 4, %s35
          %5411 = vsyncadd %s5401, 0
          %s5412 = smul.addr %s5408, 12
          %s5413 = sadd.s32 %s5409, %s5412
          %s5414 = smul.addr %s5413, 8
          %s5415 = scalar_lea.hbm %s6, %s5414
          %s5416 = sshll.u32 %s5404, 4
          %s5417 = int_to_ptr.vmem [resolvable:$true] %s5416
          %s5418 = sshll.u32 %s5415, 4
          %s5419 = int_to_ptr.hbm [resolvable:$true] %s5418
          %5424 = dma.vmem_to_hbm [thread:$0]  %s5417, 16384, %s5419, %s5401, 512, 1536, 32
        $region84: #{tpu_custom_call.1} parent=43 // pred_fallthru
          _
      $region44: #{tpu_custom_call.1} parent=5 // pred_fallthru
        _
      %p5425 = scmp.le.s32.totalorder 2, %s25
      // Predicated region
      $region85: #{tpu_custom_call.1} parent=5 // pred_check
        %p5426 = pneg %p5425
      $region86: #{tpu_custom_call.1} parent=5 // pred_check_branch
        %5428 = sbr.rel (%p5426) target = $region88
      $region87: #{tpu_custom_call.1} parent=5 // pred_region
        %s5429 = ssub.s32 %s25, 2
        // Predicated region
        $region89: #{tpu_custom_call.1} parent=87 // pred_check
          %p5430 = pneg %p214
        $region90: #{tpu_custom_call.1} parent=87 // pred_check_branch
          %5432 = sbr.rel (%p5430) target = $region92
        $region91: #{tpu_custom_call.1} parent=87 // pred_region
          %s5433 = sand.u32 %s199, 1
          %s5434 = scalar_lea.sflag [#allocation5], %s5433
          %s5435 = sand.u32 %s199, 1
          %s5436 = smul.addr %s5435, 1024
          %s5437 = scalar_lea.vmem [#allocation14], %s5436
          %5439 = dma.done %s5434, 16384
        $region92: #{tpu_custom_call.1} parent=87 // pred_fallthru
          _
      $region88: #{tpu_custom_call.1} parent=5 // pred_fallthru
        _
    $region6: #{tpu_custom_call.1} parent=1 // loop_footer
      %s29 = sadd.s32 1, %s25
    $region7: #{tpu_custom_call.1} parent=1 // loop_footer_branch
      %24 = sbr.rel target = $region3
    $region8: #{tpu_custom_call.1} parent=1 // loop_exit
      _
    %5440 = vsyncpa [#allocation4], 1
    %s5441 = scalar_lea.sflag [#allocation4], 1
    %5442 = vsyncpa %s5441, 1
    %5443 = vsyncpa [#allocation7], 1
    %5444 = vsyncpa [#allocation10], 1
    %s5445 = scalar_lea.sflag [#allocation10], 1
    %5446 = vsyncpa %s5445, 1
    %5447 = vsyncpa [#allocation13], 1
    %s5448 = scalar_lea.sflag [#allocation13], 1
    %5449 = vsyncpa %s5448, 1
    %5450 = vsyncpa [#allocation5], 1
    %s5451 = scalar_lea.sflag [#allocation5], 1
    %5452 = vsyncpa %s5451, 1

</llo_original>
